<compile_context>
chip_gen: v7x
topology: tpu7x:2x2x1
jax: 0.10.0
libtpu: 0.0.40
codegen_flags: <defaults>
</compile_context>

<pallas_src>
import jax
import jax.numpy as jnp
from jax.experimental import pallas as pl
from jax.experimental.pallas import tpu as pltpu


def _round_up(x, m):
    return ((x + m - 1) // m) * m


# ----------------------------------------------------------------------------
# Fused Pallas kernel:  grid = (phase=3, row_tiles)
#   phase 0: z1[tile] = X[tile] @ W1l            -> z1 scratch
#            h1[tile] = X[tile] @ W1r            -> h1 scratch (temp reuse)
#   phase 1: h1[tile] = relu(inv_deg * (A01[tile,:] @ z1) + h1[tile] + b1)
#            z2[tile] = h1[tile] @ W2l           -> h1, z2 scratch
#   phase 2: emb[tile] = relu(inv_deg * (A01[tile,:] @ z2) + h1[tile]@W2r + b2)
#   (score head runs in XLA on the emb output)
# ----------------------------------------------------------------------------
def fused_graphsage_kernel(a_ref, invd_ref, x_ref, w1l_ref, w1r_ref, b1_ref,
                           w2l_ref, w2r_ref, b2_ref,
                           emb_ref,
                           z1_ref, h1_ref, z2_ref):
    phase = pl.program_id(0)
    tile = pl.program_id(1)
    tm = a_ref.shape[0]
    row0 = pl.multiple_of(tile * tm, tm)

    @pl.when(phase == 0)
    def _():
        x = x_ref[...]
        z1 = jnp.dot(x, w1l_ref[...], preferred_element_type=jnp.float32)
        z1_ref[pl.ds(row0, tm), :] = z1.astype(z1_ref.dtype)
        # Stash X @ W1r in the (still unused) h1 scratch so phase 1 never
        # has to re-read X from HBM.
        xr = jnp.dot(x, w1r_ref[...], preferred_element_type=jnp.float32)
        h1_ref[pl.ds(row0, tm), :] = xr.astype(h1_ref.dtype)

    @pl.when(phase == 1)
    def _():
        # int8 0/1 adjacency -> bf16 on the VPU (filler under mem-bound phase)
        a = a_ref[...].astype(jnp.bfloat16)
        agg = jnp.dot(a, z1_ref[...], preferred_element_type=jnp.float32)
        agg = agg * invd_ref[...]                      # mean normalization (f32)
        xr = h1_ref[pl.ds(row0, tm), :].astype(jnp.float32)
        h = jnp.maximum(agg + xr + b1_ref[...], 0.0)
        h_lo = h.astype(h1_ref.dtype)
        h1_ref[pl.ds(row0, tm), :] = h_lo              # overwrite with h1
        z2 = jnp.dot(h_lo, w2l_ref[...], preferred_element_type=jnp.float32)
        z2_ref[pl.ds(row0, tm), :] = z2.astype(z2_ref.dtype)

    @pl.when(phase == 2)
    def _():
        a = a_ref[...].astype(jnp.bfloat16)
        agg = jnp.dot(a, z2_ref[...], preferred_element_type=jnp.float32)
        agg = agg * invd_ref[...]
        h1_tile = h1_ref[pl.ds(row0, tm), :]
        h = agg + jnp.dot(h1_tile, w2r_ref[...],
                          preferred_element_type=jnp.float32) + b2_ref[...]
        emb_ref[...] = jnp.maximum(h, 0.0).astype(emb_ref.dtype)


# ----------------------------------------------------------------------------
# Glue: unnormalized 0/1(count) adjacency + per-row inverse degree (plain JAX)
# ----------------------------------------------------------------------------
def build_adjacency_and_invdeg(edge_index, num_nodes_padded):
    src = edge_index[0]
    dst = edge_index[1]
    counts = jnp.zeros((num_nodes_padded, num_nodes_padded),
                       jnp.int32).at[dst, src].add(1)
    deg = counts.sum(axis=1, keepdims=True).astype(jnp.float32)
    inv_deg = jnp.where(deg > 0, 1.0 / jnp.maximum(deg, 1.0), 0.0)
    # TODO(synk): edge multiplicities > 127 would overflow int8; fine here.
    return counts.astype(jnp.int8), inv_deg


# ----------------------------------------------------------------------------
# Wrapper: pad to lane-/tile-aligned shapes, cast matmul operands to bf16,
# run the fused kernel, finish the tiny fc3 head in XLA, slice back.
# ----------------------------------------------------------------------------
def graphsage_forward(params, x, edge_index, *, row_tile=256):
    n, f = x.shape
    hdim = params["conv1_wl"].shape[1]

    tm = row_tile
    n_p = _round_up(max(n, tm), tm)     # node rows, padded to a multiple of tm
    f_p = _round_up(f, 128)             # lane-dense input features
    h_p = _round_up(hdim, 128)          # lane-dense hidden dim
    n_tiles = n_p // tm

    # Dense 0/1(count) adjacency in int8 + f32 inverse degree.
    adj8, inv_deg = build_adjacency_and_invdeg(edge_index, n_p)

    bf = jnp.bfloat16
    x_p = jnp.zeros((n_p, f_p), bf).at[:n, :f].set(x.astype(bf))
    w1l = jnp.zeros((f_p, h_p), bf).at[:f, :hdim].set(params["conv1_wl"].astype(bf))
    w1r = jnp.zeros((f_p, h_p), bf).at[:f, :hdim].set(params["conv1_wr"].astype(bf))
    b1 = jnp.zeros((1, h_p), jnp.float32).at[:, :hdim].set(params["conv1_b"])
    w2l = jnp.zeros((h_p, h_p), bf).at[:hdim, :hdim].set(params["conv2_wl"].astype(bf))
    w2r = jnp.zeros((h_p, h_p), bf).at[:hdim, :hdim].set(params["conv2_wr"].astype(bf))
    b2 = jnp.zeros((1, h_p), jnp.float32).at[:, :hdim].set(params["conv2_b"])

    # --- index maps -----------------------------------------------------
    # A / inv_deg are used in phases 1 & 2 only: pin to block 0 in phase 0
    # (that fetch doubles as the prefetch for phase-1 tile 0) -> A read
    # exactly twice from HBM overall.
    def a_map(p, t):
        return (jnp.where(p == 0, 0, t), 0)

    # X is used in phase 0 only: pin to the last tile afterwards (already
    # resident at the phase transition) -> X read exactly once.
    def x_map(p, t):
        return (jnp.where(p == 0, t, n_tiles - 1), 0)

    def const_map(p, t):
        return (0, 0)

    # emb is only produced in phase 2; keep the block index pinned until then
    # so no garbage writebacks happen in phases 0/1.
    def out_map(p, t):
        return (jnp.where(p == 2, t, 0), 0)

    # --- cost / memory hints ---------------------------------------------
    flops = int(
        2 * 2 * n_p * f_p * h_p      # X @ W1l, X @ W1r       (phase 0)
        + 2 * 2 * n_p * n_p * h_p    # A @ Z1, A @ Z2         (phases 1,2)
        + 2 * 2 * n_p * h_p * h_p    # h1 @ W2l, h1 @ W2r     (phases 1,2)
    )
    bytes_accessed = int(
        2 * n_p * n_p * 1            # A (int8) read in phases 1 & 2
        + n_p * f_p * 2              # X read once (bf16)
        + 2 * n_p * 4                # inv_deg (phases 1 & 2)
        + (2 * f_p * h_p + 2 * h_p * h_p) * 2 + 2 * h_p * 4   # weights + biases
        + n_p * h_p * 4              # emb writeback
    )
    vmem_est = int(
        3 * n_p * h_p * 2                       # z1 / h1 / z2 scratch (bf16)
        + 2 * tm * n_p * 1                      # A int8 panel, double-buffered
        + 2 * tm * 4                            # inv_deg tile
        + 2 * tm * f_p * 2                      # X tile, double-buffered
        + 2 * 2 * (f_p * h_p + h_p * h_p) * 2   # weights (default double buf)
        + 2 * 2 * h_p * 4                       # biases
        + 2 * tm * h_p * 4                      # emb output block
    )
    # Generation-aware cap: ~85% of physical VMEM (64 MiB v7x, 128 MiB v5e/v6e).
    try:
        vmem_cap = int(pltpu.get_tpu_info().vmem_capacity_bytes)
    except Exception:
        vmem_cap = 64 * 2**20
    vmem_limit = int(min(max(2 * vmem_est, 16 * 2**20), (vmem_cap * 85) // 100))

    emb_p = pl.pallas_call(
        fused_graphsage_kernel,
        out_shape=jax.ShapeDtypeStruct((n_p, h_p), jnp.float32),
        grid_spec=pltpu.PrefetchScalarGridSpec(
            num_scalar_prefetch=0,
            grid=(3, n_tiles),
            in_specs=[
                pl.BlockSpec((tm, n_p), a_map),       # A (int8 0/1 counts)
                pl.BlockSpec((tm, 1), a_map),         # inv_deg (f32)
                pl.BlockSpec((tm, f_p), x_map),       # X row tile
                pl.BlockSpec((f_p, h_p), const_map),  # W1l
                pl.BlockSpec((f_p, h_p), const_map),  # W1r
                pl.BlockSpec((1, h_p), const_map),    # b1
                pl.BlockSpec((h_p, h_p), const_map),  # W2l
                pl.BlockSpec((h_p, h_p), const_map),  # W2r
                pl.BlockSpec((1, h_p), const_map),    # b2
            ],
            out_specs=pl.BlockSpec((tm, h_p), out_map),   # emb (lane-dense)
            scratch_shapes=[
                pltpu.VMEM((n_p, h_p), jnp.bfloat16),  # Z1 = X @ W1l
                pltpu.VMEM((n_p, h_p), jnp.bfloat16),  # X@W1r then h1
                pltpu.VMEM((n_p, h_p), jnp.bfloat16),  # Z2 = h1 @ W2l
            ],
        ),
        compiler_params=pltpu.CompilerParams(
            # phase axis is a hard sequential dependency; row tiles share the
            # VMEM scratch, so neither axis can be megacore-parallel here.
            dimension_semantics=("arbitrary", "arbitrary"),
            vmem_limit_bytes=vmem_limit,
        ),
        cost_estimate=pl.CostEstimate(
            flops=flops, transcendentals=0, bytes_accessed=bytes_accessed),
    )(adj8, inv_deg, x_p, w1l, w1r, b1, w2l, w2r, b2)

    emb = emb_p[:n, :hdim]
    # fc3 head in XLA: [N,H] x [H,1] is tiny and keeps the kernel output
    # lane-dense (no degenerate 1-lane store blocks).
    score = emb @ params["fc3_w"].T + params["fc3_b"]
    return {"score": score, "emb": emb}


# ----------------------------------------------------------------------------
# Model: parameter init (matches PyG SAGEConv: lin_l with bias, lin_r no bias)
# ----------------------------------------------------------------------------
def init_graphsage_params(key, nfeat, hdim):
    ks = jax.random.split(key, 5)
    scale1 = 1.0 / jnp.sqrt(nfeat)
    scale2 = 1.0 / jnp.sqrt(hdim)
    return {
        "conv1_wl": jax.random.normal(ks[0], (nfeat, hdim), jnp.float32) * scale1,
        "conv1_wr": jax.random.normal(ks[1], (nfeat, hdim), jnp.float32) * scale1,
        "conv1_b": jnp.zeros((1, hdim), jnp.float32),
        "conv2_wl": jax.random.normal(ks[2], (hdim, hdim), jnp.float32) * scale2,
        "conv2_wr": jax.random.normal(ks[3], (hdim, hdim), jnp.float32) * scale2,
        "conv2_b": jnp.zeros((1, hdim), jnp.float32),
        # fc3: Linear(hdim, 1); weight stored as (1, hdim) row
        "fc3_w": jax.random.normal(ks[4], (1, hdim), jnp.float32) * scale2,
        "fc3_b": jnp.zeros((1, 1), jnp.float32),
    }


# ----------------------------------------------------------------------------
# Main
# ----------------------------------------------------------------------------
if __name__ == "__main__":
    key = jax.random.PRNGKey(0)
    k_x, k_e, k_p = jax.random.split(key, 3)

    num_nodes = 16
    nfeat = 32
    hdim = 32
    num_edges = 40

    x = jax.random.normal(k_x, (num_nodes, nfeat), jnp.float32)
    edge_index = jax.random.randint(k_e, (2, num_edges), 0, num_nodes, jnp.int32)

    params = init_graphsage_params(k_p, nfeat, hdim)

    out = graphsage_forward(params, x, edge_index)
    jax.block_until_ready(out)

    assert out["score"].shape == (num_nodes, 1)
    assert out["emb"].shape == (num_nodes, hdim)
    print("KERNEL_OK")
</pallas_src>

<mosaic_0001>
module attributes {stable_mosaic.version = 11 : i64} {
  func.func @fused_graphsage_kernel(%arg0: i32, %arg1: i32, %arg2: memref<256x256xi8, #tpu.memory_space<vmem>>, %arg3: memref<256x1xf32, #tpu.memory_space<vmem>>, %arg4: memref<256x128xbf16, #tpu.memory_space<vmem>>, %arg5: memref<128x128xbf16, #tpu.memory_space<vmem>>, %arg6: memref<128x128xbf16, #tpu.memory_space<vmem>>, %arg7: memref<1x128xf32, #tpu.memory_space<vmem>>, %arg8: memref<128x128xbf16, #tpu.memory_space<vmem>>, %arg9: memref<128x128xbf16, #tpu.memory_space<vmem>>, %arg10: memref<1x128xf32, #tpu.memory_space<vmem>>, %arg11: memref<256x128xf32, #tpu.memory_space<vmem>>, %arg12: memref<256x128xbf16, #tpu.memory_space<vmem>>, %arg13: memref<256x128xbf16, #tpu.memory_space<vmem>>, %arg14: memref<256x128xbf16, #tpu.memory_space<vmem>>) attributes {dimension_semantics = [#tpu.dimension_semantics<arbitrary>, #tpu.dimension_semantics<arbitrary>], iteration_bounds = array<i64: 3, 1>, scalar_prefetch = 0 : i64, scratch_operands = 3 : i64, tpu.core_type = #tpu.core_type<tc>, window_params = [{transform_indices = @transform_0, window_bounds = array<i64: 256, 256>}, {transform_indices = @transform_1, window_bounds = array<i64: 256, 1>}, {transform_indices = @transform_2, window_bounds = array<i64: 256, 128>}, {pipeline_mode = #tpu.pipeline_mode<synchronous>, transform_indices = @transform_3, window_bounds = array<i64: 128, 128>}, {pipeline_mode = #tpu.pipeline_mode<synchronous>, transform_indices = @transform_4, window_bounds = array<i64: 128, 128>}, {pipeline_mode = #tpu.pipeline_mode<synchronous>, transform_indices = @transform_5, window_bounds = array<i64: 1, 128>}, {pipeline_mode = #tpu.pipeline_mode<synchronous>, transform_indices = @transform_6, window_bounds = array<i64: 128, 128>}, {pipeline_mode = #tpu.pipeline_mode<synchronous>, transform_indices = @transform_7, window_bounds = array<i64: 128, 128>}, {pipeline_mode = #tpu.pipeline_mode<synchronous>, transform_indices = @transform_8, window_bounds = array<i64: 1, 128>}, {transform_indices = @transform_9, window_bounds = array<i64: 256, 128>}]} {
    %c256_i32 = arith.constant 256 : i32
    %0 = arith.muli %arg1, %c256_i32 : i32
    %1 = tpu.assume_multiple %0, 256 : i32
    %c0_i32 = arith.constant 0 : i32
    %2 = arith.cmpi eq, %arg0, %c0_i32 : i32
    %3 = arith.extui %2 : i1 to i32
    %c0_i32_0 = arith.constant 0 : i32
    %4 = arith.cmpi ne, %3, %c0_i32_0 : i32
    scf.if %4 {
      %c0 = arith.constant 0 : index
      %c0_3 = arith.constant 0 : index
      %11 = vector.load %arg4[%c0, %c0_3] : memref<256x128xbf16, #tpu.memory_space<vmem>>, vector<256x128xbf16>
      %c0_4 = arith.constant 0 : index
      %c0_5 = arith.constant 0 : index
      %12 = vector.load %arg5[%c0_4, %c0_5] : memref<128x128xbf16, #tpu.memory_space<vmem>>, vector<128x128xbf16>
      %cst = arith.constant dense<0.000000e+00> : vector<256x128xf32>
      %13 = tpu.matmul %11, %12, %cst {dimension_numbers = #tpu.dot_dimension_numbers<[1], [0], [0], [1], [0, 0, 1, 1], [], []>} : vector<256x128xbf16>, vector<128x128xbf16>, vector<256x128xf32> -> vector<256x128xf32>
      %14 = arith.truncf %13 : vector<256x128xf32> to vector<256x128xbf16>
      %15 = arith.index_cast %1 : i32 to index
      %c0_6 = arith.constant 0 : index
      %16 = vector.load %arg12[%15, %c0_6] : memref<256x128xbf16, #tpu.memory_space<vmem>>, vector<256x128xbf16>
      tpu.vector_store %arg12[%15, %c0_6], %14 {strides = array<i32>} : memref<256x128xbf16, #tpu.memory_space<vmem>>, vector<256x128xbf16>,
      %c0_7 = arith.constant 0 : index
      %c0_8 = arith.constant 0 : index
      %17 = vector.load %arg6[%c0_7, %c0_8] : memref<128x128xbf16, #tpu.memory_space<vmem>>, vector<128x128xbf16>
      %cst_9 = arith.constant dense<0.000000e+00> : vector<256x128xf32>
      %18 = tpu.matmul %11, %17, %cst_9 {dimension_numbers = #tpu.dot_dimension_numbers<[1], [0], [0], [1], [0, 0, 1, 1], [], []>} : vector<256x128xbf16>, vector<128x128xbf16>, vector<256x128xf32> -> vector<256x128xf32>
      %19 = arith.truncf %18 : vector<256x128xf32> to vector<256x128xbf16>
      %20 = arith.index_cast %1 : i32 to index
      %c0_10 = arith.constant 0 : index
      %21 = vector.load %arg13[%20, %c0_10] : memref<256x128xbf16, #tpu.memory_space<vmem>>, vector<256x128xbf16>
      tpu.vector_store %arg13[%20, %c0_10], %19 {strides = array<i32>} : memref<256x128xbf16, #tpu.memory_space<vmem>>, vector<256x128xbf16>,
    } else {
    }
    %c1_i32 = arith.constant 1 : i32
    %5 = arith.cmpi eq, %arg0, %c1_i32 : i32
    %6 = arith.extui %5 : i1 to i32
    %c0_i32_1 = arith.constant 0 : i32
    %7 = arith.cmpi ne, %6, %c0_i32_1 : i32
    scf.if %7 {
      %c0 = arith.constant 0 : index
      %c0_3 = arith.constant 0 : index
      %11 = vector.load %arg2[%c0, %c0_3] : memref<256x256xi8, #tpu.memory_space<vmem>>, vector<256x256xi8>
      %12 = arith.sitofp %11 : vector<256x256xi8> to vector<256x256xbf16>
      %c0_4 = arith.constant 0 : index
      %c0_5 = arith.constant 0 : index
      %13 = vector.load %arg12[%c0_4, %c0_5] : memref<256x128xbf16, #tpu.memory_space<vmem>>, vector<256x128xbf16>
      %cst = arith.constant dense<0.000000e+00> : vector<256x128xf32>
      %14 = tpu.matmul %12, %13, %cst {dimension_numbers = #tpu.dot_dimension_numbers<[1], [0], [0], [1], [0, 0, 1, 1], [], []>} : vector<256x256xbf16>, vector<256x128xbf16>, vector<256x128xf32> -> vector<256x128xf32>
      %c0_6 = arith.constant 0 : index
      %c0_7 = arith.constant 0 : index
      %15 = vector.load %arg3[%c0_6, %c0_7] : memref<256x1xf32, #tpu.memory_space<vmem>>, vector<256x1xf32>
      %16 = vector.broadcast %15 : vector<256x1xf32> to vector<256x128xf32>
      %17 = arith.mulf %14, %16 : vector<256x128xf32>
      %18 = arith.index_cast %1 : i32 to index
      %c0_8 = arith.constant 0 : index
      %19 = vector.load %arg13[%18, %c0_8] : memref<256x128xbf16, #tpu.memory_space<vmem>>, vector<256x128xbf16>
      %20 = arith.extf %19 : vector<256x128xbf16> to vector<256x128xf32>
      %21 = arith.addf %17, %20 : vector<256x128xf32>
      %c0_9 = arith.constant 0 : index
      %c0_10 = arith.constant 0 : index
      %22 = vector.load %arg7[%c0_9, %c0_10] : memref<1x128xf32, #tpu.memory_space<vmem>>, vector<1x128xf32>
      %23 = vector.broadcast %22 : vector<1x128xf32> to vector<256x128xf32>
      %24 = arith.addf %21, %23 : vector<256x128xf32>
      %cst_11 = arith.constant 0.000000e+00 : f32
      %25 = vector.broadcast %cst_11 : f32 to vector<256x128xf32>
      %26 = arith.maximumf %24, %25 : vector<256x128xf32>
      %27 = arith.truncf %26 : vector<256x128xf32> to vector<256x128xbf16>
      %28 = arith.index_cast %1 : i32 to index
      %c0_12 = arith.constant 0 : index
      %29 = vector.load %arg13[%28, %c0_12] : memref<256x128xbf16, #tpu.memory_space<vmem>>, vector<256x128xbf16>
      tpu.vector_store %arg13[%28, %c0_12], %27 {strides = array<i32>} : memref<256x128xbf16, #tpu.memory_space<vmem>>, vector<256x128xbf16>,
      %c0_13 = arith.constant 0 : index
      %c0_14 = arith.constant 0 : index
      %30 = vector.load %arg8[%c0_13, %c0_14] : memref<128x128xbf16, #tpu.memory_space<vmem>>, vector<128x128xbf16>
      %cst_15 = arith.constant dense<0.000000e+00> : vector<256x128xf32>
      %31 = tpu.matmul %27, %30, %cst_15 {dimension_numbers = #tpu.dot_dimension_numbers<[1], [0], [0], [1], [0, 0, 1, 1], [], []>} : vector<256x128xbf16>, vector<128x128xbf16>, vector<256x128xf32> -> vector<256x128xf32>
      %32 = arith.truncf %31 : vector<256x128xf32> to vector<256x128xbf16>
      %33 = arith.index_cast %1 : i32 to index
      %c0_16 = arith.constant 0 : index
      %34 = vector.load %arg14[%33, %c0_16] : memref<256x128xbf16, #tpu.memory_space<vmem>>, vector<256x128xbf16>
      tpu.vector_store %arg14[%33, %c0_16], %32 {strides = array<i32>} : memref<256x128xbf16, #tpu.memory_space<vmem>>, vector<256x128xbf16>,
    } else {
    }
    %c2_i32 = arith.constant 2 : i32
    %8 = arith.cmpi eq, %arg0, %c2_i32 : i32
    %9 = arith.extui %8 : i1 to i32
    %c0_i32_2 = arith.constant 0 : i32
    %10 = arith.cmpi ne, %9, %c0_i32_2 : i32
    scf.if %10 {
      %c0 = arith.constant 0 : index
      %c0_3 = arith.constant 0 : index
      %11 = vector.load %arg2[%c0, %c0_3] : memref<256x256xi8, #tpu.memory_space<vmem>>, vector<256x256xi8>
      %12 = arith.sitofp %11 : vector<256x256xi8> to vector<256x256xbf16>
      %c0_4 = arith.constant 0 : index
      %c0_5 = arith.constant 0 : index
      %13 = vector.load %arg14[%c0_4, %c0_5] : memref<256x128xbf16, #tpu.memory_space<vmem>>, vector<256x128xbf16>
      %cst = arith.constant dense<0.000000e+00> : vector<256x128xf32>
      %14 = tpu.matmul %12, %13, %cst {dimension_numbers = #tpu.dot_dimension_numbers<[1], [0], [0], [1], [0, 0, 1, 1], [], []>} : vector<256x256xbf16>, vector<256x128xbf16>, vector<256x128xf32> -> vector<256x128xf32>
      %c0_6 = arith.constant 0 : index
      %c0_7 = arith.constant 0 : index
      %15 = vector.load %arg3[%c0_6, %c0_7] : memref<256x1xf32, #tpu.memory_space<vmem>>, vector<256x1xf32>
      %16 = vector.broadcast %15 : vector<256x1xf32> to vector<256x128xf32>
      %17 = arith.mulf %14, %16 : vector<256x128xf32>
      %18 = arith.index_cast %1 : i32 to index
      %c0_8 = arith.constant 0 : index
      %19 = vector.load %arg13[%18, %c0_8] : memref<256x128xbf16, #tpu.memory_space<vmem>>, vector<256x128xbf16>
      %c0_9 = arith.constant 0 : index
      %c0_10 = arith.constant 0 : index
      %20 = vector.load %arg9[%c0_9, %c0_10] : memref<128x128xbf16, #tpu.memory_space<vmem>>, vector<128x128xbf16>
      %cst_11 = arith.constant dense<0.000000e+00> : vector<256x128xf32>
      %21 = tpu.matmul %19, %20, %cst_11 {dimension_numbers = #tpu.dot_dimension_numbers<[1], [0], [0], [1], [0, 0, 1, 1], [], []>} : vector<256x128xbf16>, vector<128x128xbf16>, vector<256x128xf32> -> vector<256x128xf32>
      %22 = arith.addf %17, %21 : vector<256x128xf32>
      %c0_12 = arith.constant 0 : index
      %c0_13 = arith.constant 0 : index
      %23 = vector.load %arg10[%c0_12, %c0_13] : memref<1x128xf32, #tpu.memory_space<vmem>>, vector<1x128xf32>
      %24 = vector.broadcast %23 : vector<1x128xf32> to vector<256x128xf32>
      %25 = arith.addf %22, %24 : vector<256x128xf32>
      %cst_14 = arith.constant 0.000000e+00 : f32
      %26 = vector.broadcast %cst_14 : f32 to vector<256x128xf32>
      %27 = arith.maximumf %25, %26 : vector<256x128xf32>
      %c0_15 = arith.constant 0 : index
      %c0_16 = arith.constant 0 : index
      %28 = vector.load %arg11[%c0_15, %c0_16] : memref<256x128xf32, #tpu.memory_space<vmem>>, vector<256x128xf32>
      tpu.vector_store %arg11[%c0_15, %c0_16], %27 {strides = array<i32>} : memref<256x128xf32, #tpu.memory_space<vmem>>, vector<256x128xf32>,
    } else {
    }
    return
  }
  func.func @transform_0(%arg0: i32, %arg1: i32) -> (i32, i32) {
    %c0_i32 = arith.constant 0 : i32
    %0 = arith.cmpi eq, %arg0, %c0_i32 : i32
    %c0_i32_0 = arith.constant 0 : i32
    %1 = arith.select %0, %c0_i32_0, %arg1 : i32
    %c0_i32_1 = arith.constant 0 : i32
    %c0_i32_2 = arith.constant 0 : i32
    return %1, %c0_i32_1 : i32, i32
  }
  func.func @transform_1(%arg0: i32, %arg1: i32) -> (i32, i32) {
    %c0_i32 = arith.constant 0 : i32
    %0 = arith.cmpi eq, %arg0, %c0_i32 : i32
    %c0_i32_0 = arith.constant 0 : i32
    %1 = arith.select %0, %c0_i32_0, %arg1 : i32
    %c0_i32_1 = arith.constant 0 : i32
    %c0_i32_2 = arith.constant 0 : i32
    return %1, %c0_i32_1 : i32, i32
  }
  func.func @transform_2(%arg0: i32, %arg1: i32) -> (i32, i32) {
    %c0_i32 = arith.constant 0 : i32
    %0 = arith.cmpi eq, %arg0, %c0_i32 : i32
    %c0_i32_0 = arith.constant 0 : i32
    %1 = arith.select %0, %arg1, %c0_i32_0 : i32
    %c0_i32_1 = arith.constant 0 : i32
    %c0_i32_2 = arith.constant 0 : i32
    return %1, %c0_i32_1 : i32, i32
  }
  func.func @transform_3(%arg0: i32, %arg1: i32) -> (i32, i32) {
    %c0_i32 = arith.constant 0 : i32
    %c0_i32_0 = arith.constant 0 : i32
    %c0_i32_1 = arith.constant 0 : i32
    return %c0_i32, %c0_i32_0 : i32, i32
  }
  func.func @transform_4(%arg0: i32, %arg1: i32) -> (i32, i32) {
    %c0_i32 = arith.constant 0 : i32
    %c0_i32_0 = arith.constant 0 : i32
    %c0_i32_1 = arith.constant 0 : i32
    return %c0_i32, %c0_i32_0 : i32, i32
  }
  func.func @transform_5(%arg0: i32, %arg1: i32) -> (i32, i32) {
    %c0_i32 = arith.constant 0 : i32
    %c0_i32_0 = arith.constant 0 : i32
    %c0_i32_1 = arith.constant 0 : i32
    return %c0_i32, %c0_i32_0 : i32, i32
  }
  func.func @transform_6(%arg0: i32, %arg1: i32) -> (i32, i32) {
    %c0_i32 = arith.constant 0 : i32
    %c0_i32_0 = arith.constant 0 : i32
    %c0_i32_1 = arith.constant 0 : i32
    return %c0_i32, %c0_i32_0 : i32, i32
  }
  func.func @transform_7(%arg0: i32, %arg1: i32) -> (i32, i32) {
    %c0_i32 = arith.constant 0 : i32
    %c0_i32_0 = arith.constant 0 : i32
    %c0_i32_1 = arith.constant 0 : i32
    return %c0_i32, %c0_i32_0 : i32, i32
  }
  func.func @transform_8(%arg0: i32, %arg1: i32) -> (i32, i32) {
    %c0_i32 = arith.constant 0 : i32
    %c0_i32_0 = arith.constant 0 : i32
    %c0_i32_1 = arith.constant 0 : i32
    return %c0_i32, %c0_i32_0 : i32, i32
  }
  func.func @transform_9(%arg0: i32, %arg1: i32) -> (i32, i32) {
    %c2_i32 = arith.constant 2 : i32
    %0 = arith.cmpi eq, %arg0, %c2_i32 : i32
    %c0_i32 = arith.constant 0 : i32
    %1 = arith.select %0, %arg1, %c0_i32 : i32
    %c0_i32_0 = arith.constant 0 : i32
    %c0_i32_1 = arith.constant 0 : i32
    return %1, %c0_i32_0 : i32, i32
  }
}

</mosaic_0001>

<llo_original>
// kernel: tpu_custom_call.1
$region0: #{tpu_custom_call.1}
  #allocation0 [shape = 'u32[]', space=smem, size = 0x4, offset = 0x4, fixed_abs, tag = 'smem constant byte address 0x4 - core index']
  #allocation1 [shape = 'u32[144,128]{1,0:T(1,128)}', space=vmem, size = 0x12000, scoped, tag = 'internal scratch']
  #allocation2 [shape = 'bf16[256,128]{1,0:T(16,128)(2,1)}', space=vmem, size = 0x10000, scoped, tag = 'scratch operand']
  #allocation3 [shape = 'bf16[256,128]{1,0:T(16,128)(2,1)}', space=vmem, size = 0x10000, scoped, tag = 'scratch operand']
  #allocation4 [shape = 'bf16[256,128]{1,0:T(16,128)(2,1)}', space=vmem, size = 0x10000, scoped, tag = 'scratch operand']
  %s0 = inlined_call_operand.vmem [shape: s8[256,256], index: 0, kind: input, shape index: {}]
  %s1 = inlined_call_operand.vmem [shape: f32[256,1], index: 1, kind: input, shape index: {}]
  %s2 = inlined_call_operand.vmem [shape: bf16[256,128], index: 2, kind: input, shape index: {}]
  %s3 = inlined_call_operand.hbm [shape: bf16[128,128], index: 3, kind: input, shape index: {}]
  %s4 = inlined_call_operand.hbm [shape: bf16[128,128], index: 4, kind: input, shape index: {}]
  %s5 = inlined_call_operand.vmem [shape: f32[1,128], index: 5, kind: input, shape index: {}]
  %s6 = inlined_call_operand.hbm [shape: bf16[128,128], index: 6, kind: input, shape index: {}]
  %s7 = inlined_call_operand.hbm [shape: bf16[128,128], index: 7, kind: input, shape index: {}]
  %s8 = inlined_call_operand.vmem [shape: f32[1,128], index: 8, kind: input, shape index: {}]
  %s9 = inlined_call_operand.hbm [shape: f32[256,128], index: 9, kind: output, shape index: {}]
  %s10 = sld [smem:[#allocation0]]
  $region97: #{tpu_custom_call.1} parent=0
    _
  %s12 = ssub.s32 1, %s10
  %s13 = scalar_select 0, %s12, %s10
  $region1: #{tpu_custom_call.1} parent=0
    #allocation5 [shape = 'u8[32768]{0}', space=vmem, size = 0x8000, scoped, tag = 'input window, operand 3, single buffered']
    #allocation6 [shape = 's32[2]{0}', space=sflag, size = 0x8, scoped, tag = 'scoped memory for tpu_custom_call.1']
    #allocation7 [shape = 's32[2]{0}', space=sflag, size = 0x8, scoped, tag = 'scoped memory for tpu_custom_call.1']
    #allocation8 [shape = 'u8[32768]{0}', space=vmem, size = 0x8000, scoped, tag = 'input window, operand 4, single buffered']
    #allocation9 [shape = 's32[1]{0}', space=sflag, size = 0x4, scoped, tag = 'scoped memory for tpu_custom_call.1']
    #allocation10 [shape = 'u8[32768]{0}', space=vmem, size = 0x8000, scoped, tag = 'input window, operand 6, single buffered']
    #allocation11 [shape = 'u8[32768]{0}', space=vmem, size = 0x8000, scoped, tag = 'input window, operand 7, single buffered']
    #allocation12 [shape = 's32[1]{0}', space=sflag, size = 0x4, scoped, tag = 'scoped memory for tpu_custom_call.1']
    #allocation13 [shape = 'u8[262144]{0}', space=vmem, size = 0x40000, scoped, tag = 'output window, operand 0']
    %14 = vsyncpa [#allocation6], 0
    %15 = vsyncpa [#allocation9], 0
    %16 = vsyncpa [#allocation12], 0
    %17 = vsyncpa [#allocation7], 0
    %s18 = scalar_lea.sflag [#allocation7], 1
    %19 = vsyncpa %s18, 0
    loop: start=0, step=1, limit=5
    $region2: #{tpu_custom_call.1} parent=1 // loop_pre_header
      _
    $region3: #{tpu_custom_call.1} parent=1 // loop_header
      %s21 = sphi 0, %s25
      %p22 = scmp.ge.s32.totalorder %s21, 5
      %s28 = sphi 0, %s40
      %s29 = sphi 0, %s36
      %s30 = sphi 0, %s28
      %s31 = sphi 0, %s29
      %s32 = sphi 0, %s30
      %s33 = sphi 0, %s31
      %s47 = sphi 0, %s49
      %s50 = sphi 0, %s47
      %s51 = sphi 0, %s50
      %s67 = sphi 0, %s51
      %s77 = sphi 0, %s79
      %s80 = sphi 0, %s77
      %s81 = sphi 0, %s80
      %s97 = sphi 0, %s81
      %s107 = sphi 0, %s109
      %s110 = sphi 0, %s107
      %s111 = sphi 0, %s110
      %s127 = sphi 0, %s111
      %s131 = sphi 0, %s131
      %s133 = sphi 0, %s131
      %s134 = sphi 0, %s133
      %s148 = sphi 0, %s134
      %s152 = sphi 0, %s152
      %s154 = sphi 0, %s152
      %s155 = sphi 0, %s154
      %s169 = sphi 0, %s155
      %s173 = sphi 0, %s173
      %s175 = sphi 0, %s173
      %s176 = sphi 0, %s175
      %s190 = sphi 0, %s176
      %s194 = sphi 0, %s194
      %s196 = sphi 0, %s194
      %s197 = sphi 0, %s196
      %s211 = sphi 0, %s197
      %s215 = sphi 0, %s215
      %s217 = sphi 0, %s215
      %s218 = sphi 0, %s217
      %s232 = sphi 0, %s218
      %s236 = sphi 0, %s236
      %s238 = sphi 0, %s236
      %s239 = sphi 0, %s238
      %s253 = sphi 0, %s239
      %s263 = sphi 0, %s265
      %s266 = sphi 0, %s263
      %s267 = sphi 0, %s266
      %s283 = sphi 0, %s267
    $region4: #{tpu_custom_call.1} parent=1 // loop_header_branch
      %24 = sbr.rel (%p22) target = $region8
    $region5: #{tpu_custom_call.1} parent=1 // loop_body
      %s26 = ssub.s32 %s21, 1
      %s27 = ssub.s32 %s21, 2
      %s34 = sadd.s32 1, %s29
      %p35 = scmp.ge.s32.totalorder %s34, 1
      %s36 = scalar_select %p35, 0, %s34
      %s37 = sadd.s32 1, %s28
      %s38 = scalar_select %p35, %s37, %s28
      %p39 = scmp.ge.s32.totalorder %s38, 3
      %s40 = scalar_select %p39, 0, %s38
      %p41 = scmp.eq.s32.totalorder %s28, 0
      %s42 = scalar_select %p41, 0, %s29
      %p43 = scmp.eq.s32.totalorder %s40, 0
      %s44 = scalar_select %p43, 0, %s36
      %s45 = ssub.s32 %s42, %s44
      %p46 = scmp.eq.s32.totalorder %s45, 0
      %s48 = sadd.s32 %s47, 1
      %s49 = scalar_select %p46, %s47, %s48
      %p52 = pneg %p46
      %p53 = scmp.eq.s32.totalorder %s21, 2
      %p54 = por %p52, %p53
      %p55 = scmp.ne.s32.totalorder %s47, %s50
      %p56 = scmp.eq.s32.totalorder %s21, 0
      %p57 = por %p55, %p56
      %p58 = scmp.ne.s32.totalorder %s47, %s50
      %p59 = scmp.eq.s32.totalorder %s26, 2
      %p60 = por %p58, %p59
      %p61 = scmp.ne.s32.totalorder %s50, %s51
      %p62 = scmp.eq.s32.totalorder %s26, 0
      %p63 = por %p61, %p62
      %p64 = scmp.ne.s32.totalorder %s50, %s51
      %p65 = scmp.eq.s32.totalorder %s27, 2
      %p66 = por %p64, %p65
      %p68 = scmp.ne.s32.totalorder %s51, %s67
      %p69 = scmp.eq.s32.totalorder %s27, 0
      %p70 = por %p68, %p69
      %p71 = scmp.eq.s32.totalorder %s28, 0
      %s72 = scalar_select %p71, 0, %s29
      %p73 = scmp.eq.s32.totalorder %s40, 0
      %s74 = scalar_select %p73, 0, %s36
      %s75 = ssub.s32 %s72, %s74
      %p76 = scmp.eq.s32.totalorder %s75, 0
      %s78 = sadd.s32 %s77, 1
      %s79 = scalar_select %p76, %s77, %s78
      %p82 = pneg %p76
      %p83 = scmp.eq.s32.totalorder %s21, 2
      %p84 = por %p82, %p83
      %p85 = scmp.ne.s32.totalorder %s77, %s80
      %p86 = scmp.eq.s32.totalorder %s21, 0
      %p87 = por %p85, %p86
      %p88 = scmp.ne.s32.totalorder %s77, %s80
      %p89 = scmp.eq.s32.totalorder %s26, 2
      %p90 = por %p88, %p89
      %p91 = scmp.ne.s32.totalorder %s80, %s81
      %p92 = scmp.eq.s32.totalorder %s26, 0
      %p93 = por %p91, %p92
      %p94 = scmp.ne.s32.totalorder %s80, %s81
      %p95 = scmp.eq.s32.totalorder %s27, 2
      %p96 = por %p94, %p95
      %p98 = scmp.ne.s32.totalorder %s81, %s97
      %p99 = scmp.eq.s32.totalorder %s27, 0
      %p100 = por %p98, %p99
      %p101 = scmp.eq.s32.totalorder %s28, 0
      %s102 = scalar_select %p101, %s29, 0
      %p103 = scmp.eq.s32.totalorder %s40, 0
      %s104 = scalar_select %p103, %s36, 0
      %s105 = ssub.s32 %s102, %s104
      %p106 = scmp.eq.s32.totalorder %s105, 0
      %s108 = sadd.s32 %s107, 1
      %s109 = scalar_select %p106, %s107, %s108
      %p112 = pneg %p106
      %p113 = scmp.eq.s32.totalorder %s21, 2
      %p114 = por %p112, %p113
      %p115 = scmp.ne.s32.totalorder %s107, %s110
      %p116 = scmp.eq.s32.totalorder %s21, 0
      %p117 = por %p115, %p116
      %p118 = scmp.ne.s32.totalorder %s107, %s110
      %p119 = scmp.eq.s32.totalorder %s26, 2
      %p120 = por %p118, %p119
      %p121 = scmp.ne.s32.totalorder %s110, %s111
      %p122 = scmp.eq.s32.totalorder %s26, 0
      %p123 = por %p121, %p122
      %p124 = scmp.ne.s32.totalorder %s110, %s111
      %p125 = scmp.eq.s32.totalorder %s27, 2
      %p126 = por %p124, %p125
      %p128 = scmp.ne.s32.totalorder %s111, %s127
      %p129 = scmp.eq.s32.totalorder %s27, 0
      %p130 = por %p128, %p129
      %s132 = sadd.s32 %s131, 1
      %p135 = scmp.eq.s32.totalorder %s21, 2
      %p136 = scmp.ne.s32.totalorder %s131, %s133
      %p137 = scmp.eq.s32.totalorder %s21, 0
      %p138 = por %p136, %p137
      %p139 = scmp.ne.s32.totalorder %s131, %s133
      %p140 = scmp.eq.s32.totalorder %s26, 2
      %p141 = por %p139, %p140
      %p142 = scmp.ne.s32.totalorder %s133, %s134
      %p143 = scmp.eq.s32.totalorder %s26, 0
      %p144 = por %p142, %p143
      %p145 = scmp.ne.s32.totalorder %s133, %s134
      %p146 = scmp.eq.s32.totalorder %s27, 2
      %p147 = por %p145, %p146
      %p149 = scmp.ne.s32.totalorder %s134, %s148
      %p150 = scmp.eq.s32.totalorder %s27, 0
      %p151 = por %p149, %p150
      %s153 = sadd.s32 %s152, 1
      %p156 = scmp.eq.s32.totalorder %s21, 2
      %p157 = scmp.ne.s32.totalorder %s152, %s154
      %p158 = scmp.eq.s32.totalorder %s21, 0
      %p159 = por %p157, %p158
      %p160 = scmp.ne.s32.totalorder %s152, %s154
      %p161 = scmp.eq.s32.totalorder %s26, 2
      %p162 = por %p160, %p161
      %p163 = scmp.ne.s32.totalorder %s154, %s155
      %p164 = scmp.eq.s32.totalorder %s26, 0
      %p165 = por %p163, %p164
      %p166 = scmp.ne.s32.totalorder %s154, %s155
      %p167 = scmp.eq.s32.totalorder %s27, 2
      %p168 = por %p166, %p167
      %p170 = scmp.ne.s32.totalorder %s155, %s169
      %p171 = scmp.eq.s32.totalorder %s27, 0
      %p172 = por %p170, %p171
      %s174 = sadd.s32 %s173, 1
      %p177 = scmp.eq.s32.totalorder %s21, 2
      %p178 = scmp.ne.s32.totalorder %s173, %s175
      %p179 = scmp.eq.s32.totalorder %s21, 0
      %p180 = por %p178, %p179
      %p181 = scmp.ne.s32.totalorder %s173, %s175
      %p182 = scmp.eq.s32.totalorder %s26, 2
      %p183 = por %p181, %p182
      %p184 = scmp.ne.s32.totalorder %s175, %s176
      %p185 = scmp.eq.s32.totalorder %s26, 0
      %p186 = por %p184, %p185
      %p187 = scmp.ne.s32.totalorder %s175, %s176
      %p188 = scmp.eq.s32.totalorder %s27, 2
      %p189 = por %p187, %p188
      %p191 = scmp.ne.s32.totalorder %s176, %s190
      %p192 = scmp.eq.s32.totalorder %s27, 0
      %p193 = por %p191, %p192
      %s195 = sadd.s32 %s194, 1
      %p198 = scmp.eq.s32.totalorder %s21, 2
      %p199 = scmp.ne.s32.totalorder %s194, %s196
      %p200 = scmp.eq.s32.totalorder %s21, 0
      %p201 = por %p199, %p200
      %p202 = scmp.ne.s32.totalorder %s194, %s196
      %p203 = scmp.eq.s32.totalorder %s26, 2
      %p204 = por %p202, %p203
      %p205 = scmp.ne.s32.totalorder %s196, %s197
      %p206 = scmp.eq.s32.totalorder %s26, 0
      %p207 = por %p205, %p206
      %p208 = scmp.ne.s32.totalorder %s196, %s197
      %p209 = scmp.eq.s32.totalorder %s27, 2
      %p210 = por %p208, %p209
      %p212 = scmp.ne.s32.totalorder %s197, %s211
      %p213 = scmp.eq.s32.totalorder %s27, 0
      %p214 = por %p212, %p213
      %s216 = sadd.s32 %s215, 1
      %p219 = scmp.eq.s32.totalorder %s21, 2
      %p220 = scmp.ne.s32.totalorder %s215, %s217
      %p221 = scmp.eq.s32.totalorder %s21, 0
      %p222 = por %p220, %p221
      %p223 = scmp.ne.s32.totalorder %s215, %s217
      %p224 = scmp.eq.s32.totalorder %s26, 2
      %p225 = por %p223, %p224
      %p226 = scmp.ne.s32.totalorder %s217, %s218
      %p227 = scmp.eq.s32.totalorder %s26, 0
      %p228 = por %p226, %p227
      %p229 = scmp.ne.s32.totalorder %s217, %s218
      %p230 = scmp.eq.s32.totalorder %s27, 2
      %p231 = por %p229, %p230
      %p233 = scmp.ne.s32.totalorder %s218, %s232
      %p234 = scmp.eq.s32.totalorder %s27, 0
      %p235 = por %p233, %p234
      %s237 = sadd.s32 %s236, 1
      %p240 = scmp.eq.s32.totalorder %s21, 2
      %p241 = scmp.ne.s32.totalorder %s236, %s238
      %p242 = scmp.eq.s32.totalorder %s21, 0
      %p243 = por %p241, %p242
      %p244 = scmp.ne.s32.totalorder %s236, %s238
      %p245 = scmp.eq.s32.totalorder %s26, 2
      %p246 = por %p244, %p245
      %p247 = scmp.ne.s32.totalorder %s238, %s239
      %p248 = scmp.eq.s32.totalorder %s26, 0
      %p249 = por %p247, %p248
      %p250 = scmp.ne.s32.totalorder %s238, %s239
      %p251 = scmp.eq.s32.totalorder %s27, 2
      %p252 = por %p250, %p251
      %p254 = scmp.ne.s32.totalorder %s239, %s253
      %p255 = scmp.eq.s32.totalorder %s27, 0
      %p256 = por %p254, %p255
      %p257 = scmp.eq.s32.totalorder %s28, 2
      %s258 = scalar_select %p257, %s29, 0
      %p259 = scmp.eq.s32.totalorder %s40, 2
      %s260 = scalar_select %p259, %s36, 0
      %s261 = ssub.s32 %s258, %s260
      %p262 = scmp.eq.s32.totalorder %s261, 0
      %s264 = sadd.s32 %s263, 1
      %s265 = scalar_select %p262, %s263, %s264
      %p268 = pneg %p262
      %p269 = scmp.eq.s32.totalorder %s21, 2
      %p270 = por %p268, %p269
      %p271 = scmp.ne.s32.totalorder %s263, %s266
      %p272 = scmp.eq.s32.totalorder %s21, 0
      %p273 = por %p271, %p272
      %p274 = scmp.ne.s32.totalorder %s263, %s266
      %p275 = scmp.eq.s32.totalorder %s26, 2
      %p276 = por %p274, %p275
      %p277 = scmp.ne.s32.totalorder %s266, %s267
      %p278 = scmp.eq.s32.totalorder %s26, 0
      %p279 = por %p277, %p278
      %p280 = scmp.ne.s32.totalorder %s266, %s267
      %p281 = scmp.eq.s32.totalorder %s27, 2
      %p282 = por %p280, %p281
      %p284 = scmp.ne.s32.totalorder %s267, %s283
      %p285 = scmp.eq.s32.totalorder %s27, 0
      %p286 = por %p284, %p285
      %p287 = scmp.le.s32.totalorder 1, %s21
      %p288 = scmp.lt.s32.totalorder %s21, 4
      %p289 = pnand %p287, %p288
      %p290 = pneg %p289
      // Predicated region
      $region9: #{tpu_custom_call.1} parent=5 // pred_check
        _
      $region10: #{tpu_custom_call.1} parent=5 // pred_check_branch
        %292 = sbr.rel (%p289) target = $region12
      $region11: #{tpu_custom_call.1} parent=5 // pred_region
        %s293 = ssub.s32 %s21, 1
        // Predicated region
        $region13: #{tpu_custom_call.1} parent=11 // pred_check
          %p294 = pneg %p144
        $region14: #{tpu_custom_call.1} parent=11 // pred_check_branch
          %296 = sbr.rel (%p294) target = $region16
        $region15: #{tpu_custom_call.1} parent=11 // pred_region
          %s298 = ssub.s32 1024, 1024
          %299 = vsyncadd [#allocation6], %s298
          %s300 = sshll.u32 [#allocation5], 4
          %s301 = int_to_ptr.vmem [resolvable:$true] %s300
          %306 = dma.hbm_to_vmem [thread:$0]  %s3, 1024, %s301, [#allocation6], 64, 64, 4
        $region16: #{tpu_custom_call.1} parent=11 // pred_fallthru
          _
        // Predicated region
        $region17: #{tpu_custom_call.1} parent=11 // pred_check
          %p307 = pneg %p165
        $region18: #{tpu_custom_call.1} parent=11 // pred_check_branch
          %309 = sbr.rel (%p307) target = $region20
        $region19: #{tpu_custom_call.1} parent=11 // pred_region
          %s311 = ssub.s32 1024, 1024
          %312 = vsyncadd [#allocation9], %s311
          %s313 = sshll.u32 [#allocation8], 4
          %s314 = int_to_ptr.vmem [resolvable:$true] %s313
          %319 = dma.hbm_to_vmem [thread:$0]  %s4, 1024, %s314, [#allocation9], 64, 64, 4
        $region20: #{tpu_custom_call.1} parent=11 // pred_fallthru
          _
        // Predicated region
        $region21: #{tpu_custom_call.1} parent=11 // pred_check
          %p320 = pneg %p186
        $region22: #{tpu_custom_call.1} parent=11 // pred_check_branch
          %322 = sbr.rel (%p320) target = $region24
        $region23: #{tpu_custom_call.1} parent=11 // pred_region
          _
        $region24: #{tpu_custom_call.1} parent=11 // pred_fallthru
          _
        // Predicated region
        $region25: #{tpu_custom_call.1} parent=11 // pred_check
          %p323 = pneg %p207
        $region26: #{tpu_custom_call.1} parent=11 // pred_check_branch
          %325 = sbr.rel (%p323) target = $region28
        $region27: #{tpu_custom_call.1} parent=11 // pred_region
          %s327 = ssub.s32 1024, 1024
          %328 = vsyncadd [#allocation9], %s327
          %s329 = sshll.u32 [#allocation10], 4
          %s330 = int_to_ptr.vmem [resolvable:$true] %s329
          %335 = dma.hbm_to_vmem [thread:$0]  %s6, 1024, %s330, [#allocation9], 64, 64, 4
        $region28: #{tpu_custom_call.1} parent=11 // pred_fallthru
          _
        // Predicated region
        $region29: #{tpu_custom_call.1} parent=11 // pred_check
          %p336 = pneg %p228
        $region30: #{tpu_custom_call.1} parent=11 // pred_check_branch
          %338 = sbr.rel (%p336) target = $region32
        $region31: #{tpu_custom_call.1} parent=11 // pred_region
          %s340 = ssub.s32 1024, 1024
          %341 = vsyncadd [#allocation12], %s340
          %s342 = sshll.u32 [#allocation11], 4
          %s343 = int_to_ptr.vmem [resolvable:$true] %s342
          %348 = dma.hbm_to_vmem [thread:$0]  %s7, 1024, %s343, [#allocation12], 64, 64, 4
        $region32: #{tpu_custom_call.1} parent=11 // pred_fallthru
          _
        // Predicated region
        $region33: #{tpu_custom_call.1} parent=11 // pred_check
          %p349 = pneg %p249
        $region34: #{tpu_custom_call.1} parent=11 // pred_check_branch
          %351 = sbr.rel (%p349) target = $region36
        $region35: #{tpu_custom_call.1} parent=11 // pred_region
          _
        $region36: #{tpu_custom_call.1} parent=11 // pred_fallthru
          _
      $region12: #{tpu_custom_call.1} parent=5 // pred_fallthru
        _
      %p352 = scmp.lt.s32.totalorder %s21, 3
      // Predicated region
      $region37: #{tpu_custom_call.1} parent=5 // pred_check
        %p353 = pneg %p352
      $region38: #{tpu_custom_call.1} parent=5 // pred_check_branch
        %355 = sbr.rel (%p353) target = $region40
      $region39: #{tpu_custom_call.1} parent=5 // pred_region
        // Predicated region
        $region41: #{tpu_custom_call.1} parent=39 // pred_check
          %p356 = pneg %p57
        $region42: #{tpu_custom_call.1} parent=39 // pred_check_branch
          %358 = sbr.rel (%p356) target = $region44
        $region43: #{tpu_custom_call.1} parent=39 // pred_region
          %p359 = scmp.eq.s32.totalorder %s28, 0
          %s360 = scalar_select %p359, 0, %s29
          %s361 = smul.u32 8, %s360
          %p362 = scmp.lt.s32.totalorder %s361, 7
          %s363 = scalar_select %p362, %s361, 7
          %s364 = smul.addr %s363, 2
          %s365 = smul.addr %s364, 8
          %s366 = scalar_lea.vmem %s0, %s365
          %p367 = scmp.eq.s32.totalorder %s28, 0
          %s368 = scalar_select %p367, 0, %s29
          %s369 = smul.u32 8, %s368
        $region44: #{tpu_custom_call.1} parent=39 // pred_fallthru
          _
        // Predicated region
        $region45: #{tpu_custom_call.1} parent=39 // pred_check
          %p370 = pneg %p87
        $region46: #{tpu_custom_call.1} parent=39 // pred_check_branch
          %372 = sbr.rel (%p370) target = $region48
        $region47: #{tpu_custom_call.1} parent=39 // pred_region
          %p373 = scmp.eq.s32.totalorder %s28, 0
          %s374 = scalar_select %p373, 0, %s29
          %s375 = smul.u32 32, %s374
          %p376 = scmp.lt.s32.totalorder %s375, 31
          %s377 = scalar_select %p376, %s375, 31
          %s378 = smul.addr %s377, 8
          %s379 = scalar_lea.vmem %s1, %s378
          %p380 = scmp.eq.s32.totalorder %s28, 0
          %s381 = scalar_select %p380, 0, %s29
          %s382 = smul.u32 32, %s381
        $region48: #{tpu_custom_call.1} parent=39 // pred_fallthru
          _
        // Predicated region
        $region49: #{tpu_custom_call.1} parent=39 // pred_check
          %p383 = pneg %p117
        $region50: #{tpu_custom_call.1} parent=39 // pred_check_branch
          %385 = sbr.rel (%p383) target = $region52
        $region51: #{tpu_custom_call.1} parent=39 // pred_region
          %p386 = scmp.eq.s32.totalorder %s28, 0
          %s387 = scalar_select %p386, %s29, 0
          %s388 = smul.u32 32, %s387
          %p389 = scmp.lt.s32.totalorder %s388, 31
          %s390 = scalar_select %p389, %s388, 31
          %s391 = smul.addr %s390, 4
          %s392 = scalar_lea.vmem %s2, %s391
          %p393 = scmp.eq.s32.totalorder %s28, 0
          %s394 = scalar_select %p393, %s29, 0
          %s395 = smul.u32 32, %s394
        $region52: #{tpu_custom_call.1} parent=39 // pred_fallthru
          _
      $region40: #{tpu_custom_call.1} parent=5 // pred_fallthru
        _
      %p396 = scmp.le.s32.totalorder 1, %s21
      %p397 = scmp.lt.s32.totalorder %s21, 4
      %p398 = pnand %p396, %p397
      %p399 = pneg %p398
      // Predicated region
      $region53: #{tpu_custom_call.1} parent=5 // pred_check
        _
      $region54: #{tpu_custom_call.1} parent=5 // pred_check_branch
        %401 = sbr.rel (%p398) target = $region56
      $region55: #{tpu_custom_call.1} parent=5 // pred_region
        %s402 = ssub.s32 %s21, 1
        // Predicated region
        $region57: #{tpu_custom_call.1} parent=55 // pred_check
          %p403 = pneg %p144
        $region58: #{tpu_custom_call.1} parent=55 // pred_check_branch
          %405 = sbr.rel (%p403) target = $region60
        $region59: #{tpu_custom_call.1} parent=55 // pred_region
          %406 = dma.done [#allocation6], 1024
        $region60: #{tpu_custom_call.1} parent=55 // pred_fallthru
          _
        // Predicated region
        $region61: #{tpu_custom_call.1} parent=55 // pred_check
          %p407 = pneg %p165
        $region62: #{tpu_custom_call.1} parent=55 // pred_check_branch
          %409 = sbr.rel (%p407) target = $region64
        $region63: #{tpu_custom_call.1} parent=55 // pred_region
          %410 = dma.done [#allocation9], 1024
        $region64: #{tpu_custom_call.1} parent=55 // pred_fallthru
          _
        // Predicated region
        $region65: #{tpu_custom_call.1} parent=55 // pred_check
          %p411 = pneg %p207
        $region66: #{tpu_custom_call.1} parent=55 // pred_check_branch
          %413 = sbr.rel (%p411) target = $region68
        $region67: #{tpu_custom_call.1} parent=55 // pred_region
          %414 = dma.done [#allocation9], 1024
        $region68: #{tpu_custom_call.1} parent=55 // pred_fallthru
          _
        // Predicated region
        $region69: #{tpu_custom_call.1} parent=55 // pred_check
          %p415 = pneg %p228
        $region70: #{tpu_custom_call.1} parent=55 // pred_check_branch
          %417 = sbr.rel (%p415) target = $region72
        $region71: #{tpu_custom_call.1} parent=55 // pred_region
          %418 = dma.done [#allocation12], 1024
        $region72: #{tpu_custom_call.1} parent=55 // pred_fallthru
          _
        %p419 = scmp.eq.s32.totalorder %s30, 0
        %s420 = scalar_select %p419, 0, %s31
        %s421 = smul.u32 8, %s420
        %p422 = scmp.lt.s32.totalorder %s421, 7
        %s423 = scalar_select %p422, %s421, 7
        %s424 = smul.addr %s423, 2
        %s425 = smul.addr %s424, 8
        %s426 = scalar_lea.vmem %s0, %s425
        %p427 = pneg %p63
        %p428 = pneg %p60
        %p429 = scmp.eq.s32.totalorder %s30, 0
        %s430 = scalar_select %p429, 0, %s31
        %s431 = smul.u32 32, %s430
        %p432 = scmp.lt.s32.totalorder %s431, 31
        %s433 = scalar_select %p432, %s431, 31
        %s434 = smul.addr %s433, 8
        %s435 = scalar_lea.vmem %s1, %s434
        %p436 = pneg %p93
        %p437 = pneg %p90
        %p438 = scmp.eq.s32.totalorder %s30, 0
        %s439 = scalar_select %p438, %s31, 0
        %s440 = smul.u32 32, %s439
        %p441 = scmp.lt.s32.totalorder %s440, 31
        %s442 = scalar_select %p441, %s440, 31
        %s443 = smul.addr %s442, 4
        %s444 = scalar_lea.vmem %s2, %s443
        %p445 = pneg %p123
        %p446 = pneg %p120
        %p447 = pneg %p144
        %p448 = pneg %p141
        %p449 = pneg %p165
        %p450 = pneg %p162
        %p451 = pneg %p186
        %p452 = pneg %p183
        %p453 = pneg %p207
        %p454 = pneg %p204
        %p455 = pneg %p228
        %p456 = pneg %p225
        %p457 = pneg %p249
        %p458 = pneg %p246
        %p459 = pneg %p279
        %p460 = pneg %p276
        %s461 = sand.u32 %s266, 1
        %s462 = scalar_lea.sflag [#allocation7], %s461
        %s463 = sand.u32 %s266, 1
        %s464 = smul.addr %s463, 256
        %s465 = scalar_lea.vmem [#allocation13], %s464
        %p466 = scmp.eq.s32.totalorder %s30, 0
        %s467 = scalar_select %p466, 0, %s31
        %s468 = smul.u32 8, %s467
        %p469 = scmp.lt.s32.totalorder %s468, 7
        %s470 = scalar_select %p469, %s468, 7
        %s471 = smul.addr %s470, 2
        %s472 = smul.addr %s471, 8
        %s473 = scalar_lea.vmem %s0, %s472
        %p474 = scmp.eq.s32.totalorder %s30, 0
        %s475 = scalar_select %p474, 0, %s31
        %s476 = smul.u32 8, %s475
        %p477 = scmp.eq.s32.totalorder %s30, 0
        %s478 = scalar_select %p477, 0, %s31
        %s479 = smul.u32 32, %s478
        %p480 = scmp.lt.s32.totalorder %s479, 31
        %s481 = scalar_select %p480, %s479, 31
        %s482 = smul.addr %s481, 8
        %s483 = scalar_lea.vmem %s1, %s482
        %p484 = scmp.eq.s32.totalorder %s30, 0
        %s485 = scalar_select %p484, 0, %s31
        %s486 = smul.u32 32, %s485
        %p487 = scmp.eq.s32.totalorder %s30, 0
        %s488 = scalar_select %p487, %s31, 0
        %s489 = smul.u32 32, %s488
        %p490 = scmp.lt.s32.totalorder %s489, 31
        %s491 = scalar_select %p490, %s489, 31
        %s492 = smul.addr %s491, 4
        %s493 = scalar_lea.vmem %s2, %s492
        %p494 = scmp.eq.s32.totalorder %s30, 0
        %s495 = scalar_select %p494, %s31, 0
        %s496 = smul.u32 32, %s495
        %p497 = scmp.eq.s32.totalorder %s30, 2
        %s498 = scalar_select %p497, %s31, 0
        %s499 = smul.u32 32, %s498
        %s501 = smul.u32 %s31, 256
        %p502 = scmp.eq.s32.totalorder %s30, 0
        // Predicated region
        $region73: #{tpu_custom_call.1} parent=55 // pred_check
          %p503 = pneg %p502
        $region74: #{tpu_custom_call.1} parent=55 // pred_check_branch
          %505 = sbr.rel (%p503) target = $region76
        $region75: #{tpu_custom_call.1} parent=55 // pred_region
          %v506 = vld [vmem:[%s493] sm:$0xf]
          %v507 = vld [vmem:[%s493 + $0x4] sm:$0xf]
          %v508 = vld [vmem:[%s493 + $0x8] sm:$0xf]
          %v509 = vld [vmem:[%s493 + $0xc] sm:$0xf]
          %v510 = vld [vmem:[%s493 + $0x10] sm:$0xf]
          %v511 = vld [vmem:[%s493 + $0x14] sm:$0xf]
          %v512 = vld [vmem:[%s493 + $0x18] sm:$0xf]
          %v513 = vld [vmem:[%s493 + $0x1c] sm:$0xf]
          %v514 = vld [vmem:[%s493 + $0x20] sm:$0xf]
          %v515 = vld [vmem:[%s493 + $0x24] sm:$0xf]
          %v516 = vld [vmem:[%s493 + $0x28] sm:$0xf]
          %v517 = vld [vmem:[%s493 + $0x2c] sm:$0xf]
          %v518 = vld [vmem:[%s493 + $0x30] sm:$0xf]
          %v519 = vld [vmem:[%s493 + $0x34] sm:$0xf]
          %v520 = vld [vmem:[%s493 + $0x38] sm:$0xf]
          %v521 = vld [vmem:[%s493 + $0x3c] sm:$0xf]
          %v522 = vld [vmem:[%s493 + $0x40] sm:$0xf]
          %v523 = vld [vmem:[%s493 + $0x44] sm:$0xf]
          %v524 = vld [vmem:[%s493 + $0x48] sm:$0xf]
          %v525 = vld [vmem:[%s493 + $0x4c] sm:$0xf]
          %v526 = vld [vmem:[%s493 + $0x50] sm:$0xf]
          %v527 = vld [vmem:[%s493 + $0x54] sm:$0xf]
          %v528 = vld [vmem:[%s493 + $0x58] sm:$0xf]
          %v529 = vld [vmem:[%s493 + $0x5c] sm:$0xf]
          %v530 = vld [vmem:[%s493 + $0x60] sm:$0xf]
          %v531 = vld [vmem:[%s493 + $0x64] sm:$0xf]
          %v532 = vld [vmem:[%s493 + $0x68] sm:$0xf]
          %v533 = vld [vmem:[%s493 + $0x6c] sm:$0xf]
          %v534 = vld [vmem:[%s493 + $0x70] sm:$0xf]
          %v535 = vld [vmem:[%s493 + $0x74] sm:$0xf]
          %v536 = vld [vmem:[%s493 + $0x78] sm:$0xf]
          %v537 = vld [vmem:[%s493 + $0x7c] sm:$0xf]
          %v538 = vld [vmem:[#allocation5] sm:$0xf]
          %v539 = vld [vmem:[#allocation5 + $0x4] sm:$0xf]
          %v540 = vld [vmem:[#allocation5 + $0x8] sm:$0xf]
          %v541 = vld [vmem:[#allocation5 + $0xc] sm:$0xf]
          %v542 = vld [vmem:[#allocation5 + $0x10] sm:$0xf]
          %v543 = vld [vmem:[#allocation5 + $0x14] sm:$0xf]
          %v544 = vld [vmem:[#allocation5 + $0x18] sm:$0xf]
          %v545 = vld [vmem:[#allocation5 + $0x1c] sm:$0xf]
          %v546 = vld [vmem:[#allocation5 + $0x20] sm:$0xf]
          %v547 = vld [vmem:[#allocation5 + $0x24] sm:$0xf]
          %v548 = vld [vmem:[#allocation5 + $0x28] sm:$0xf]
          %v549 = vld [vmem:[#allocation5 + $0x2c] sm:$0xf]
          %v550 = vld [vmem:[#allocation5 + $0x30] sm:$0xf]
          %v551 = vld [vmem:[#allocation5 + $0x34] sm:$0xf]
          %v552 = vld [vmem:[#allocation5 + $0x38] sm:$0xf]
          %v553 = vld [vmem:[#allocation5 + $0x3c] sm:$0xf]
          %v586 = vunpack.c.l.b16 %v506
          %v587 = vunpack.c.l.b16 %v507
          %v588 = vunpack.c.l.b16 %v508
          %v589 = vunpack.c.l.b16 %v509
          %v590 = vunpack.c.l.b16 %v510
          %v591 = vunpack.c.l.b16 %v511
          %v592 = vunpack.c.l.b16 %v512
          %v593 = vunpack.c.l.b16 %v513
          %v594 = vunpack.c.l.b16 %v514
          %v595 = vunpack.c.l.b16 %v515
          %v596 = vunpack.c.l.b16 %v516
          %v597 = vunpack.c.l.b16 %v517
          %v598 = vunpack.c.l.b16 %v518
          %v599 = vunpack.c.l.b16 %v519
          %v600 = vunpack.c.l.b16 %v520
          %v601 = vunpack.c.l.b16 %v521
          %v602 = vunpack.c.l.b16 %v522
          %v603 = vunpack.c.l.b16 %v523
          %v604 = vunpack.c.l.b16 %v524
          %v605 = vunpack.c.l.b16 %v525
          %v606 = vunpack.c.l.b16 %v526
          %v607 = vunpack.c.l.b16 %v527
          %v608 = vunpack.c.l.b16 %v528
          %v609 = vunpack.c.l.b16 %v529
          %v610 = vunpack.c.l.b16 %v530
          %v611 = vunpack.c.l.b16 %v531
          %v612 = vunpack.c.l.b16 %v532
          %v613 = vunpack.c.l.b16 %v533
          %v614 = vunpack.c.l.b16 %v534
          %v615 = vunpack.c.l.b16 %v535
          %v616 = vunpack.c.l.b16 %v536
          %v617 = vunpack.c.l.b16 %v537
          %v618 = vpack.c.b16 %v587, %v586
          %v619 = vpack.c.b16 %v589, %v588
          %v620 = vpack.c.b16 %v591, %v590
          %v621 = vpack.c.b16 %v593, %v592
          %v622 = vpack.c.b16 %v595, %v594
          %v623 = vpack.c.b16 %v597, %v596
          %v624 = vpack.c.b16 %v599, %v598
          %v625 = vpack.c.b16 %v601, %v600
          %v626 = vpack.c.b16 %v603, %v602
          %v627 = vpack.c.b16 %v605, %v604
          %v628 = vpack.c.b16 %v607, %v606
          %v629 = vpack.c.b16 %v609, %v608
          %v630 = vpack.c.b16 %v611, %v610
          %v631 = vpack.c.b16 %v613, %v612
          %v632 = vpack.c.b16 %v615, %v614
          %v633 = vpack.c.b16 %v617, %v616
          %v666 = vunpack.c.l.b16 %v538
          %v667 = vunpack.c.l.b16 %v539
          %v668 = vunpack.c.l.b16 %v540
          %v669 = vunpack.c.l.b16 %v541
          %v670 = vunpack.c.l.b16 %v542
          %v671 = vunpack.c.l.b16 %v543
          %v672 = vunpack.c.l.b16 %v544
          %v673 = vunpack.c.l.b16 %v545
          %v674 = vunpack.c.l.b16 %v546
          %v675 = vunpack.c.l.b16 %v547
          %v676 = vunpack.c.l.b16 %v548
          %v677 = vunpack.c.l.b16 %v549
          %v678 = vunpack.c.l.b16 %v550
          %v679 = vunpack.c.l.b16 %v551
          %v680 = vunpack.c.l.b16 %v552
          %v681 = vunpack.c.l.b16 %v553
          %v682 = vpack.c.b16 %v667, %v666
          %v683 = vpack.c.b16 %v669, %v668
          %v684 = vpack.c.b16 %v671, %v670
          %v685 = vpack.c.b16 %v673, %v672
          %v686 = vpack.c.b16 %v675, %v674
          %v687 = vpack.c.b16 %v677, %v676
          %v688 = vpack.c.b16 %v679, %v678
          %v689 = vpack.c.b16 %v681, %v680
          %698 = vmatprep.subr.bf16.mxu0 0
          %699 = vmatpush1.bf16.msra.mxu0 %v682
          %700 = vmatprep.subr.bf16.mxu0 0
          %701 = vmatpush1.bf16.msra.mxu0 %v683
          %702 = vmatprep.subr.bf16.mxu0 0
          %703 = vmatpush1.bf16.msra.mxu0 %v684
          %704 = vmatprep.subr.bf16.mxu0 0
          %705 = vmatpush1.bf16.msra.mxu0 %v685
          %706 = vmatprep.subr.bf16.mxu0 0
          %707 = vmatpush1.bf16.msra.mxu0 %v686
          %708 = vmatprep.subr.bf16.mxu0 0
          %709 = vmatpush1.bf16.msra.mxu0 %v687
          %710 = vmatprep.subr.bf16.mxu0 0
          %711 = vmatpush1.bf16.msra.mxu0 %v688
          %712 = vmatprep.subr.bf16.mxu0 0
          %713 = vmatpush1.bf16.msra.mxu0 %v689
          %714 = vmatprep.subr.bf16.mxu0 0
          %715 = vmatpush1.bf16.msra.mxu0 0
          %716 = vmatprep.subr.bf16.mxu0 0
          %717 = vmatpush1.bf16.msra.mxu0 0
          %718 = vmatprep.subr.bf16.mxu0 0
          %719 = vmatpush1.bf16.msra.mxu0 0
          %720 = vmatprep.subr.bf16.mxu0 0
          %721 = vmatpush1.bf16.msra.mxu0 0
          %722 = vmatprep.subr.bf16.mxu0 0
          %723 = vmatpush1.bf16.msra.mxu0 0
          %724 = vmatprep.subr.bf16.mxu0 0
          %725 = vmatpush1.bf16.msra.mxu0 0
          %726 = vmatprep.subr.bf16.mxu0 0
          %727 = vmatpush1.bf16.msra.mxu0 0
          %728 = vmatprep.subr.bf16.mxu0 0
          %729 = vmatpush1.bf16.msra.mxu0 0
          %730 = vmatprep.mubr.bf16.mxu0 0
          %731 = vmatmul.mubr.bf16.gmra.mrb[0].mxu0 %v618
          %v732 = vpop.f32.mrb[0].mxu0
          %v733 = vadd.f32 0.0, %v732
          %v734 = vpop.f32.mrb[0].mxu0
          %v735 = vpop.f32.mrb[0].mxu0
          %v736 = vadd.f32 0.0, %v735
          %v737 = vpop.f32.mrb[0].mxu0
          %738 = vmatprep.mubr.bf16.mxu0 0
          %739 = vmatmul.mubr.bf16.gmra.mrb[0].mxu0 %v619
          %v740 = vpop.f32.mrb[0].mxu0
          %v741 = vadd.f32 0.0, %v740
          %v742 = vpop.f32.mrb[0].mxu0
          %v743 = vpop.f32.mrb[0].mxu0
          %v744 = vadd.f32 0.0, %v743
          %v745 = vpop.f32.mrb[0].mxu0
          %746 = vmatprep.mubr.bf16.mxu0 0
          %747 = vmatmul.mubr.bf16.gmra.mrb[0].mxu0 %v620
          %v748 = vpop.f32.mrb[0].mxu0
          %v749 = vadd.f32 0.0, %v748
          %v750 = vpop.f32.mrb[0].mxu0
          %v751 = vpop.f32.mrb[0].mxu0
          %v752 = vadd.f32 0.0, %v751
          %v753 = vpop.f32.mrb[0].mxu0
          %754 = vmatprep.mubr.bf16.mxu0 0
          %755 = vmatmul.mubr.bf16.gmra.mrb[0].mxu0 %v621
          %v756 = vpop.f32.mrb[0].mxu0
          %v757 = vadd.f32 0.0, %v756
          %v758 = vpop.f32.mrb[0].mxu0
          %v759 = vpop.f32.mrb[0].mxu0
          %v760 = vadd.f32 0.0, %v759
          %v761 = vpop.f32.mrb[0].mxu0
          %762 = vmatprep.mubr.bf16.mxu0 0
          %763 = vmatmul.mubr.bf16.gmra.mrb[0].mxu0 %v622
          %v764 = vpop.f32.mrb[0].mxu0
          %v765 = vadd.f32 0.0, %v764
          %v766 = vpop.f32.mrb[0].mxu0
          %v767 = vpop.f32.mrb[0].mxu0
          %v768 = vadd.f32 0.0, %v767
          %v769 = vpop.f32.mrb[0].mxu0
          %770 = vmatprep.mubr.bf16.mxu0 0
          %771 = vmatmul.mubr.bf16.gmra.mrb[0].mxu0 %v623
          %v772 = vpop.f32.mrb[0].mxu0
          %v773 = vadd.f32 0.0, %v772
          %v774 = vpop.f32.mrb[0].mxu0
          %v775 = vpop.f32.mrb[0].mxu0
          %v776 = vadd.f32 0.0, %v775
          %v777 = vpop.f32.mrb[0].mxu0
          %778 = vmatprep.mubr.bf16.mxu0 0
          %779 = vmatmul.mubr.bf16.gmra.mrb[0].mxu0 %v624
          %v780 = vpop.f32.mrb[0].mxu0
          %v781 = vadd.f32 0.0, %v780
          %v782 = vpop.f32.mrb[0].mxu0
          %v783 = vpop.f32.mrb[0].mxu0
          %v784 = vadd.f32 0.0, %v783
          %v785 = vpop.f32.mrb[0].mxu0
          %786 = vmatprep.mubr.bf16.mxu0 0
          %787 = vmatmul.mubr.bf16.gmra.mrb[0].mxu0 %v625
          %v788 = vpop.f32.mrb[0].mxu0
          %v789 = vadd.f32 0.0, %v788
          %v790 = vpop.f32.mrb[0].mxu0
          %v791 = vpop.f32.mrb[0].mxu0
          %v792 = vadd.f32 0.0, %v791
          %v793 = vpop.f32.mrb[0].mxu0
          %794 = vmatprep.mubr.bf16.mxu0 0
          %795 = vmatmul.mubr.bf16.gmra.mrb[0].mxu0 %v626
          %v796 = vpop.f32.mrb[0].mxu0
          %v797 = vadd.f32 0.0, %v796
          %v798 = vpop.f32.mrb[0].mxu0
          %v799 = vpop.f32.mrb[0].mxu0
          %v800 = vadd.f32 0.0, %v799
          %v801 = vpop.f32.mrb[0].mxu0
          %802 = vmatprep.mubr.bf16.mxu0 0
          %803 = vmatmul.mubr.bf16.gmra.mrb[0].mxu0 %v627
          %v804 = vpop.f32.mrb[0].mxu0
          %v805 = vadd.f32 0.0, %v804
          %v806 = vpop.f32.mrb[0].mxu0
          %v807 = vpop.f32.mrb[0].mxu0
          %v808 = vadd.f32 0.0, %v807
          %v809 = vpop.f32.mrb[0].mxu0
          %810 = vmatprep.mubr.bf16.mxu0 0
          %811 = vmatmul.mubr.bf16.gmra.mrb[0].mxu0 %v628
          %v812 = vpop.f32.mrb[0].mxu0
          %v813 = vadd.f32 0.0, %v812
          %v814 = vpop.f32.mrb[0].mxu0
          %v815 = vpop.f32.mrb[0].mxu0
          %v816 = vadd.f32 0.0, %v815
          %v817 = vpop.f32.mrb[0].mxu0
          %818 = vmatprep.mubr.bf16.mxu0 0
          %819 = vmatmul.mubr.bf16.gmra.mrb[0].mxu0 %v629
          %v820 = vpop.f32.mrb[0].mxu0
          %v821 = vadd.f32 0.0, %v820
          %v822 = vpop.f32.mrb[0].mxu0
          %v823 = vpop.f32.mrb[0].mxu0
          %v824 = vadd.f32 0.0, %v823
          %v825 = vpop.f32.mrb[0].mxu0
          %826 = vmatprep.mubr.bf16.mxu0 0
          %827 = vmatmul.mubr.bf16.gmra.mrb[0].mxu0 %v630
          %v828 = vpop.f32.mrb[0].mxu0
          %v829 = vadd.f32 0.0, %v828
          %v830 = vpop.f32.mrb[0].mxu0
          %v831 = vpop.f32.mrb[0].mxu0
          %v832 = vadd.f32 0.0, %v831
          %v833 = vpop.f32.mrb[0].mxu0
          %834 = vmatprep.mubr.bf16.mxu0 0
          %835 = vmatmul.mubr.bf16.gmra.mrb[0].mxu0 %v631
          %v836 = vpop.f32.mrb[0].mxu0
          %v837 = vadd.f32 0.0, %v836
          %v838 = vpop.f32.mrb[0].mxu0
          %v839 = vpop.f32.mrb[0].mxu0
          %v840 = vadd.f32 0.0, %v839
          %v841 = vpop.f32.mrb[0].mxu0
          %842 = vmatprep.mubr.bf16.mxu0 0
          %843 = vmatmul.mubr.bf16.gmra.mrb[0].mxu0 %v632
          %v844 = vpop.f32.mrb[0].mxu0
          %v845 = vadd.f32 0.0, %v844
          %v846 = vpop.f32.mrb[0].mxu0
          %v847 = vpop.f32.mrb[0].mxu0
          %v848 = vadd.f32 0.0, %v847
          %v849 = vpop.f32.mrb[0].mxu0
          %850 = vmatprep.mubr.bf16.mxu0 0
          %851 = vmatmul.mubr.bf16.gmra.mrb[0].mxu0 %v633
          %v852 = vpop.f32.mrb[0].mxu0
          %v853 = vadd.f32 0.0, %v852
          %v854 = vpop.f32.mrb[0].mxu0
          %v855 = vpop.f32.mrb[0].mxu0
          %v856 = vadd.f32 0.0, %v855
          %v857 = vpop.f32.mrb[0].mxu0
          %858 = vdwg.mxu0
          %v859 = vpack.c.bf16 %v736, %v733
          %v860 = vpack.c.bf16 %v744, %v741
          %v861 = vpack.c.bf16 %v752, %v749
          %v862 = vpack.c.bf16 %v760, %v757
          %v863 = vpack.c.bf16 %v768, %v765
          %v864 = vpack.c.bf16 %v776, %v773
          %v865 = vpack.c.bf16 %v784, %v781
          %v866 = vpack.c.bf16 %v792, %v789
          %v867 = vpack.c.bf16 %v800, %v797
          %v868 = vpack.c.bf16 %v808, %v805
          %v869 = vpack.c.bf16 %v816, %v813
          %v870 = vpack.c.bf16 %v824, %v821
          %v871 = vpack.c.bf16 %v832, %v829
          %v872 = vpack.c.bf16 %v840, %v837
          %v873 = vpack.c.bf16 %v848, %v845
          %v874 = vpack.c.bf16 %v856, %v853
          %s875 = sshra.s32 %s501, 4
          %s876 = sand.u32 %s501, 15
          %s877 = smul.addr %s875, 8
          %s878 = scalar_lea.vmem [#allocation2], %s877
          %879 = vst [vmem:[%s878] sm:$0xff] %v859
          %880 = vst [vmem:[%s878 + $0x8] sm:$0xff] %v860
          %881 = vst [vmem:[%s878 + $0x10] sm:$0xff] %v861
          %882 = vst [vmem:[%s878 + $0x18] sm:$0xff] %v862
          %883 = vst [vmem:[%s878 + $0x20] sm:$0xff] %v863
          %884 = vst [vmem:[%s878 + $0x28] sm:$0xff] %v864
          %885 = vst [vmem:[%s878 + $0x30] sm:$0xff] %v865
          %886 = vst [vmem:[%s878 + $0x38] sm:$0xff] %v866
          %887 = vst [vmem:[%s878 + $0x40] sm:$0xff] %v867
          %888 = vst [vmem:[%s878 + $0x48] sm:$0xff] %v868
          %889 = vst [vmem:[%s878 + $0x50] sm:$0xff] %v869
          %890 = vst [vmem:[%s878 + $0x58] sm:$0xff] %v870
          %891 = vst [vmem:[%s878 + $0x60] sm:$0xff] %v871
          %892 = vst [vmem:[%s878 + $0x68] sm:$0xff] %v872
          %893 = vst [vmem:[%s878 + $0x70] sm:$0xff] %v873
          %894 = vst [vmem:[%s878 + $0x78] sm:$0xff] %v874
          %v895 = vld [vmem:[#allocation8] sm:$0xf]
          %v896 = vld [vmem:[#allocation8 + $0x4] sm:$0xf]
          %v897 = vld [vmem:[#allocation8 + $0x8] sm:$0xf]
          %v898 = vld [vmem:[#allocation8 + $0xc] sm:$0xf]
          %v899 = vld [vmem:[#allocation8 + $0x10] sm:$0xf]
          %v900 = vld [vmem:[#allocation8 + $0x14] sm:$0xf]
          %v901 = vld [vmem:[#allocation8 + $0x18] sm:$0xf]
          %v902 = vld [vmem:[#allocation8 + $0x1c] sm:$0xf]
          %v903 = vld [vmem:[#allocation8 + $0x20] sm:$0xf]
          %v904 = vld [vmem:[#allocation8 + $0x24] sm:$0xf]
          %v905 = vld [vmem:[#allocation8 + $0x28] sm:$0xf]
          %v906 = vld [vmem:[#allocation8 + $0x2c] sm:$0xf]
          %v907 = vld [vmem:[#allocation8 + $0x30] sm:$0xf]
          %v908 = vld [vmem:[#allocation8 + $0x34] sm:$0xf]
          %v909 = vld [vmem:[#allocation8 + $0x38] sm:$0xf]
          %v910 = vld [vmem:[#allocation8 + $0x3c] sm:$0xf]
          %v927 = vunpack.c.l.b16 %v895
          %v928 = vunpack.c.l.b16 %v896
          %v929 = vunpack.c.l.b16 %v897
          %v930 = vunpack.c.l.b16 %v898
          %v931 = vunpack.c.l.b16 %v899
          %v932 = vunpack.c.l.b16 %v900
          %v933 = vunpack.c.l.b16 %v901
          %v934 = vunpack.c.l.b16 %v902
          %v935 = vunpack.c.l.b16 %v903
          %v936 = vunpack.c.l.b16 %v904
          %v937 = vunpack.c.l.b16 %v905
          %v938 = vunpack.c.l.b16 %v906
          %v939 = vunpack.c.l.b16 %v907
          %v940 = vunpack.c.l.b16 %v908
          %v941 = vunpack.c.l.b16 %v909
          %v942 = vunpack.c.l.b16 %v910
          %v943 = vpack.c.b16 %v928, %v927
          %v944 = vpack.c.b16 %v930, %v929
          %v945 = vpack.c.b16 %v932, %v931
          %v946 = vpack.c.b16 %v934, %v933
          %v947 = vpack.c.b16 %v936, %v935
          %v948 = vpack.c.b16 %v938, %v937
          %v949 = vpack.c.b16 %v940, %v939
          %v950 = vpack.c.b16 %v942, %v941
          %959 = vmatprep.subr.bf16.mxu0 0
          %960 = vmatpush1.bf16.msra.mxu0 %v943
          %961 = vmatprep.subr.bf16.mxu0 0
          %962 = vmatpush1.bf16.msra.mxu0 %v944
          %963 = vmatprep.subr.bf16.mxu0 0
          %964 = vmatpush1.bf16.msra.mxu0 %v945
          %965 = vmatprep.subr.bf16.mxu0 0
          %966 = vmatpush1.bf16.msra.mxu0 %v946
          %967 = vmatprep.subr.bf16.mxu0 0
          %968 = vmatpush1.bf16.msra.mxu0 %v947
          %969 = vmatprep.subr.bf16.mxu0 0
          %970 = vmatpush1.bf16.msra.mxu0 %v948
          %971 = vmatprep.subr.bf16.mxu0 0
          %972 = vmatpush1.bf16.msra.mxu0 %v949
          %973 = vmatprep.subr.bf16.mxu0 0
          %974 = vmatpush1.bf16.msra.mxu0 %v950
          %975 = vmatprep.subr.bf16.mxu0 0
          %976 = vmatpush1.bf16.msra.mxu0 0
          %977 = vmatprep.subr.bf16.mxu0 0
          %978 = vmatpush1.bf16.msra.mxu0 0
          %979 = vmatprep.subr.bf16.mxu0 0
          %980 = vmatpush1.bf16.msra.mxu0 0
          %981 = vmatprep.subr.bf16.mxu0 0
          %982 = vmatpush1.bf16.msra.mxu0 0
          %983 = vmatprep.subr.bf16.mxu0 0
          %984 = vmatpush1.bf16.msra.mxu0 0
          %985 = vmatprep.subr.bf16.mxu0 0
          %986 = vmatpush1.bf16.msra.mxu0 0
          %987 = vmatprep.subr.bf16.mxu0 0
          %988 = vmatpush1.bf16.msra.mxu0 0
          %989 = vmatprep.subr.bf16.mxu0 0
          %990 = vmatpush1.bf16.msra.mxu0 0
          %991 = vmatprep.mubr.bf16.mxu0 0
          %992 = vmatmul.mubr.bf16.gmra.mrb[0].mxu0 %v618
          %v993 = vpop.f32.mrb[0].mxu0
          %v994 = vadd.f32 0.0, %v993
          %v995 = vpop.f32.mrb[0].mxu0
          %v996 = vpop.f32.mrb[0].mxu0
          %v997 = vadd.f32 0.0, %v996
          %v998 = vpop.f32.mrb[0].mxu0
          %999 = vmatprep.mubr.bf16.mxu0 0
          %1000 = vmatmul.mubr.bf16.gmra.mrb[0].mxu0 %v619
          %v1001 = vpop.f32.mrb[0].mxu0
          %v1002 = vadd.f32 0.0, %v1001
          %v1003 = vpop.f32.mrb[0].mxu0
          %v1004 = vpop.f32.mrb[0].mxu0
          %v1005 = vadd.f32 0.0, %v1004
          %v1006 = vpop.f32.mrb[0].mxu0
          %1007 = vmatprep.mubr.bf16.mxu0 0
          %1008 = vmatmul.mubr.bf16.gmra.mrb[0].mxu0 %v620
          %v1009 = vpop.f32.mrb[0].mxu0
          %v1010 = vadd.f32 0.0, %v1009
          %v1011 = vpop.f32.mrb[0].mxu0
          %v1012 = vpop.f32.mrb[0].mxu0
          %v1013 = vadd.f32 0.0, %v1012
          %v1014 = vpop.f32.mrb[0].mxu0
          %1015 = vmatprep.mubr.bf16.mxu0 0
          %1016 = vmatmul.mubr.bf16.gmra.mrb[0].mxu0 %v621
          %v1017 = vpop.f32.mrb[0].mxu0
          %v1018 = vadd.f32 0.0, %v1017
          %v1019 = vpop.f32.mrb[0].mxu0
          %v1020 = vpop.f32.mrb[0].mxu0
          %v1021 = vadd.f32 0.0, %v1020
          %v1022 = vpop.f32.mrb[0].mxu0
          %1023 = vmatprep.mubr.bf16.mxu0 0
          %1024 = vmatmul.mubr.bf16.gmra.mrb[0].mxu0 %v622
          %v1025 = vpop.f32.mrb[0].mxu0
          %v1026 = vadd.f32 0.0, %v1025
          %v1027 = vpop.f32.mrb[0].mxu0
          %v1028 = vpop.f32.mrb[0].mxu0
          %v1029 = vadd.f32 0.0, %v1028
          %v1030 = vpop.f32.mrb[0].mxu0
          %1031 = vmatprep.mubr.bf16.mxu0 0
          %1032 = vmatmul.mubr.bf16.gmra.mrb[0].mxu0 %v623
          %v1033 = vpop.f32.mrb[0].mxu0
          %v1034 = vadd.f32 0.0, %v1033
          %v1035 = vpop.f32.mrb[0].mxu0
          %v1036 = vpop.f32.mrb[0].mxu0
          %v1037 = vadd.f32 0.0, %v1036
          %v1038 = vpop.f32.mrb[0].mxu0
          %1039 = vmatprep.mubr.bf16.mxu0 0
          %1040 = vmatmul.mubr.bf16.gmra.mrb[0].mxu0 %v624
          %v1041 = vpop.f32.mrb[0].mxu0
          %v1042 = vadd.f32 0.0, %v1041
          %v1043 = vpop.f32.mrb[0].mxu0
          %v1044 = vpop.f32.mrb[0].mxu0
          %v1045 = vadd.f32 0.0, %v1044
          %v1046 = vpop.f32.mrb[0].mxu0
          %1047 = vmatprep.mubr.bf16.mxu0 0
          %1048 = vmatmul.mubr.bf16.gmra.mrb[0].mxu0 %v625
          %v1049 = vpop.f32.mrb[0].mxu0
          %v1050 = vadd.f32 0.0, %v1049
          %v1051 = vpop.f32.mrb[0].mxu0
          %v1052 = vpop.f32.mrb[0].mxu0
          %v1053 = vadd.f32 0.0, %v1052
          %v1054 = vpop.f32.mrb[0].mxu0
          %1055 = vmatprep.mubr.bf16.mxu0 0
          %1056 = vmatmul.mubr.bf16.gmra.mrb[0].mxu0 %v626
          %v1057 = vpop.f32.mrb[0].mxu0
          %v1058 = vadd.f32 0.0, %v1057
          %v1059 = vpop.f32.mrb[0].mxu0
          %v1060 = vpop.f32.mrb[0].mxu0
          %v1061 = vadd.f32 0.0, %v1060
          %v1062 = vpop.f32.mrb[0].mxu0
          %1063 = vmatprep.mubr.bf16.mxu0 0
          %1064 = vmatmul.mubr.bf16.gmra.mrb[0].mxu0 %v627
          %v1065 = vpop.f32.mrb[0].mxu0
          %v1066 = vadd.f32 0.0, %v1065
          %v1067 = vpop.f32.mrb[0].mxu0
          %v1068 = vpop.f32.mrb[0].mxu0
          %v1069 = vadd.f32 0.0, %v1068
          %v1070 = vpop.f32.mrb[0].mxu0
          %1071 = vmatprep.mubr.bf16.mxu0 0
          %1072 = vmatmul.mubr.bf16.gmra.mrb[0].mxu0 %v628
          %v1073 = vpop.f32.mrb[0].mxu0
          %v1074 = vadd.f32 0.0, %v1073
          %v1075 = vpop.f32.mrb[0].mxu0
          %v1076 = vpop.f32.mrb[0].mxu0
          %v1077 = vadd.f32 0.0, %v1076
          %v1078 = vpop.f32.mrb[0].mxu0
          %1079 = vmatprep.mubr.bf16.mxu0 0
          %1080 = vmatmul.mubr.bf16.gmra.mrb[0].mxu0 %v629
          %v1081 = vpop.f32.mrb[0].mxu0
          %v1082 = vadd.f32 0.0, %v1081
          %v1083 = vpop.f32.mrb[0].mxu0
          %v1084 = vpop.f32.mrb[0].mxu0
          %v1085 = vadd.f32 0.0, %v1084
          %v1086 = vpop.f32.mrb[0].mxu0
          %1087 = vmatprep.mubr.bf16.mxu0 0
          %1088 = vmatmul.mubr.bf16.gmra.mrb[0].mxu0 %v630
          %v1089 = vpop.f32.mrb[0].mxu0
          %v1090 = vadd.f32 0.0, %v1089
          %v1091 = vpop.f32.mrb[0].mxu0
          %v1092 = vpop.f32.mrb[0].mxu0
          %v1093 = vadd.f32 0.0, %v1092
          %v1094 = vpop.f32.mrb[0].mxu0
          %1095 = vmatprep.mubr.bf16.mxu0 0
          %1096 = vmatmul.mubr.bf16.gmra.mrb[0].mxu0 %v631
          %v1097 = vpop.f32.mrb[0].mxu0
          %v1098 = vadd.f32 0.0, %v1097
          %v1099 = vpop.f32.mrb[0].mxu0
          %v1100 = vpop.f32.mrb[0].mxu0
          %v1101 = vadd.f32 0.0, %v1100
          %v1102 = vpop.f32.mrb[0].mxu0
          %1103 = vmatprep.mubr.bf16.mxu0 0
          %1104 = vmatmul.mubr.bf16.gmra.mrb[0].mxu0 %v632
          %v1105 = vpop.f32.mrb[0].mxu0
          %v1106 = vadd.f32 0.0, %v1105
          %v1107 = vpop.f32.mrb[0].mxu0
          %v1108 = vpop.f32.mrb[0].mxu0
          %v1109 = vadd.f32 0.0, %v1108
          %v1110 = vpop.f32.mrb[0].mxu0
          %1111 = vmatprep.mubr.bf16.mxu0 0
          %1112 = vmatmul.mubr.bf16.gmra.mrb[0].mxu0 %v633
          %v1113 = vpop.f32.mrb[0].mxu0
          %v1114 = vadd.f32 0.0, %v1113
          %v1115 = vpop.f32.mrb[0].mxu0
          %v1116 = vpop.f32.mrb[0].mxu0
          %v1117 = vadd.f32 0.0, %v1116
          %v1118 = vpop.f32.mrb[0].mxu0
          %1119 = vdwg.mxu0
          %v1120 = vpack.c.bf16 %v997, %v994
          %v1121 = vpack.c.bf16 %v1005, %v1002
          %v1122 = vpack.c.bf16 %v1013, %v1010
          %v1123 = vpack.c.bf16 %v1021, %v1018
          %v1124 = vpack.c.bf16 %v1029, %v1026
          %v1125 = vpack.c.bf16 %v1037, %v1034
          %v1126 = vpack.c.bf16 %v1045, %v1042
          %v1127 = vpack.c.bf16 %v1053, %v1050
          %v1128 = vpack.c.bf16 %v1061, %v1058
          %v1129 = vpack.c.bf16 %v1069, %v1066
          %v1130 = vpack.c.bf16 %v1077, %v1074
          %v1131 = vpack.c.bf16 %v1085, %v1082
          %v1132 = vpack.c.bf16 %v1093, %v1090
          %v1133 = vpack.c.bf16 %v1101, %v1098
          %v1134 = vpack.c.bf16 %v1109, %v1106
          %v1135 = vpack.c.bf16 %v1117, %v1114
          %s1136 = smul.addr %s875, 8
          %s1137 = scalar_lea.vmem [#allocation3], %s1136
          %1138 = vst [vmem:[%s1137] sm:$0xff] %v1120
          %1139 = vst [vmem:[%s1137 + $0x8] sm:$0xff] %v1121
          %1140 = vst [vmem:[%s1137 + $0x10] sm:$0xff] %v1122
          %1141 = vst [vmem:[%s1137 + $0x18] sm:$0xff] %v1123
          %1142 = vst [vmem:[%s1137 + $0x20] sm:$0xff] %v1124
          %1143 = vst [vmem:[%s1137 + $0x28] sm:$0xff] %v1125
          %1144 = vst [vmem:[%s1137 + $0x30] sm:$0xff] %v1126
          %1145 = vst [vmem:[%s1137 + $0x38] sm:$0xff] %v1127
          %1146 = vst [vmem:[%s1137 + $0x40] sm:$0xff] %v1128
          %1147 = vst [vmem:[%s1137 + $0x48] sm:$0xff] %v1129
          %1148 = vst [vmem:[%s1137 + $0x50] sm:$0xff] %v1130
          %1149 = vst [vmem:[%s1137 + $0x58] sm:$0xff] %v1131
          %1150 = vst [vmem:[%s1137 + $0x60] sm:$0xff] %v1132
          %1151 = vst [vmem:[%s1137 + $0x68] sm:$0xff] %v1133
          %1152 = vst [vmem:[%s1137 + $0x70] sm:$0xff] %v1134
          %1153 = vst [vmem:[%s1137 + $0x78] sm:$0xff] %v1135
        $region76: #{tpu_custom_call.1} parent=55 // pred_fallthru
          _
        %p1154 = scmp.eq.s32.totalorder %s30, 1
        // Predicated region
        $region77: #{tpu_custom_call.1} parent=55 // pred_check
          %p1155 = pneg %p1154
        $region78: #{tpu_custom_call.1} parent=55 // pred_check_branch
          %1157 = sbr.rel (%p1155) target = $region80
        $region79: #{tpu_custom_call.1} parent=55 // pred_region
          %v1158 = vld [vmem:[%s473] sm:$0xff]
          %v1159 = vld [vmem:[%s473 + $0x8] sm:$0xff]
          %v1160 = vld [vmem:[%s473 + $0x10] sm:$0xff]
          %v1161 = vld [vmem:[%s473 + $0x18] sm:$0xff]
          %v1162 = vld [vmem:[%s473 + $0x20] sm:$0xff]
          %v1163 = vld [vmem:[%s473 + $0x28] sm:$0xff]
          %v1164 = vld [vmem:[%s473 + $0x30] sm:$0xff]
          %v1165 = vld [vmem:[%s473 + $0x38] sm:$0xff]
          %v1166 = vld [vmem:[%s473 + $0x40] sm:$0xff]
          %v1167 = vld [vmem:[%s473 + $0x48] sm:$0xff]
          %v1168 = vld [vmem:[%s473 + $0x50] sm:$0xff]
          %v1169 = vld [vmem:[%s473 + $0x58] sm:$0xff]
          %v1170 = vld [vmem:[%s473 + $0x60] sm:$0xff]
          %v1171 = vld [vmem:[%s473 + $0x68] sm:$0xff]
          %v1172 = vld [vmem:[%s473 + $0x70] sm:$0xff]
          %v1173 = vld [vmem:[%s473 + $0x78] sm:$0xff]
          %v1174 = vunpack.c.l.s8.bf16 %v1158
          %v1175 = vunpack.c.l.s8.bf16 %v1159
          %v1176 = vunpack.c.h.s8.bf16 %v1158
          %v1177 = vunpack.c.h.s8.bf16 %v1159
          %v1178 = vunpack.c.l.s8.bf16 %v1160
          %v1179 = vunpack.c.l.s8.bf16 %v1161
          %v1180 = vunpack.c.h.s8.bf16 %v1160
          %v1181 = vunpack.c.h.s8.bf16 %v1161
          %v1182 = vunpack.c.l.s8.bf16 %v1162
          %v1183 = vunpack.c.l.s8.bf16 %v1163
          %v1184 = vunpack.c.h.s8.bf16 %v1162
          %v1185 = vunpack.c.h.s8.bf16 %v1163
          %v1186 = vunpack.c.l.s8.bf16 %v1164
          %v1187 = vunpack.c.l.s8.bf16 %v1165
          %v1188 = vunpack.c.h.s8.bf16 %v1164
          %v1189 = vunpack.c.h.s8.bf16 %v1165
          %v1190 = vunpack.c.l.s8.bf16 %v1166
          %v1191 = vunpack.c.l.s8.bf16 %v1167
          %v1192 = vunpack.c.h.s8.bf16 %v1166
          %v1193 = vunpack.c.h.s8.bf16 %v1167
          %v1194 = vunpack.c.l.s8.bf16 %v1168
          %v1195 = vunpack.c.l.s8.bf16 %v1169
          %v1196 = vunpack.c.h.s8.bf16 %v1168
          %v1197 = vunpack.c.h.s8.bf16 %v1169
          %v1198 = vunpack.c.l.s8.bf16 %v1170
          %v1199 = vunpack.c.l.s8.bf16 %v1171
          %v1200 = vunpack.c.h.s8.bf16 %v1170
          %v1201 = vunpack.c.h.s8.bf16 %v1171
          %v1202 = vunpack.c.l.s8.bf16 %v1172
          %v1203 = vunpack.c.l.s8.bf16 %v1173
          %v1204 = vunpack.c.h.s8.bf16 %v1172
          %v1205 = vunpack.c.h.s8.bf16 %v1173
          %v1206 = vld [vmem:[#allocation2] sm:$0xff]
          %v1207 = vld [vmem:[#allocation2 + $0x8] sm:$0xff]
          %v1208 = vld [vmem:[#allocation2 + $0x10] sm:$0xff]
          %v1209 = vld [vmem:[#allocation2 + $0x18] sm:$0xff]
          %v1210 = vld [vmem:[#allocation2 + $0x20] sm:$0xff]
          %v1211 = vld [vmem:[#allocation2 + $0x28] sm:$0xff]
          %v1212 = vld [vmem:[#allocation2 + $0x30] sm:$0xff]
          %v1213 = vld [vmem:[#allocation2 + $0x38] sm:$0xff]
          %v1214 = vld [vmem:[#allocation2 + $0x40] sm:$0xff]
          %v1215 = vld [vmem:[#allocation2 + $0x48] sm:$0xff]
          %v1216 = vld [vmem:[#allocation2 + $0x50] sm:$0xff]
          %v1217 = vld [vmem:[#allocation2 + $0x58] sm:$0xff]
          %v1218 = vld [vmem:[#allocation2 + $0x60] sm:$0xff]
          %v1219 = vld [vmem:[#allocation2 + $0x68] sm:$0xff]
          %v1220 = vld [vmem:[#allocation2 + $0x70] sm:$0xff]
          %v1221 = vld [vmem:[#allocation2 + $0x78] sm:$0xff]
          %1222 = vmatprep.subr.bf16.mxu0 0
          %1223 = vmatpush1.bf16.msra.mxu0 %v1206
          %1224 = vmatprep.subr.bf16.mxu0 0
          %1225 = vmatpush1.bf16.msra.mxu0 %v1207
          %1226 = vmatprep.subr.bf16.mxu0 0
          %1227 = vmatpush1.bf16.msra.mxu0 %v1208
          %1228 = vmatprep.subr.bf16.mxu0 0
          %1229 = vmatpush1.bf16.msra.mxu0 %v1209
          %1230 = vmatprep.subr.bf16.mxu0 0
          %1231 = vmatpush1.bf16.msra.mxu0 %v1210
          %1232 = vmatprep.subr.bf16.mxu0 0
          %1233 = vmatpush1.bf16.msra.mxu0 %v1211
          %1234 = vmatprep.subr.bf16.mxu0 0
          %1235 = vmatpush1.bf16.msra.mxu0 %v1212
          %1236 = vmatprep.subr.bf16.mxu0 0
          %1237 = vmatpush1.bf16.msra.mxu0 %v1213
          %1238 = vmatprep.subr.bf16.mxu0 0
          %1239 = vmatpush1.bf16.msra.mxu0 %v1214
          %1240 = vmatprep.subr.bf16.mxu0 0
          %1241 = vmatpush1.bf16.msra.mxu0 %v1215
          %1242 = vmatprep.subr.bf16.mxu0 0
          %1243 = vmatpush1.bf16.msra.mxu0 %v1216
          %1244 = vmatprep.subr.bf16.mxu0 0
          %1245 = vmatpush1.bf16.msra.mxu0 %v1217
          %1246 = vmatprep.subr.bf16.mxu0 0
          %1247 = vmatpush1.bf16.msra.mxu0 %v1218
          %1248 = vmatprep.subr.bf16.mxu0 0
          %1249 = vmatpush1.bf16.msra.mxu0 %v1219
          %1250 = vmatprep.subr.bf16.mxu0 0
          %1251 = vmatpush1.bf16.msra.mxu0 %v1220
          %1252 = vmatprep.subr.bf16.mxu0 0
          %1253 = vmatpush1.bf16.msra.mxu0 %v1221
          %1254 = vmatprep.mubr.bf16.mxu0 %v1175
          %1255 = vmatmul.mubr.bf16.gmra.mrb[0].mxu0 %v1174
          %v1256 = vpop.f32.mrb[0].mxu0
          %v1257 = vadd.f32 0.0, %v1256
          %v1258 = vpop.f32.mrb[0].mxu0
          %v1259 = vpop.f32.mrb[0].mxu0
          %v1260 = vadd.f32 0.0, %v1259
          %v1261 = vpop.f32.mrb[0].mxu0
          %1262 = vmatprep.mubr.bf16.mxu0 %v1177
          %1263 = vmatmul.mubr.bf16.gmra.mrb[0].mxu0 %v1176
          %v1264 = vpop.f32.mrb[0].mxu0
          %v1265 = vadd.f32 0.0, %v1264
          %v1266 = vpop.f32.mrb[0].mxu0
          %v1267 = vpop.f32.mrb[0].mxu0
          %v1268 = vadd.f32 0.0, %v1267
          %v1269 = vpop.f32.mrb[0].mxu0
          %1270 = vmatprep.mubr.bf16.mxu0 %v1179
          %1271 = vmatmul.mubr.bf16.gmra.mrb[0].mxu0 %v1178
          %v1272 = vpop.f32.mrb[0].mxu0
          %v1273 = vadd.f32 0.0, %v1272
          %v1274 = vpop.f32.mrb[0].mxu0
          %v1275 = vpop.f32.mrb[0].mxu0
          %v1276 = vadd.f32 0.0, %v1275
          %v1277 = vpop.f32.mrb[0].mxu0
          %1278 = vmatprep.mubr.bf16.mxu0 %v1181
          %1279 = vmatmul.mubr.bf16.gmra.mrb[0].mxu0 %v1180
          %v1280 = vpop.f32.mrb[0].mxu0
          %v1281 = vadd.f32 0.0, %v1280
          %v1282 = vpop.f32.mrb[0].mxu0
          %v1283 = vpop.f32.mrb[0].mxu0
          %v1284 = vadd.f32 0.0, %v1283
          %v1285 = vpop.f32.mrb[0].mxu0
          %1286 = vmatprep.mubr.bf16.mxu0 %v1183
          %1287 = vmatmul.mubr.bf16.gmra.mrb[0].mxu0 %v1182
          %v1288 = vpop.f32.mrb[0].mxu0
          %v1289 = vadd.f32 0.0, %v1288
          %v1290 = vpop.f32.mrb[0].mxu0
          %v1291 = vpop.f32.mrb[0].mxu0
          %v1292 = vadd.f32 0.0, %v1291
          %v1293 = vpop.f32.mrb[0].mxu0
          %1294 = vmatprep.mubr.bf16.mxu0 %v1185
          %1295 = vmatmul.mubr.bf16.gmra.mrb[0].mxu0 %v1184
          %v1296 = vpop.f32.mrb[0].mxu0
          %v1297 = vadd.f32 0.0, %v1296
          %v1298 = vpop.f32.mrb[0].mxu0
          %v1299 = vpop.f32.mrb[0].mxu0
          %v1300 = vadd.f32 0.0, %v1299
          %v1301 = vpop.f32.mrb[0].mxu0
          %1302 = vmatprep.mubr.bf16.mxu0 %v1187
          %1303 = vmatmul.mubr.bf16.gmra.mrb[0].mxu0 %v1186
          %v1304 = vpop.f32.mrb[0].mxu0
          %v1305 = vadd.f32 0.0, %v1304
          %v1306 = vpop.f32.mrb[0].mxu0
          %v1307 = vpop.f32.mrb[0].mxu0
          %v1308 = vadd.f32 0.0, %v1307
          %v1309 = vpop.f32.mrb[0].mxu0
          %1310 = vmatprep.mubr.bf16.mxu0 %v1189
          %1311 = vmatmul.mubr.bf16.gmra.mrb[0].mxu0 %v1188
          %v1312 = vpop.f32.mrb[0].mxu0
          %v1313 = vadd.f32 0.0, %v1312
          %v1314 = vpop.f32.mrb[0].mxu0
          %v1315 = vpop.f32.mrb[0].mxu0
          %v1316 = vadd.f32 0.0, %v1315
          %v1317 = vpop.f32.mrb[0].mxu0
          %1318 = vmatprep.mubr.bf16.mxu0 %v1191
          %1319 = vmatmul.mubr.bf16.gmra.mrb[0].mxu0 %v1190
          %v1320 = vpop.f32.mrb[0].mxu0
          %v1321 = vadd.f32 0.0, %v1320
          %v1322 = vpop.f32.mrb[0].mxu0
          %v1323 = vpop.f32.mrb[0].mxu0
          %v1324 = vadd.f32 0.0, %v1323
          %v1325 = vpop.f32.mrb[0].mxu0
          %1326 = vmatprep.mubr.bf16.mxu0 %v1193
          %1327 = vmatmul.mubr.bf16.gmra.mrb[0].mxu0 %v1192
          %v1328 = vpop.f32.mrb[0].mxu0
          %v1329 = vadd.f32 0.0, %v1328
          %v1330 = vpop.f32.mrb[0].mxu0
          %v1331 = vpop.f32.mrb[0].mxu0
          %v1332 = vadd.f32 0.0, %v1331
          %v1333 = vpop.f32.mrb[0].mxu0
          %1334 = vmatprep.mubr.bf16.mxu0 %v1195
          %1335 = vmatmul.mubr.bf16.gmra.mrb[0].mxu0 %v1194
          %v1336 = vpop.f32.mrb[0].mxu0
          %v1337 = vadd.f32 0.0, %v1336
          %v1338 = vpop.f32.mrb[0].mxu0
          %v1339 = vpop.f32.mrb[0].mxu0
          %v1340 = vadd.f32 0.0, %v1339
          %v1341 = vpop.f32.mrb[0].mxu0
          %1342 = vmatprep.mubr.bf16.mxu0 %v1197
          %1343 = vmatmul.mubr.bf16.gmra.mrb[0].mxu0 %v1196
          %v1344 = vpop.f32.mrb[0].mxu0
          %v1345 = vadd.f32 0.0, %v1344
          %v1346 = vpop.f32.mrb[0].mxu0
          %v1347 = vpop.f32.mrb[0].mxu0
          %v1348 = vadd.f32 0.0, %v1347
          %v1349 = vpop.f32.mrb[0].mxu0
          %1350 = vmatprep.mubr.bf16.mxu0 %v1199
          %1351 = vmatmul.mubr.bf16.gmra.mrb[0].mxu0 %v1198
          %v1352 = vpop.f32.mrb[0].mxu0
          %v1353 = vadd.f32 0.0, %v1352
          %v1354 = vpop.f32.mrb[0].mxu0
          %v1355 = vpop.f32.mrb[0].mxu0
          %v1356 = vadd.f32 0.0, %v1355
          %v1357 = vpop.f32.mrb[0].mxu0
          %1358 = vmatprep.mubr.bf16.mxu0 %v1201
          %1359 = vmatmul.mubr.bf16.gmra.mrb[0].mxu0 %v1200
          %v1360 = vpop.f32.mrb[0].mxu0
          %v1361 = vadd.f32 0.0, %v1360
          %v1362 = vpop.f32.mrb[0].mxu0
          %v1363 = vpop.f32.mrb[0].mxu0
          %v1364 = vadd.f32 0.0, %v1363
          %v1365 = vpop.f32.mrb[0].mxu0
          %1366 = vmatprep.mubr.bf16.mxu0 %v1203
          %1367 = vmatmul.mubr.bf16.gmra.mrb[0].mxu0 %v1202
          %v1368 = vpop.f32.mrb[0].mxu0
          %v1369 = vadd.f32 0.0, %v1368
          %v1370 = vpop.f32.mrb[0].mxu0
          %v1371 = vpop.f32.mrb[0].mxu0
          %v1372 = vadd.f32 0.0, %v1371
          %v1373 = vpop.f32.mrb[0].mxu0
          %1374 = vmatprep.mubr.bf16.mxu0 %v1205
          %1375 = vmatmul.mubr.bf16.gmra.mrb[0].mxu0 %v1204
          %v1376 = vpop.f32.mrb[0].mxu0
          %v1377 = vadd.f32 0.0, %v1376
          %v1378 = vpop.f32.mrb[0].mxu0
          %v1379 = vpop.f32.mrb[0].mxu0
          %v1380 = vadd.f32 0.0, %v1379
          %v1381 = vpop.f32.mrb[0].mxu0
          %1382 = vdwg.mxu0
          %v1383 = vld [vmem:[%s483] sm:$0xff]
          %v1384 = vld [vmem:[%s483 + $0x8] sm:$0xff]
          %v1385 = vld [vmem:[%s483 + $0x10] sm:$0xff]
          %v1386 = vld [vmem:[%s483 + $0x18] sm:$0xff]
          %v1387 = vld [vmem:[%s483 + $0x20] sm:$0xff]
          %v1388 = vld [vmem:[%s483 + $0x28] sm:$0xff]
          %v1389 = vld [vmem:[%s483 + $0x30] sm:$0xff]
          %v1390 = vld [vmem:[%s483 + $0x38] sm:$0xff]
          %v1391 = vld [vmem:[%s483 + $0x40] sm:$0xff]
          %v1392 = vld [vmem:[%s483 + $0x48] sm:$0xff]
          %v1393 = vld [vmem:[%s483 + $0x50] sm:$0xff]
          %v1394 = vld [vmem:[%s483 + $0x58] sm:$0xff]
          %v1395 = vld [vmem:[%s483 + $0x60] sm:$0xff]
          %v1396 = vld [vmem:[%s483 + $0x68] sm:$0xff]
          %v1397 = vld [vmem:[%s483 + $0x70] sm:$0xff]
          %v1398 = vld [vmem:[%s483 + $0x78] sm:$0xff]
          %v1399 = vld [vmem:[%s483 + $0x80] sm:$0xff]
          %v1400 = vld [vmem:[%s483 + $0x88] sm:$0xff]
          %v1401 = vld [vmem:[%s483 + $0x90] sm:$0xff]
          %v1402 = vld [vmem:[%s483 + $0x98] sm:$0xff]
          %v1403 = vld [vmem:[%s483 + $0xa0] sm:$0xff]
          %v1404 = vld [vmem:[%s483 + $0xa8] sm:$0xff]
          %v1405 = vld [vmem:[%s483 + $0xb0] sm:$0xff]
          %v1406 = vld [vmem:[%s483 + $0xb8] sm:$0xff]
          %v1407 = vld [vmem:[%s483 + $0xc0] sm:$0xff]
          %v1408 = vld [vmem:[%s483 + $0xc8] sm:$0xff]
          %v1409 = vld [vmem:[%s483 + $0xd0] sm:$0xff]
          %v1410 = vld [vmem:[%s483 + $0xd8] sm:$0xff]
          %v1411 = vld [vmem:[%s483 + $0xe0] sm:$0xff]
          %v1412 = vld [vmem:[%s483 + $0xe8] sm:$0xff]
          %v1413 = vld [vmem:[%s483 + $0xf0] sm:$0xff]
          %v1414 = vld [vmem:[%s483 + $0xf8] sm:$0xff]
          %1416 = vset.pattern.permute.xlu0 0
          %1417 = vperm.xlu0 %1416, %v1383
          %v1418 = vpop.permute.xlu0 %1417
          %1421 = vset.pattern.permute.xlu0 0
          %1422 = vperm.xlu0 %1421, %v1384
          %v1423 = vpop.permute.xlu0 %1422
          %1426 = vset.pattern.permute.xlu0 0
          %1427 = vperm.xlu0 %1426, %v1385
          %v1428 = vpop.permute.xlu0 %1427
          %1431 = vset.pattern.permute.xlu0 0
          %1432 = vperm.xlu0 %1431, %v1386
          %v1433 = vpop.permute.xlu0 %1432
          %1436 = vset.pattern.permute.xlu0 0
          %1437 = vperm.xlu0 %1436, %v1387
          %v1438 = vpop.permute.xlu0 %1437
          %1441 = vset.pattern.permute.xlu0 0
          %1442 = vperm.xlu0 %1441, %v1388
          %v1443 = vpop.permute.xlu0 %1442
          %1446 = vset.pattern.permute.xlu0 0
          %1447 = vperm.xlu0 %1446, %v1389
          %v1448 = vpop.permute.xlu0 %1447
          %1451 = vset.pattern.permute.xlu0 0
          %1452 = vperm.xlu0 %1451, %v1390
          %v1453 = vpop.permute.xlu0 %1452
          %1456 = vset.pattern.permute.xlu0 0
          %1457 = vperm.xlu0 %1456, %v1391
          %v1458 = vpop.permute.xlu0 %1457
          %1461 = vset.pattern.permute.xlu0 0
          %1462 = vperm.xlu0 %1461, %v1392
          %v1463 = vpop.permute.xlu0 %1462
          %1466 = vset.pattern.permute.xlu0 0
          %1467 = vperm.xlu0 %1466, %v1393
          %v1468 = vpop.permute.xlu0 %1467
          %1471 = vset.pattern.permute.xlu0 0
          %1472 = vperm.xlu0 %1471, %v1394
          %v1473 = vpop.permute.xlu0 %1472
          %1476 = vset.pattern.permute.xlu0 0
          %1477 = vperm.xlu0 %1476, %v1395
          %v1478 = vpop.permute.xlu0 %1477
          %1481 = vset.pattern.permute.xlu0 0
          %1482 = vperm.xlu0 %1481, %v1396
          %v1483 = vpop.permute.xlu0 %1482
          %1486 = vset.pattern.permute.xlu0 0
          %1487 = vperm.xlu0 %1486, %v1397
          %v1488 = vpop.permute.xlu0 %1487
          %1491 = vset.pattern.permute.xlu0 0
          %1492 = vperm.xlu0 %1491, %v1398
          %v1493 = vpop.permute.xlu0 %1492
          %1496 = vset.pattern.permute.xlu0 0
          %1497 = vperm.xlu0 %1496, %v1399
          %v1498 = vpop.permute.xlu0 %1497
          %1501 = vset.pattern.permute.xlu0 0
          %1502 = vperm.xlu0 %1501, %v1400
          %v1503 = vpop.permute.xlu0 %1502
          %1506 = vset.pattern.permute.xlu0 0
          %1507 = vperm.xlu0 %1506, %v1401
          %v1508 = vpop.permute.xlu0 %1507
          %1511 = vset.pattern.permute.xlu0 0
          %1512 = vperm.xlu0 %1511, %v1402
          %v1513 = vpop.permute.xlu0 %1512
          %1516 = vset.pattern.permute.xlu0 0
          %1517 = vperm.xlu0 %1516, %v1403
          %v1518 = vpop.permute.xlu0 %1517
          %1521 = vset.pattern.permute.xlu0 0
          %1522 = vperm.xlu0 %1521, %v1404
          %v1523 = vpop.permute.xlu0 %1522
          %1526 = vset.pattern.permute.xlu0 0
          %1527 = vperm.xlu0 %1526, %v1405
          %v1528 = vpop.permute.xlu0 %1527
          %1531 = vset.pattern.permute.xlu0 0
          %1532 = vperm.xlu0 %1531, %v1406
          %v1533 = vpop.permute.xlu0 %1532
          %1536 = vset.pattern.permute.xlu0 0
          %1537 = vperm.xlu0 %1536, %v1407
          %v1538 = vpop.permute.xlu0 %1537
          %1541 = vset.pattern.permute.xlu0 0
          %1542 = vperm.xlu0 %1541, %v1408
          %v1543 = vpop.permute.xlu0 %1542
          %1546 = vset.pattern.permute.xlu0 0
          %1547 = vperm.xlu0 %1546, %v1409
          %v1548 = vpop.permute.xlu0 %1547
          %1551 = vset.pattern.permute.xlu0 0
          %1552 = vperm.xlu0 %1551, %v1410
          %v1553 = vpop.permute.xlu0 %1552
          %1556 = vset.pattern.permute.xlu0 0
          %1557 = vperm.xlu0 %1556, %v1411
          %v1558 = vpop.permute.xlu0 %1557
          %1561 = vset.pattern.permute.xlu0 0
          %1562 = vperm.xlu0 %1561, %v1412
          %v1563 = vpop.permute.xlu0 %1562
          %1566 = vset.pattern.permute.xlu0 0
          %1567 = vperm.xlu0 %1566, %v1413
          %v1568 = vpop.permute.xlu0 %1567
          %1571 = vset.pattern.permute.xlu0 0
          %1572 = vperm.xlu0 %1571, %v1414
          %v1573 = vpop.permute.xlu0 %1572
          %v1575 = vmul.f32 %v1257, %v1418
          %v1576 = vmul.f32 %v1260, %v1423
          %v1577 = vmul.f32 %v1265, %v1428
          %v1578 = vmul.f32 %v1268, %v1433
          %v1579 = vmul.f32 %v1273, %v1438
          %v1580 = vmul.f32 %v1276, %v1443
          %v1581 = vmul.f32 %v1281, %v1448
          %v1582 = vmul.f32 %v1284, %v1453
          %v1583 = vmul.f32 %v1289, %v1458
          %v1584 = vmul.f32 %v1292, %v1463
          %v1585 = vmul.f32 %v1297, %v1468
          %v1586 = vmul.f32 %v1300, %v1473
          %v1587 = vmul.f32 %v1305, %v1478
          %v1588 = vmul.f32 %v1308, %v1483
          %v1589 = vmul.f32 %v1313, %v1488
          %v1590 = vmul.f32 %v1316, %v1493
          %v1591 = vmul.f32 %v1321, %v1498
          %v1592 = vmul.f32 %v1324, %v1503
          %v1593 = vmul.f32 %v1329, %v1508
          %v1594 = vmul.f32 %v1332, %v1513
          %v1595 = vmul.f32 %v1337, %v1518
          %v1596 = vmul.f32 %v1340, %v1523
          %v1597 = vmul.f32 %v1345, %v1528
          %v1598 = vmul.f32 %v1348, %v1533
          %v1599 = vmul.f32 %v1353, %v1538
          %v1600 = vmul.f32 %v1356, %v1543
          %v1601 = vmul.f32 %v1361, %v1548
          %v1602 = vmul.f32 %v1364, %v1553
          %v1603 = vmul.f32 %v1369, %v1558
          %v1604 = vmul.f32 %v1372, %v1563
          %v1605 = vmul.f32 %v1377, %v1568
          %v1606 = vmul.f32 %v1380, %v1573
          %s1607 = sshra.s32 %s501, 4
          %s1608 = sand.u32 %s501, 15
          %s1609 = smul.addr %s1607, 8
          %s1610 = scalar_lea.vmem [#allocation3], %s1609
          %v1611 = vld [vmem:[%s1610] sm:$0xff]
          %v1612 = vld [vmem:[%s1610 + $0x8] sm:$0xff]
          %v1613 = vld [vmem:[%s1610 + $0x10] sm:$0xff]
          %v1614 = vld [vmem:[%s1610 + $0x18] sm:$0xff]
          %v1615 = vld [vmem:[%s1610 + $0x20] sm:$0xff]
          %v1616 = vld [vmem:[%s1610 + $0x28] sm:$0xff]
          %v1617 = vld [vmem:[%s1610 + $0x30] sm:$0xff]
          %v1618 = vld [vmem:[%s1610 + $0x38] sm:$0xff]
          %v1619 = vld [vmem:[%s1610 + $0x40] sm:$0xff]
          %v1620 = vld [vmem:[%s1610 + $0x48] sm:$0xff]
          %v1621 = vld [vmem:[%s1610 + $0x50] sm:$0xff]
          %v1622 = vld [vmem:[%s1610 + $0x58] sm:$0xff]
          %v1623 = vld [vmem:[%s1610 + $0x60] sm:$0xff]
          %v1624 = vld [vmem:[%s1610 + $0x68] sm:$0xff]
          %v1625 = vld [vmem:[%s1610 + $0x70] sm:$0xff]
          %v1626 = vld [vmem:[%s1610 + $0x78] sm:$0xff]
          %v1627 = vunpack.c.l.bf16 %v1611
          %v1628 = vunpack.c.h.bf16 %v1611
          %v1629 = vunpack.c.l.bf16 %v1612
          %v1630 = vunpack.c.h.bf16 %v1612
          %v1631 = vunpack.c.l.bf16 %v1613
          %v1632 = vunpack.c.h.bf16 %v1613
          %v1633 = vunpack.c.l.bf16 %v1614
          %v1634 = vunpack.c.h.bf16 %v1614
          %v1635 = vunpack.c.l.bf16 %v1615
          %v1636 = vunpack.c.h.bf16 %v1615
          %v1637 = vunpack.c.l.bf16 %v1616
          %v1638 = vunpack.c.h.bf16 %v1616
          %v1639 = vunpack.c.l.bf16 %v1617
          %v1640 = vunpack.c.h.bf16 %v1617
          %v1641 = vunpack.c.l.bf16 %v1618
          %v1642 = vunpack.c.h.bf16 %v1618
          %v1643 = vunpack.c.l.bf16 %v1619
          %v1644 = vunpack.c.h.bf16 %v1619
          %v1645 = vunpack.c.l.bf16 %v1620
          %v1646 = vunpack.c.h.bf16 %v1620
          %v1647 = vunpack.c.l.bf16 %v1621
          %v1648 = vunpack.c.h.bf16 %v1621
          %v1649 = vunpack.c.l.bf16 %v1622
          %v1650 = vunpack.c.h.bf16 %v1622
          %v1651 = vunpack.c.l.bf16 %v1623
          %v1652 = vunpack.c.h.bf16 %v1623
          %v1653 = vunpack.c.l.bf16 %v1624
          %v1654 = vunpack.c.h.bf16 %v1624
          %v1655 = vunpack.c.l.bf16 %v1625
          %v1656 = vunpack.c.h.bf16 %v1625
          %v1657 = vunpack.c.l.bf16 %v1626
          %v1658 = vunpack.c.h.bf16 %v1626
          %v1659 = vadd.f32 %v1575, %v1627
          %v1660 = vadd.f32 %v1576, %v1628
          %v1661 = vadd.f32 %v1577, %v1629
          %v1662 = vadd.f32 %v1578, %v1630
          %v1663 = vadd.f32 %v1579, %v1631
          %v1664 = vadd.f32 %v1580, %v1632
          %v1665 = vadd.f32 %v1581, %v1633
          %v1666 = vadd.f32 %v1582, %v1634
          %v1667 = vadd.f32 %v1583, %v1635
          %v1668 = vadd.f32 %v1584, %v1636
          %v1669 = vadd.f32 %v1585, %v1637
          %v1670 = vadd.f32 %v1586, %v1638
          %v1671 = vadd.f32 %v1587, %v1639
          %v1672 = vadd.f32 %v1588, %v1640
          %v1673 = vadd.f32 %v1589, %v1641
          %v1674 = vadd.f32 %v1590, %v1642
          %v1675 = vadd.f32 %v1591, %v1643
          %v1676 = vadd.f32 %v1592, %v1644
          %v1677 = vadd.f32 %v1593, %v1645
          %v1678 = vadd.f32 %v1594, %v1646
          %v1679 = vadd.f32 %v1595, %v1647
          %v1680 = vadd.f32 %v1596, %v1648
          %v1681 = vadd.f32 %v1597, %v1649
          %v1682 = vadd.f32 %v1598, %v1650
          %v1683 = vadd.f32 %v1599, %v1651
          %v1684 = vadd.f32 %v1600, %v1652
          %v1685 = vadd.f32 %v1601, %v1653
          %v1686 = vadd.f32 %v1602, %v1654
          %v1687 = vadd.f32 %v1603, %v1655
          %v1688 = vadd.f32 %v1604, %v1656
          %v1689 = vadd.f32 %v1605, %v1657
          %v1690 = vadd.f32 %v1606, %v1658
          %v1691 = vld [vmem:[%s5] sm:$0x1]
          %v1693 = vlaneseq
          %v1694 = vshrl.u32 %v1693, 7
          %v1695 = vsub.s32 0, %v1694
          %v1696 = vrot.slane %v1691, %v1695
          %v1698 = vadd.f32 %v1659, %v1696
          %v1699 = vadd.f32 %v1660, %v1696
          %v1700 = vadd.f32 %v1661, %v1696
          %v1701 = vadd.f32 %v1662, %v1696
          %v1702 = vadd.f32 %v1663, %v1696
          %v1703 = vadd.f32 %v1664, %v1696
          %v1704 = vadd.f32 %v1665, %v1696
          %v1705 = vadd.f32 %v1666, %v1696
          %v1706 = vadd.f32 %v1667, %v1696
          %v1707 = vadd.f32 %v1668, %v1696
          %v1708 = vadd.f32 %v1669, %v1696
          %v1709 = vadd.f32 %v1670, %v1696
          %v1710 = vadd.f32 %v1671, %v1696
          %v1711 = vadd.f32 %v1672, %v1696
          %v1712 = vadd.f32 %v1673, %v1696
          %v1713 = vadd.f32 %v1674, %v1696
          %v1714 = vadd.f32 %v1675, %v1696
          %v1715 = vadd.f32 %v1676, %v1696
          %v1716 = vadd.f32 %v1677, %v1696
          %v1717 = vadd.f32 %v1678, %v1696
          %v1718 = vadd.f32 %v1679, %v1696
          %v1719 = vadd.f32 %v1680, %v1696
          %v1720 = vadd.f32 %v1681, %v1696
          %v1721 = vadd.f32 %v1682, %v1696
          %v1722 = vadd.f32 %v1683, %v1696
          %v1723 = vadd.f32 %v1684, %v1696
          %v1724 = vadd.f32 %v1685, %v1696
          %v1725 = vadd.f32 %v1686, %v1696
          %v1726 = vadd.f32 %v1687, %v1696
          %v1727 = vadd.f32 %v1688, %v1696
          %v1728 = vadd.f32 %v1689, %v1696
          %v1729 = vadd.f32 %v1690, %v1696
          %v1730 = vmax.f32 %v1698, 0.0
          %v1731 = vmax.f32 %v1699, 0.0
          %v1732 = vmax.f32 %v1700, 0.0
          %v1733 = vmax.f32 %v1701, 0.0
          %v1734 = vmax.f32 %v1702, 0.0
          %v1735 = vmax.f32 %v1703, 0.0
          %v1736 = vmax.f32 %v1704, 0.0
          %v1737 = vmax.f32 %v1705, 0.0
          %v1738 = vmax.f32 %v1706, 0.0
          %v1739 = vmax.f32 %v1707, 0.0
          %v1740 = vmax.f32 %v1708, 0.0
          %v1741 = vmax.f32 %v1709, 0.0
          %v1742 = vmax.f32 %v1710, 0.0
          %v1743 = vmax.f32 %v1711, 0.0
          %v1744 = vmax.f32 %v1712, 0.0
          %v1745 = vmax.f32 %v1713, 0.0
          %v1746 = vmax.f32 %v1714, 0.0
          %v1747 = vmax.f32 %v1715, 0.0
          %v1748 = vmax.f32 %v1716, 0.0
          %v1749 = vmax.f32 %v1717, 0.0
          %v1750 = vmax.f32 %v1718, 0.0
          %v1751 = vmax.f32 %v1719, 0.0
          %v1752 = vmax.f32 %v1720, 0.0
          %v1753 = vmax.f32 %v1721, 0.0
          %v1754 = vmax.f32 %v1722, 0.0
          %v1755 = vmax.f32 %v1723, 0.0
          %v1756 = vmax.f32 %v1724, 0.0
          %v1757 = vmax.f32 %v1725, 0.0
          %v1758 = vmax.f32 %v1726, 0.0
          %v1759 = vmax.f32 %v1727, 0.0
          %v1760 = vmax.f32 %v1728, 0.0
          %v1761 = vmax.f32 %v1729, 0.0
          %v1762 = vpack.c.bf16 %v1731, %v1730
          %v1763 = vpack.c.bf16 %v1733, %v1732
          %v1764 = vpack.c.bf16 %v1735, %v1734
          %v1765 = vpack.c.bf16 %v1737, %v1736
          %v1766 = vpack.c.bf16 %v1739, %v1738
          %v1767 = vpack.c.bf16 %v1741, %v1740
          %v1768 = vpack.c.bf16 %v1743, %v1742
          %v1769 = vpack.c.bf16 %v1745, %v1744
          %v1770 = vpack.c.bf16 %v1747, %v1746
          %v1771 = vpack.c.bf16 %v1749, %v1748
          %v1772 = vpack.c.bf16 %v1751, %v1750
          %v1773 = vpack.c.bf16 %v1753, %v1752
          %v1774 = vpack.c.bf16 %v1755, %v1754
          %v1775 = vpack.c.bf16 %v1757, %v1756
          %v1776 = vpack.c.bf16 %v1759, %v1758
          %v1777 = vpack.c.bf16 %v1761, %v1760
          %1778 = vst [vmem:[%s1610] sm:$0xff] %v1762
          %1779 = vst [vmem:[%s1610 + $0x8] sm:$0xff] %v1763
          %1780 = vst [vmem:[%s1610 + $0x10] sm:$0xff] %v1764
          %1781 = vst [vmem:[%s1610 + $0x18] sm:$0xff] %v1765
          %1782 = vst [vmem:[%s1610 + $0x20] sm:$0xff] %v1766
          %1783 = vst [vmem:[%s1610 + $0x28] sm:$0xff] %v1767
          %1784 = vst [vmem:[%s1610 + $0x30] sm:$0xff] %v1768
          %1785 = vst [vmem:[%s1610 + $0x38] sm:$0xff] %v1769
          %1786 = vst [vmem:[%s1610 + $0x40] sm:$0xff] %v1770
          %1787 = vst [vmem:[%s1610 + $0x48] sm:$0xff] %v1771
          %1788 = vst [vmem:[%s1610 + $0x50] sm:$0xff] %v1772
          %1789 = vst [vmem:[%s1610 + $0x58] sm:$0xff] %v1773
          %1790 = vst [vmem:[%s1610 + $0x60] sm:$0xff] %v1774
          %1791 = vst [vmem:[%s1610 + $0x68] sm:$0xff] %v1775
          %1792 = vst [vmem:[%s1610 + $0x70] sm:$0xff] %v1776
          %1793 = vst [vmem:[%s1610 + $0x78] sm:$0xff] %v1777
          %v1794 = vld [vmem:[#allocation10] sm:$0xf]
          %v1795 = vld [vmem:[#allocation10 + $0x4] sm:$0xf]
          %v1796 = vld [vmem:[#allocation10 + $0x8] sm:$0xf]
          %v1797 = vld [vmem:[#allocation10 + $0xc] sm:$0xf]
          %v1798 = vld [vmem:[#allocation10 + $0x10] sm:$0xf]
          %v1799 = vld [vmem:[#allocation10 + $0x14] sm:$0xf]
          %v1800 = vld [vmem:[#allocation10 + $0x18] sm:$0xf]
          %v1801 = vld [vmem:[#allocation10 + $0x1c] sm:$0xf]
          %v1802 = vld [vmem:[#allocation10 + $0x20] sm:$0xf]
          %v1803 = vld [vmem:[#allocation10 + $0x24] sm:$0xf]
          %v1804 = vld [vmem:[#allocation10 + $0x28] sm:$0xf]
          %v1805 = vld [vmem:[#allocation10 + $0x2c] sm:$0xf]
          %v1806 = vld [vmem:[#allocation10 + $0x30] sm:$0xf]
          %v1807 = vld [vmem:[#allocation10 + $0x34] sm:$0xf]
          %v1808 = vld [vmem:[#allocation10 + $0x38] sm:$0xf]
          %v1809 = vld [vmem:[#allocation10 + $0x3c] sm:$0xf]
          %v1826 = vunpack.c.l.b16 %v1794
          %v1827 = vunpack.c.l.b16 %v1795
          %v1828 = vunpack.c.l.b16 %v1796
          %v1829 = vunpack.c.l.b16 %v1797
          %v1830 = vunpack.c.l.b16 %v1798
          %v1831 = vunpack.c.l.b16 %v1799
          %v1832 = vunpack.c.l.b16 %v1800
          %v1833 = vunpack.c.l.b16 %v1801
          %v1834 = vunpack.c.l.b16 %v1802
          %v1835 = vunpack.c.l.b16 %v1803
          %v1836 = vunpack.c.l.b16 %v1804
          %v1837 = vunpack.c.l.b16 %v1805
          %v1838 = vunpack.c.l.b16 %v1806
          %v1839 = vunpack.c.l.b16 %v1807
          %v1840 = vunpack.c.l.b16 %v1808
          %v1841 = vunpack.c.l.b16 %v1809
          %v1842 = vpack.c.b16 %v1827, %v1826
          %v1843 = vpack.c.b16 %v1829, %v1828
          %v1844 = vpack.c.b16 %v1831, %v1830
          %v1845 = vpack.c.b16 %v1833, %v1832
          %v1846 = vpack.c.b16 %v1835, %v1834
          %v1847 = vpack.c.b16 %v1837, %v1836
          %v1848 = vpack.c.b16 %v1839, %v1838
          %v1849 = vpack.c.b16 %v1841, %v1840
          %1858 = vmatprep.subr.bf16.mxu0 0
          %1859 = vmatpush1.bf16.msra.mxu0 %v1842
          %1860 = vmatprep.subr.bf16.mxu0 0
          %1861 = vmatpush1.bf16.msra.mxu0 %v1843
          %1862 = vmatprep.subr.bf16.mxu0 0
          %1863 = vmatpush1.bf16.msra.mxu0 %v1844
          %1864 = vmatprep.subr.bf16.mxu0 0
          %1865 = vmatpush1.bf16.msra.mxu0 %v1845
          %1866 = vmatprep.subr.bf16.mxu0 0
          %1867 = vmatpush1.bf16.msra.mxu0 %v1846
          %1868 = vmatprep.subr.bf16.mxu0 0
          %1869 = vmatpush1.bf16.msra.mxu0 %v1847
          %1870 = vmatprep.subr.bf16.mxu0 0
          %1871 = vmatpush1.bf16.msra.mxu0 %v1848
          %1872 = vmatprep.subr.bf16.mxu0 0
          %1873 = vmatpush1.bf16.msra.mxu0 %v1849
          %1874 = vmatprep.subr.bf16.mxu0 0
          %1875 = vmatpush1.bf16.msra.mxu0 0
          %1876 = vmatprep.subr.bf16.mxu0 0
          %1877 = vmatpush1.bf16.msra.mxu0 0
          %1878 = vmatprep.subr.bf16.mxu0 0
          %1879 = vmatpush1.bf16.msra.mxu0 0
          %1880 = vmatprep.subr.bf16.mxu0 0
          %1881 = vmatpush1.bf16.msra.mxu0 0
          %1882 = vmatprep.subr.bf16.mxu0 0
          %1883 = vmatpush1.bf16.msra.mxu0 0
          %1884 = vmatprep.subr.bf16.mxu0 0
          %1885 = vmatpush1.bf16.msra.mxu0 0
          %1886 = vmatprep.subr.bf16.mxu0 0
          %1887 = vmatpush1.bf16.msra.mxu0 0
          %1888 = vmatprep.subr.bf16.mxu0 0
          %1889 = vmatpush1.bf16.msra.mxu0 0
          %1890 = vmatprep.mubr.bf16.mxu0 0
          %1891 = vmatmul.mubr.bf16.gmra.mrb[0].mxu0 %v1762
          %v1892 = vpop.f32.mrb[0].mxu0
          %v1893 = vadd.f32 0.0, %v1892
          %v1894 = vpop.f32.mrb[0].mxu0
          %v1895 = vpop.f32.mrb[0].mxu0
          %v1896 = vadd.f32 0.0, %v1895
          %v1897 = vpop.f32.mrb[0].mxu0
          %1898 = vmatprep.mubr.bf16.mxu0 0
          %1899 = vmatmul.mubr.bf16.gmra.mrb[0].mxu0 %v1763
          %v1900 = vpop.f32.mrb[0].mxu0
          %v1901 = vadd.f32 0.0, %v1900
          %v1902 = vpop.f32.mrb[0].mxu0
          %v1903 = vpop.f32.mrb[0].mxu0
          %v1904 = vadd.f32 0.0, %v1903
          %v1905 = vpop.f32.mrb[0].mxu0
          %1906 = vmatprep.mubr.bf16.mxu0 0
          %1907 = vmatmul.mubr.bf16.gmra.mrb[0].mxu0 %v1764
          %v1908 = vpop.f32.mrb[0].mxu0
          %v1909 = vadd.f32 0.0, %v1908
          %v1910 = vpop.f32.mrb[0].mxu0
          %v1911 = vpop.f32.mrb[0].mxu0
          %v1912 = vadd.f32 0.0, %v1911
          %v1913 = vpop.f32.mrb[0].mxu0
          %1914 = vmatprep.mubr.bf16.mxu0 0
          %1915 = vmatmul.mubr.bf16.gmra.mrb[0].mxu0 %v1765
          %v1916 = vpop.f32.mrb[0].mxu0
          %v1917 = vadd.f32 0.0, %v1916
          %v1918 = vpop.f32.mrb[0].mxu0
          %v1919 = vpop.f32.mrb[0].mxu0
          %v1920 = vadd.f32 0.0, %v1919
          %v1921 = vpop.f32.mrb[0].mxu0
          %1922 = vmatprep.mubr.bf16.mxu0 0
          %1923 = vmatmul.mubr.bf16.gmra.mrb[0].mxu0 %v1766
          %v1924 = vpop.f32.mrb[0].mxu0
          %v1925 = vadd.f32 0.0, %v1924
          %v1926 = vpop.f32.mrb[0].mxu0
          %v1927 = vpop.f32.mrb[0].mxu0
          %v1928 = vadd.f32 0.0, %v1927
          %v1929 = vpop.f32.mrb[0].mxu0
          %1930 = vmatprep.mubr.bf16.mxu0 0
          %1931 = vmatmul.mubr.bf16.gmra.mrb[0].mxu0 %v1767
          %v1932 = vpop.f32.mrb[0].mxu0
          %v1933 = vadd.f32 0.0, %v1932
          %v1934 = vpop.f32.mrb[0].mxu0
          %v1935 = vpop.f32.mrb[0].mxu0
          %v1936 = vadd.f32 0.0, %v1935
          %v1937 = vpop.f32.mrb[0].mxu0
          %1938 = vmatprep.mubr.bf16.mxu0 0
          %1939 = vmatmul.mubr.bf16.gmra.mrb[0].mxu0 %v1768
          %v1940 = vpop.f32.mrb[0].mxu0
          %v1941 = vadd.f32 0.0, %v1940
          %v1942 = vpop.f32.mrb[0].mxu0
          %v1943 = vpop.f32.mrb[0].mxu0
          %v1944 = vadd.f32 0.0, %v1943
          %v1945 = vpop.f32.mrb[0].mxu0
          %1946 = vmatprep.mubr.bf16.mxu0 0
          %1947 = vmatmul.mubr.bf16.gmra.mrb[0].mxu0 %v1769
          %v1948 = vpop.f32.mrb[0].mxu0
          %v1949 = vadd.f32 0.0, %v1948
          %v1950 = vpop.f32.mrb[0].mxu0
          %v1951 = vpop.f32.mrb[0].mxu0
          %v1952 = vadd.f32 0.0, %v1951
          %v1953 = vpop.f32.mrb[0].mxu0
          %1954 = vmatprep.mubr.bf16.mxu0 0
          %1955 = vmatmul.mubr.bf16.gmra.mrb[0].mxu0 %v1770
          %v1956 = vpop.f32.mrb[0].mxu0
          %v1957 = vadd.f32 0.0, %v1956
          %v1958 = vpop.f32.mrb[0].mxu0
          %v1959 = vpop.f32.mrb[0].mxu0
          %v1960 = vadd.f32 0.0, %v1959
          %v1961 = vpop.f32.mrb[0].mxu0
          %1962 = vmatprep.mubr.bf16.mxu0 0
          %1963 = vmatmul.mubr.bf16.gmra.mrb[0].mxu0 %v1771
          %v1964 = vpop.f32.mrb[0].mxu0
          %v1965 = vadd.f32 0.0, %v1964
          %v1966 = vpop.f32.mrb[0].mxu0
          %v1967 = vpop.f32.mrb[0].mxu0
          %v1968 = vadd.f32 0.0, %v1967
          %v1969 = vpop.f32.mrb[0].mxu0
          %1970 = vmatprep.mubr.bf16.mxu0 0
          %1971 = vmatmul.mubr.bf16.gmra.mrb[0].mxu0 %v1772
          %v1972 = vpop.f32.mrb[0].mxu0
          %v1973 = vadd.f32 0.0, %v1972
          %v1974 = vpop.f32.mrb[0].mxu0
          %v1975 = vpop.f32.mrb[0].mxu0
          %v1976 = vadd.f32 0.0, %v1975
          %v1977 = vpop.f32.mrb[0].mxu0
          %1978 = vmatprep.mubr.bf16.mxu0 0
          %1979 = vmatmul.mubr.bf16.gmra.mrb[0].mxu0 %v1773
          %v1980 = vpop.f32.mrb[0].mxu0
          %v1981 = vadd.f32 0.0, %v1980
          %v1982 = vpop.f32.mrb[0].mxu0
          %v1983 = vpop.f32.mrb[0].mxu0
          %v1984 = vadd.f32 0.0, %v1983
          %v1985 = vpop.f32.mrb[0].mxu0
          %1986 = vmatprep.mubr.bf16.mxu0 0
          %1987 = vmatmul.mubr.bf16.gmra.mrb[0].mxu0 %v1774
          %v1988 = vpop.f32.mrb[0].mxu0
          %v1989 = vadd.f32 0.0, %v1988
          %v1990 = vpop.f32.mrb[0].mxu0
          %v1991 = vpop.f32.mrb[0].mxu0
          %v1992 = vadd.f32 0.0, %v1991
          %v1993 = vpop.f32.mrb[0].mxu0
          %1994 = vmatprep.mubr.bf16.mxu0 0
          %1995 = vmatmul.mubr.bf16.gmra.mrb[0].mxu0 %v1775
          %v1996 = vpop.f32.mrb[0].mxu0
          %v1997 = vadd.f32 0.0, %v1996
          %v1998 = vpop.f32.mrb[0].mxu0
          %v1999 = vpop.f32.mrb[0].mxu0
          %v2000 = vadd.f32 0.0, %v1999
          %v2001 = vpop.f32.mrb[0].mxu0
          %2002 = vmatprep.mubr.bf16.mxu0 0
          %2003 = vmatmul.mubr.bf16.gmra.mrb[0].mxu0 %v1776
          %v2004 = vpop.f32.mrb[0].mxu0
          %v2005 = vadd.f32 0.0, %v2004
          %v2006 = vpop.f32.mrb[0].mxu0
          %v2007 = vpop.f32.mrb[0].mxu0
          %v2008 = vadd.f32 0.0, %v2007
          %v2009 = vpop.f32.mrb[0].mxu0
          %2010 = vmatprep.mubr.bf16.mxu0 0
          %2011 = vmatmul.mubr.bf16.gmra.mrb[0].mxu0 %v1777
          %v2012 = vpop.f32.mrb[0].mxu0
          %v2013 = vadd.f32 0.0, %v2012
          %v2014 = vpop.f32.mrb[0].mxu0
          %v2015 = vpop.f32.mrb[0].mxu0
          %v2016 = vadd.f32 0.0, %v2015
          %v2017 = vpop.f32.mrb[0].mxu0
          %2018 = vdwg.mxu0
          %v2019 = vpack.c.bf16 %v1896, %v1893
          %v2020 = vpack.c.bf16 %v1904, %v1901
          %v2021 = vpack.c.bf16 %v1912, %v1909
          %v2022 = vpack.c.bf16 %v1920, %v1917
          %v2023 = vpack.c.bf16 %v1928, %v1925
          %v2024 = vpack.c.bf16 %v1936, %v1933
          %v2025 = vpack.c.bf16 %v1944, %v1941
          %v2026 = vpack.c.bf16 %v1952, %v1949
          %v2027 = vpack.c.bf16 %v1960, %v1957
          %v2028 = vpack.c.bf16 %v1968, %v1965
          %v2029 = vpack.c.bf16 %v1976, %v1973
          %v2030 = vpack.c.bf16 %v1984, %v1981
          %v2031 = vpack.c.bf16 %v1992, %v1989
          %v2032 = vpack.c.bf16 %v2000, %v1997
          %v2033 = vpack.c.bf16 %v2008, %v2005
          %v2034 = vpack.c.bf16 %v2016, %v2013
          %s2035 = smul.addr %s1607, 8
          %s2036 = scalar_lea.vmem [#allocation4], %s2035
          %2037 = vst [vmem:[%s2036] sm:$0xff] %v2019
          %2038 = vst [vmem:[%s2036 + $0x8] sm:$0xff] %v2020
          %2039 = vst [vmem:[%s2036 + $0x10] sm:$0xff] %v2021
          %2040 = vst [vmem:[%s2036 + $0x18] sm:$0xff] %v2022
          %2041 = vst [vmem:[%s2036 + $0x20] sm:$0xff] %v2023
          %2042 = vst [vmem:[%s2036 + $0x28] sm:$0xff] %v2024
          %2043 = vst [vmem:[%s2036 + $0x30] sm:$0xff] %v2025
          %2044 = vst [vmem:[%s2036 + $0x38] sm:$0xff] %v2026
          %2045 = vst [vmem:[%s2036 + $0x40] sm:$0xff] %v2027
          %2046 = vst [vmem:[%s2036 + $0x48] sm:$0xff] %v2028
          %2047 = vst [vmem:[%s2036 + $0x50] sm:$0xff] %v2029
          %2048 = vst [vmem:[%s2036 + $0x58] sm:$0xff] %v2030
          %2049 = vst [vmem:[%s2036 + $0x60] sm:$0xff] %v2031
          %2050 = vst [vmem:[%s2036 + $0x68] sm:$0xff] %v2032
          %2051 = vst [vmem:[%s2036 + $0x70] sm:$0xff] %v2033
          %2052 = vst [vmem:[%s2036 + $0x78] sm:$0xff] %v2034
        $region80: #{tpu_custom_call.1} parent=55 // pred_fallthru
          _
        %p2053 = scmp.eq.s32.totalorder %s30, 2
        // Predicated region
        $region81: #{tpu_custom_call.1} parent=55 // pred_check
          %p2054 = pneg %p2053
        $region82: #{tpu_custom_call.1} parent=55 // pred_check_branch
          %2056 = sbr.rel (%p2054) target = $region84
        $region83: #{tpu_custom_call.1} parent=55 // pred_region
          %v2057 = vld [vmem:[%s473] sm:$0xff]
          %v2058 = vld [vmem:[%s473 + $0x8] sm:$0xff]
          %v2059 = vld [vmem:[%s473 + $0x10] sm:$0xff]
          %v2060 = vld [vmem:[%s473 + $0x18] sm:$0xff]
          %v2061 = vld [vmem:[%s473 + $0x20] sm:$0xff]
          %v2062 = vld [vmem:[%s473 + $0x28] sm:$0xff]
          %v2063 = vld [vmem:[%s473 + $0x30] sm:$0xff]
          %v2064 = vld [vmem:[%s473 + $0x38] sm:$0xff]
          %v2065 = vld [vmem:[%s473 + $0x40] sm:$0xff]
          %v2066 = vld [vmem:[%s473 + $0x48] sm:$0xff]
          %v2067 = vld [vmem:[%s473 + $0x50] sm:$0xff]
          %v2068 = vld [vmem:[%s473 + $0x58] sm:$0xff]
          %v2069 = vld [vmem:[%s473 + $0x60] sm:$0xff]
          %v2070 = vld [vmem:[%s473 + $0x68] sm:$0xff]
          %v2071 = vld [vmem:[%s473 + $0x70] sm:$0xff]
          %v2072 = vld [vmem:[%s473 + $0x78] sm:$0xff]
          %v2073 = vunpack.c.l.s8.bf16 %v2057
          %v2074 = vunpack.c.l.s8.bf16 %v2058
          %v2075 = vunpack.c.h.s8.bf16 %v2057
          %v2076 = vunpack.c.h.s8.bf16 %v2058
          %v2077 = vunpack.c.l.s8.bf16 %v2059
          %v2078 = vunpack.c.l.s8.bf16 %v2060
          %v2079 = vunpack.c.h.s8.bf16 %v2059
          %v2080 = vunpack.c.h.s8.bf16 %v2060
          %v2081 = vunpack.c.l.s8.bf16 %v2061
          %v2082 = vunpack.c.l.s8.bf16 %v2062
          %v2083 = vunpack.c.h.s8.bf16 %v2061
          %v2084 = vunpack.c.h.s8.bf16 %v2062
          %v2085 = vunpack.c.l.s8.bf16 %v2063
          %v2086 = vunpack.c.l.s8.bf16 %v2064
          %v2087 = vunpack.c.h.s8.bf16 %v2063
          %v2088 = vunpack.c.h.s8.bf16 %v2064
          %v2089 = vunpack.c.l.s8.bf16 %v2065
          %v2090 = vunpack.c.l.s8.bf16 %v2066
          %v2091 = vunpack.c.h.s8.bf16 %v2065
          %v2092 = vunpack.c.h.s8.bf16 %v2066
          %v2093 = vunpack.c.l.s8.bf16 %v2067
          %v2094 = vunpack.c.l.s8.bf16 %v2068
          %v2095 = vunpack.c.h.s8.bf16 %v2067
          %v2096 = vunpack.c.h.s8.bf16 %v2068
          %v2097 = vunpack.c.l.s8.bf16 %v2069
          %v2098 = vunpack.c.l.s8.bf16 %v2070
          %v2099 = vunpack.c.h.s8.bf16 %v2069
          %v2100 = vunpack.c.h.s8.bf16 %v2070
          %v2101 = vunpack.c.l.s8.bf16 %v2071
          %v2102 = vunpack.c.l.s8.bf16 %v2072
          %v2103 = vunpack.c.h.s8.bf16 %v2071
          %v2104 = vunpack.c.h.s8.bf16 %v2072
          %v2105 = vld [vmem:[#allocation4] sm:$0xff]
          %v2106 = vld [vmem:[#allocation4 + $0x8] sm:$0xff]
          %v2107 = vld [vmem:[#allocation4 + $0x10] sm:$0xff]
          %v2108 = vld [vmem:[#allocation4 + $0x18] sm:$0xff]
          %v2109 = vld [vmem:[#allocation4 + $0x20] sm:$0xff]
          %v2110 = vld [vmem:[#allocation4 + $0x28] sm:$0xff]
          %v2111 = vld [vmem:[#allocation4 + $0x30] sm:$0xff]
          %v2112 = vld [vmem:[#allocation4 + $0x38] sm:$0xff]
          %v2113 = vld [vmem:[#allocation4 + $0x40] sm:$0xff]
          %v2114 = vld [vmem:[#allocation4 + $0x48] sm:$0xff]
          %v2115 = vld [vmem:[#allocation4 + $0x50] sm:$0xff]
          %v2116 = vld [vmem:[#allocation4 + $0x58] sm:$0xff]
          %v2117 = vld [vmem:[#allocation4 + $0x60] sm:$0xff]
          %v2118 = vld [vmem:[#allocation4 + $0x68] sm:$0xff]
          %v2119 = vld [vmem:[#allocation4 + $0x70] sm:$0xff]
          %v2120 = vld [vmem:[#allocation4 + $0x78] sm:$0xff]
          %2121 = vmatprep.subr.bf16.mxu0 0
          %2122 = vmatpush1.bf16.msra.mxu0 %v2105
          %2123 = vmatprep.subr.bf16.mxu0 0
          %2124 = vmatpush1.bf16.msra.mxu0 %v2106
          %2125 = vmatprep.subr.bf16.mxu0 0
          %2126 = vmatpush1.bf16.msra.mxu0 %v2107
          %2127 = vmatprep.subr.bf16.mxu0 0
          %2128 = vmatpush1.bf16.msra.mxu0 %v2108
          %2129 = vmatprep.subr.bf16.mxu0 0
          %2130 = vmatpush1.bf16.msra.mxu0 %v2109
          %2131 = vmatprep.subr.bf16.mxu0 0
          %2132 = vmatpush1.bf16.msra.mxu0 %v2110
          %2133 = vmatprep.subr.bf16.mxu0 0
          %2134 = vmatpush1.bf16.msra.mxu0 %v2111
          %2135 = vmatprep.subr.bf16.mxu0 0
          %2136 = vmatpush1.bf16.msra.mxu0 %v2112
          %2137 = vmatprep.subr.bf16.mxu0 0
          %2138 = vmatpush1.bf16.msra.mxu0 %v2113
          %2139 = vmatprep.subr.bf16.mxu0 0
          %2140 = vmatpush1.bf16.msra.mxu0 %v2114
          %2141 = vmatprep.subr.bf16.mxu0 0
          %2142 = vmatpush1.bf16.msra.mxu0 %v2115
          %2143 = vmatprep.subr.bf16.mxu0 0
          %2144 = vmatpush1.bf16.msra.mxu0 %v2116
          %2145 = vmatprep.subr.bf16.mxu0 0
          %2146 = vmatpush1.bf16.msra.mxu0 %v2117
          %2147 = vmatprep.subr.bf16.mxu0 0
          %2148 = vmatpush1.bf16.msra.mxu0 %v2118
          %2149 = vmatprep.subr.bf16.mxu0 0
          %2150 = vmatpush1.bf16.msra.mxu0 %v2119
          %2151 = vmatprep.subr.bf16.mxu0 0
          %2152 = vmatpush1.bf16.msra.mxu0 %v2120
          %2153 = vmatprep.mubr.bf16.mxu0 %v2074
          %2154 = vmatmul.mubr.bf16.gmra.mrb[0].mxu0 %v2073
          %v2155 = vpop.f32.mrb[0].mxu0
          %v2156 = vadd.f32 0.0, %v2155
          %v2157 = vpop.f32.mrb[0].mxu0
          %v2158 = vpop.f32.mrb[0].mxu0
          %v2159 = vadd.f32 0.0, %v2158
          %v2160 = vpop.f32.mrb[0].mxu0
          %2161 = vmatprep.mubr.bf16.mxu0 %v2076
          %2162 = vmatmul.mubr.bf16.gmra.mrb[0].mxu0 %v2075
          %v2163 = vpop.f32.mrb[0].mxu0
          %v2164 = vadd.f32 0.0, %v2163
          %v2165 = vpop.f32.mrb[0].mxu0
          %v2166 = vpop.f32.mrb[0].mxu0
          %v2167 = vadd.f32 0.0, %v2166
          %v2168 = vpop.f32.mrb[0].mxu0
          %2169 = vmatprep.mubr.bf16.mxu0 %v2078
          %2170 = vmatmul.mubr.bf16.gmra.mrb[0].mxu0 %v2077
          %v2171 = vpop.f32.mrb[0].mxu0
          %v2172 = vadd.f32 0.0, %v2171
          %v2173 = vpop.f32.mrb[0].mxu0
          %v2174 = vpop.f32.mrb[0].mxu0
          %v2175 = vadd.f32 0.0, %v2174
          %v2176 = vpop.f32.mrb[0].mxu0
          %2177 = vmatprep.mubr.bf16.mxu0 %v2080
          %2178 = vmatmul.mubr.bf16.gmra.mrb[0].mxu0 %v2079
          %v2179 = vpop.f32.mrb[0].mxu0
          %v2180 = vadd.f32 0.0, %v2179
          %v2181 = vpop.f32.mrb[0].mxu0
          %v2182 = vpop.f32.mrb[0].mxu0
          %v2183 = vadd.f32 0.0, %v2182
          %v2184 = vpop.f32.mrb[0].mxu0
          %2185 = vmatprep.mubr.bf16.mxu0 %v2082
          %2186 = vmatmul.mubr.bf16.gmra.mrb[0].mxu0 %v2081
          %v2187 = vpop.f32.mrb[0].mxu0
          %v2188 = vadd.f32 0.0, %v2187
          %v2189 = vpop.f32.mrb[0].mxu0
          %v2190 = vpop.f32.mrb[0].mxu0
          %v2191 = vadd.f32 0.0, %v2190
          %v2192 = vpop.f32.mrb[0].mxu0
          %2193 = vmatprep.mubr.bf16.mxu0 %v2084
          %2194 = vmatmul.mubr.bf16.gmra.mrb[0].mxu0 %v2083
          %v2195 = vpop.f32.mrb[0].mxu0
          %v2196 = vadd.f32 0.0, %v2195
          %v2197 = vpop.f32.mrb[0].mxu0
          %v2198 = vpop.f32.mrb[0].mxu0
          %v2199 = vadd.f32 0.0, %v2198
          %v2200 = vpop.f32.mrb[0].mxu0
          %2201 = vmatprep.mubr.bf16.mxu0 %v2086
          %2202 = vmatmul.mubr.bf16.gmra.mrb[0].mxu0 %v2085
          %v2203 = vpop.f32.mrb[0].mxu0
          %v2204 = vadd.f32 0.0, %v2203
          %v2205 = vpop.f32.mrb[0].mxu0
          %v2206 = vpop.f32.mrb[0].mxu0
          %v2207 = vadd.f32 0.0, %v2206
          %v2208 = vpop.f32.mrb[0].mxu0
          %2209 = vmatprep.mubr.bf16.mxu0 %v2088
          %2210 = vmatmul.mubr.bf16.gmra.mrb[0].mxu0 %v2087
          %v2211 = vpop.f32.mrb[0].mxu0
          %v2212 = vadd.f32 0.0, %v2211
          %v2213 = vpop.f32.mrb[0].mxu0
          %v2214 = vpop.f32.mrb[0].mxu0
          %v2215 = vadd.f32 0.0, %v2214
          %v2216 = vpop.f32.mrb[0].mxu0
          %2217 = vmatprep.mubr.bf16.mxu0 %v2090
          %2218 = vmatmul.mubr.bf16.gmra.mrb[0].mxu0 %v2089
          %v2219 = vpop.f32.mrb[0].mxu0
          %v2220 = vadd.f32 0.0, %v2219
          %v2221 = vpop.f32.mrb[0].mxu0
          %v2222 = vpop.f32.mrb[0].mxu0
          %v2223 = vadd.f32 0.0, %v2222
          %v2224 = vpop.f32.mrb[0].mxu0
          %2225 = vmatprep.mubr.bf16.mxu0 %v2092
          %2226 = vmatmul.mubr.bf16.gmra.mrb[0].mxu0 %v2091
          %v2227 = vpop.f32.mrb[0].mxu0
          %v2228 = vadd.f32 0.0, %v2227
          %v2229 = vpop.f32.mrb[0].mxu0
          %v2230 = vpop.f32.mrb[0].mxu0
          %v2231 = vadd.f32 0.0, %v2230
          %v2232 = vpop.f32.mrb[0].mxu0
          %2233 = vmatprep.mubr.bf16.mxu0 %v2094
          %2234 = vmatmul.mubr.bf16.gmra.mrb[0].mxu0 %v2093
          %v2235 = vpop.f32.mrb[0].mxu0
          %v2236 = vadd.f32 0.0, %v2235
          %v2237 = vpop.f32.mrb[0].mxu0
          %v2238 = vpop.f32.mrb[0].mxu0
          %v2239 = vadd.f32 0.0, %v2238
          %v2240 = vpop.f32.mrb[0].mxu0
          %2241 = vmatprep.mubr.bf16.mxu0 %v2096
          %2242 = vmatmul.mubr.bf16.gmra.mrb[0].mxu0 %v2095
          %v2243 = vpop.f32.mrb[0].mxu0
          %v2244 = vadd.f32 0.0, %v2243
          %v2245 = vpop.f32.mrb[0].mxu0
          %v2246 = vpop.f32.mrb[0].mxu0
          %v2247 = vadd.f32 0.0, %v2246
          %v2248 = vpop.f32.mrb[0].mxu0
          %2249 = vmatprep.mubr.bf16.mxu0 %v2098
          %2250 = vmatmul.mubr.bf16.gmra.mrb[0].mxu0 %v2097
          %v2251 = vpop.f32.mrb[0].mxu0
          %v2252 = vadd.f32 0.0, %v2251
          %v2253 = vpop.f32.mrb[0].mxu0
          %v2254 = vpop.f32.mrb[0].mxu0
          %v2255 = vadd.f32 0.0, %v2254
          %v2256 = vpop.f32.mrb[0].mxu0
          %2257 = vmatprep.mubr.bf16.mxu0 %v2100
          %2258 = vmatmul.mubr.bf16.gmra.mrb[0].mxu0 %v2099
          %v2259 = vpop.f32.mrb[0].mxu0
          %v2260 = vadd.f32 0.0, %v2259
          %v2261 = vpop.f32.mrb[0].mxu0
          %v2262 = vpop.f32.mrb[0].mxu0
          %v2263 = vadd.f32 0.0, %v2262
          %v2264 = vpop.f32.mrb[0].mxu0
          %2265 = vmatprep.mubr.bf16.mxu0 %v2102
          %2266 = vmatmul.mubr.bf16.gmra.mrb[0].mxu0 %v2101
          %v2267 = vpop.f32.mrb[0].mxu0
          %v2268 = vadd.f32 0.0, %v2267
          %v2269 = vpop.f32.mrb[0].mxu0
          %v2270 = vpop.f32.mrb[0].mxu0
          %v2271 = vadd.f32 0.0, %v2270
          %v2272 = vpop.f32.mrb[0].mxu0
          %2273 = vmatprep.mubr.bf16.mxu0 %v2104
          %2274 = vmatmul.mubr.bf16.gmra.mrb[0].mxu0 %v2103
          %v2275 = vpop.f32.mrb[0].mxu0
          %v2276 = vadd.f32 0.0, %v2275
          %v2277 = vpop.f32.mrb[0].mxu0
          %v2278 = vpop.f32.mrb[0].mxu0
          %v2279 = vadd.f32 0.0, %v2278
          %v2280 = vpop.f32.mrb[0].mxu0
          %2281 = vdwg.mxu0
          %v2282 = vld [vmem:[%s483] sm:$0xff]
          %v2283 = vld [vmem:[%s483 + $0x8] sm:$0xff]
          %v2284 = vld [vmem:[%s483 + $0x10] sm:$0xff]
          %v2285 = vld [vmem:[%s483 + $0x18] sm:$0xff]
          %v2286 = vld [vmem:[%s483 + $0x20] sm:$0xff]
          %v2287 = vld [vmem:[%s483 + $0x28] sm:$0xff]
          %v2288 = vld [vmem:[%s483 + $0x30] sm:$0xff]
          %v2289 = vld [vmem:[%s483 + $0x38] sm:$0xff]
          %v2290 = vld [vmem:[%s483 + $0x40] sm:$0xff]
          %v2291 = vld [vmem:[%s483 + $0x48] sm:$0xff]
          %v2292 = vld [vmem:[%s483 + $0x50] sm:$0xff]
          %v2293 = vld [vmem:[%s483 + $0x58] sm:$0xff]
          %v2294 = vld [vmem:[%s483 + $0x60] sm:$0xff]
          %v2295 = vld [vmem:[%s483 + $0x68] sm:$0xff]
          %v2296 = vld [vmem:[%s483 + $0x70] sm:$0xff]
          %v2297 = vld [vmem:[%s483 + $0x78] sm:$0xff]
          %v2298 = vld [vmem:[%s483 + $0x80] sm:$0xff]
          %v2299 = vld [vmem:[%s483 + $0x88] sm:$0xff]
          %v2300 = vld [vmem:[%s483 + $0x90] sm:$0xff]
          %v2301 = vld [vmem:[%s483 + $0x98] sm:$0xff]
          %v2302 = vld [vmem:[%s483 + $0xa0] sm:$0xff]
          %v2303 = vld [vmem:[%s483 + $0xa8] sm:$0xff]
          %v2304 = vld [vmem:[%s483 + $0xb0] sm:$0xff]
          %v2305 = vld [vmem:[%s483 + $0xb8] sm:$0xff]
          %v2306 = vld [vmem:[%s483 + $0xc0] sm:$0xff]
          %v2307 = vld [vmem:[%s483 + $0xc8] sm:$0xff]
          %v2308 = vld [vmem:[%s483 + $0xd0] sm:$0xff]
          %v2309 = vld [vmem:[%s483 + $0xd8] sm:$0xff]
          %v2310 = vld [vmem:[%s483 + $0xe0] sm:$0xff]
          %v2311 = vld [vmem:[%s483 + $0xe8] sm:$0xff]
          %v2312 = vld [vmem:[%s483 + $0xf0] sm:$0xff]
          %v2313 = vld [vmem:[%s483 + $0xf8] sm:$0xff]
          %2315 = vset.pattern.permute.xlu0 0
          %2316 = vperm.xlu0 %2315, %v2282
          %v2317 = vpop.permute.xlu0 %2316
          %2320 = vset.pattern.permute.xlu0 0
          %2321 = vperm.xlu0 %2320, %v2283
          %v2322 = vpop.permute.xlu0 %2321
          %2325 = vset.pattern.permute.xlu0 0
          %2326 = vperm.xlu0 %2325, %v2284
          %v2327 = vpop.permute.xlu0 %2326
          %2330 = vset.pattern.permute.xlu0 0
          %2331 = vperm.xlu0 %2330, %v2285
          %v2332 = vpop.permute.xlu0 %2331
          %2335 = vset.pattern.permute.xlu0 0
          %2336 = vperm.xlu0 %2335, %v2286
          %v2337 = vpop.permute.xlu0 %2336
          %2340 = vset.pattern.permute.xlu0 0
          %2341 = vperm.xlu0 %2340, %v2287
          %v2342 = vpop.permute.xlu0 %2341
          %2345 = vset.pattern.permute.xlu0 0
          %2346 = vperm.xlu0 %2345, %v2288
          %v2347 = vpop.permute.xlu0 %2346
          %2350 = vset.pattern.permute.xlu0 0
          %2351 = vperm.xlu0 %2350, %v2289
          %v2352 = vpop.permute.xlu0 %2351
          %2355 = vset.pattern.permute.xlu0 0
          %2356 = vperm.xlu0 %2355, %v2290
          %v2357 = vpop.permute.xlu0 %2356
          %2360 = vset.pattern.permute.xlu0 0
          %2361 = vperm.xlu0 %2360, %v2291
          %v2362 = vpop.permute.xlu0 %2361
          %2365 = vset.pattern.permute.xlu0 0
          %2366 = vperm.xlu0 %2365, %v2292
          %v2367 = vpop.permute.xlu0 %2366
          %2370 = vset.pattern.permute.xlu0 0
          %2371 = vperm.xlu0 %2370, %v2293
          %v2372 = vpop.permute.xlu0 %2371
          %2375 = vset.pattern.permute.xlu0 0
          %2376 = vperm.xlu0 %2375, %v2294
          %v2377 = vpop.permute.xlu0 %2376
          %2380 = vset.pattern.permute.xlu0 0
          %2381 = vperm.xlu0 %2380, %v2295
          %v2382 = vpop.permute.xlu0 %2381
          %2385 = vset.pattern.permute.xlu0 0
          %2386 = vperm.xlu0 %2385, %v2296
          %v2387 = vpop.permute.xlu0 %2386
          %2390 = vset.pattern.permute.xlu0 0
          %2391 = vperm.xlu0 %2390, %v2297
          %v2392 = vpop.permute.xlu0 %2391
          %2395 = vset.pattern.permute.xlu0 0
          %2396 = vperm.xlu0 %2395, %v2298
          %v2397 = vpop.permute.xlu0 %2396
          %2400 = vset.pattern.permute.xlu0 0
          %2401 = vperm.xlu0 %2400, %v2299
          %v2402 = vpop.permute.xlu0 %2401
          %2405 = vset.pattern.permute.xlu0 0
          %2406 = vperm.xlu0 %2405, %v2300
          %v2407 = vpop.permute.xlu0 %2406
          %2410 = vset.pattern.permute.xlu0 0
          %2411 = vperm.xlu0 %2410, %v2301
          %v2412 = vpop.permute.xlu0 %2411
          %2415 = vset.pattern.permute.xlu0 0
          %2416 = vperm.xlu0 %2415, %v2302
          %v2417 = vpop.permute.xlu0 %2416
          %2420 = vset.pattern.permute.xlu0 0
          %2421 = vperm.xlu0 %2420, %v2303
          %v2422 = vpop.permute.xlu0 %2421
          %2425 = vset.pattern.permute.xlu0 0
          %2426 = vperm.xlu0 %2425, %v2304
          %v2427 = vpop.permute.xlu0 %2426
          %2430 = vset.pattern.permute.xlu0 0
          %2431 = vperm.xlu0 %2430, %v2305
          %v2432 = vpop.permute.xlu0 %2431
          %2435 = vset.pattern.permute.xlu0 0
          %2436 = vperm.xlu0 %2435, %v2306
          %v2437 = vpop.permute.xlu0 %2436
          %2440 = vset.pattern.permute.xlu0 0
          %2441 = vperm.xlu0 %2440, %v2307
          %v2442 = vpop.permute.xlu0 %2441
          %2445 = vset.pattern.permute.xlu0 0
          %2446 = vperm.xlu0 %2445, %v2308
          %v2447 = vpop.permute.xlu0 %2446
          %2450 = vset.pattern.permute.xlu0 0
          %2451 = vperm.xlu0 %2450, %v2309
          %v2452 = vpop.permute.xlu0 %2451
          %2455 = vset.pattern.permute.xlu0 0
          %2456 = vperm.xlu0 %2455, %v2310
          %v2457 = vpop.permute.xlu0 %2456
          %2460 = vset.pattern.permute.xlu0 0
          %2461 = vperm.xlu0 %2460, %v2311
          %v2462 = vpop.permute.xlu0 %2461
          %2465 = vset.pattern.permute.xlu0 0
          %2466 = vperm.xlu0 %2465, %v2312
          %v2467 = vpop.permute.xlu0 %2466
          %2470 = vset.pattern.permute.xlu0 0
          %2471 = vperm.xlu0 %2470, %v2313
          %v2472 = vpop.permute.xlu0 %2471
          %v2474 = vmul.f32 %v2156, %v2317
          %v2475 = vmul.f32 %v2159, %v2322
          %v2476 = vmul.f32 %v2164, %v2327
          %v2477 = vmul.f32 %v2167, %v2332
          %v2478 = vmul.f32 %v2172, %v2337
          %v2479 = vmul.f32 %v2175, %v2342
          %v2480 = vmul.f32 %v2180, %v2347
          %v2481 = vmul.f32 %v2183, %v2352
          %v2482 = vmul.f32 %v2188, %v2357
          %v2483 = vmul.f32 %v2191, %v2362
          %v2484 = vmul.f32 %v2196, %v2367
          %v2485 = vmul.f32 %v2199, %v2372
          %v2486 = vmul.f32 %v2204, %v2377
          %v2487 = vmul.f32 %v2207, %v2382
          %v2488 = vmul.f32 %v2212, %v2387
          %v2489 = vmul.f32 %v2215, %v2392
          %v2490 = vmul.f32 %v2220, %v2397
          %v2491 = vmul.f32 %v2223, %v2402
          %v2492 = vmul.f32 %v2228, %v2407
          %v2493 = vmul.f32 %v2231, %v2412
          %v2494 = vmul.f32 %v2236, %v2417
          %v2495 = vmul.f32 %v2239, %v2422
          %v2496 = vmul.f32 %v2244, %v2427
          %v2497 = vmul.f32 %v2247, %v2432
          %v2498 = vmul.f32 %v2252, %v2437
          %v2499 = vmul.f32 %v2255, %v2442
          %v2500 = vmul.f32 %v2260, %v2447
          %v2501 = vmul.f32 %v2263, %v2452
          %v2502 = vmul.f32 %v2268, %v2457
          %v2503 = vmul.f32 %v2271, %v2462
          %v2504 = vmul.f32 %v2276, %v2467
          %v2505 = vmul.f32 %v2279, %v2472
          %s2506 = sshra.s32 %s501, 4
          %s2507 = sand.u32 %s501, 15
          %s2508 = smul.addr %s2506, 8
          %s2509 = scalar_lea.vmem [#allocation3], %s2508
          %v2510 = vld [vmem:[%s2509] sm:$0xff]
          %v2511 = vld [vmem:[%s2509 + $0x8] sm:$0xff]
          %v2512 = vld [vmem:[%s2509 + $0x10] sm:$0xff]
          %v2513 = vld [vmem:[%s2509 + $0x18] sm:$0xff]
          %v2514 = vld [vmem:[%s2509 + $0x20] sm:$0xff]
          %v2515 = vld [vmem:[%s2509 + $0x28] sm:$0xff]
          %v2516 = vld [vmem:[%s2509 + $0x30] sm:$0xff]
          %v2517 = vld [vmem:[%s2509 + $0x38] sm:$0xff]
          %v2518 = vld [vmem:[%s2509 + $0x40] sm:$0xff]
          %v2519 = vld [vmem:[%s2509 + $0x48] sm:$0xff]
          %v2520 = vld [vmem:[%s2509 + $0x50] sm:$0xff]
          %v2521 = vld [vmem:[%s2509 + $0x58] sm:$0xff]
          %v2522 = vld [vmem:[%s2509 + $0x60] sm:$0xff]
          %v2523 = vld [vmem:[%s2509 + $0x68] sm:$0xff]
          %v2524 = vld [vmem:[%s2509 + $0x70] sm:$0xff]
          %v2525 = vld [vmem:[%s2509 + $0x78] sm:$0xff]
          %v2526 = vld [vmem:[#allocation11] sm:$0xf]
          %v2527 = vld [vmem:[#allocation11 + $0x4] sm:$0xf]
          %v2528 = vld [vmem:[#allocation11 + $0x8] sm:$0xf]
          %v2529 = vld [vmem:[#allocation11 + $0xc] sm:$0xf]
          %v2530 = vld [vmem:[#allocation11 + $0x10] sm:$0xf]
          %v2531 = vld [vmem:[#allocation11 + $0x14] sm:$0xf]
          %v2532 = vld [vmem:[#allocation11 + $0x18] sm:$0xf]
          %v2533 = vld [vmem:[#allocation11 + $0x1c] sm:$0xf]
          %v2534 = vld [vmem:[#allocation11 + $0x20] sm:$0xf]
          %v2535 = vld [vmem:[#allocation11 + $0x24] sm:$0xf]
          %v2536 = vld [vmem:[#allocation11 + $0x28] sm:$0xf]
          %v2537 = vld [vmem:[#allocation11 + $0x2c] sm:$0xf]
          %v2538 = vld [vmem:[#allocation11 + $0x30] sm:$0xf]
          %v2539 = vld [vmem:[#allocation11 + $0x34] sm:$0xf]
          %v2540 = vld [vmem:[#allocation11 + $0x38] sm:$0xf]
          %v2541 = vld [vmem:[#allocation11 + $0x3c] sm:$0xf]
          %v2558 = vunpack.c.l.b16 %v2526
          %v2559 = vunpack.c.l.b16 %v2527
          %v2560 = vunpack.c.l.b16 %v2528
          %v2561 = vunpack.c.l.b16 %v2529
          %v2562 = vunpack.c.l.b16 %v2530
          %v2563 = vunpack.c.l.b16 %v2531
          %v2564 = vunpack.c.l.b16 %v2532
          %v2565 = vunpack.c.l.b16 %v2533
          %v2566 = vunpack.c.l.b16 %v2534
          %v2567 = vunpack.c.l.b16 %v2535
          %v2568 = vunpack.c.l.b16 %v2536
          %v2569 = vunpack.c.l.b16 %v2537
          %v2570 = vunpack.c.l.b16 %v2538
          %v2571 = vunpack.c.l.b16 %v2539
          %v2572 = vunpack.c.l.b16 %v2540
          %v2573 = vunpack.c.l.b16 %v2541
          %v2574 = vpack.c.b16 %v2559, %v2558
          %v2575 = vpack.c.b16 %v2561, %v2560
          %v2576 = vpack.c.b16 %v2563, %v2562
          %v2577 = vpack.c.b16 %v2565, %v2564
          %v2578 = vpack.c.b16 %v2567, %v2566
          %v2579 = vpack.c.b16 %v2569, %v2568
          %v2580 = vpack.c.b16 %v2571, %v2570
          %v2581 = vpack.c.b16 %v2573, %v2572
          %2590 = vmatprep.subr.bf16.mxu0 0
          %2591 = vmatpush1.bf16.msra.mxu0 %v2574
          %2592 = vmatprep.subr.bf16.mxu0 0
          %2593 = vmatpush1.bf16.msra.mxu0 %v2575
          %2594 = vmatprep.subr.bf16.mxu0 0
          %2595 = vmatpush1.bf16.msra.mxu0 %v2576
          %2596 = vmatprep.subr.bf16.mxu0 0
          %2597 = vmatpush1.bf16.msra.mxu0 %v2577
          %2598 = vmatprep.subr.bf16.mxu0 0
          %2599 = vmatpush1.bf16.msra.mxu0 %v2578
          %2600 = vmatprep.subr.bf16.mxu0 0
          %2601 = vmatpush1.bf16.msra.mxu0 %v2579
          %2602 = vmatprep.subr.bf16.mxu0 0
          %2603 = vmatpush1.bf16.msra.mxu0 %v2580
          %2604 = vmatprep.subr.bf16.mxu0 0
          %2605 = vmatpush1.bf16.msra.mxu0 %v2581
          %2606 = vmatprep.subr.bf16.mxu0 0
          %2607 = vmatpush1.bf16.msra.mxu0 0
          %2608 = vmatprep.subr.bf16.mxu0 0
          %2609 = vmatpush1.bf16.msra.mxu0 0
          %2610 = vmatprep.subr.bf16.mxu0 0
          %2611 = vmatpush1.bf16.msra.mxu0 0
          %2612 = vmatprep.subr.bf16.mxu0 0
          %2613 = vmatpush1.bf16.msra.mxu0 0
          %2614 = vmatprep.subr.bf16.mxu0 0
          %2615 = vmatpush1.bf16.msra.mxu0 0
          %2616 = vmatprep.subr.bf16.mxu0 0
          %2617 = vmatpush1.bf16.msra.mxu0 0
          %2618 = vmatprep.subr.bf16.mxu0 0
          %2619 = vmatpush1.bf16.msra.mxu0 0
          %2620 = vmatprep.subr.bf16.mxu0 0
          %2621 = vmatpush1.bf16.msra.mxu0 0
          %2622 = vmatprep.mubr.bf16.mxu0 0
          %2623 = vmatmul.mubr.bf16.gmra.mrb[0].mxu0 %v2510
          %v2624 = vpop.f32.mrb[0].mxu0
          %v2625 = vadd.f32 0.0, %v2624
          %v2626 = vpop.f32.mrb[0].mxu0
          %v2627 = vpop.f32.mrb[0].mxu0
          %v2628 = vadd.f32 0.0, %v2627
          %v2629 = vpop.f32.mrb[0].mxu0
          %2630 = vmatprep.mubr.bf16.mxu0 0
          %2631 = vmatmul.mubr.bf16.gmra.mrb[0].mxu0 %v2511
          %v2632 = vpop.f32.mrb[0].mxu0
          %v2633 = vadd.f32 0.0, %v2632
          %v2634 = vpop.f32.mrb[0].mxu0
          %v2635 = vpop.f32.mrb[0].mxu0
          %v2636 = vadd.f32 0.0, %v2635
          %v2637 = vpop.f32.mrb[0].mxu0
          %2638 = vmatprep.mubr.bf16.mxu0 0
          %2639 = vmatmul.mubr.bf16.gmra.mrb[0].mxu0 %v2512
          %v2640 = vpop.f32.mrb[0].mxu0
          %v2641 = vadd.f32 0.0, %v2640
          %v2642 = vpop.f32.mrb[0].mxu0
          %v2643 = vpop.f32.mrb[0].mxu0
          %v2644 = vadd.f32 0.0, %v2643
          %v2645 = vpop.f32.mrb[0].mxu0
          %2646 = vmatprep.mubr.bf16.mxu0 0
          %2647 = vmatmul.mubr.bf16.gmra.mrb[0].mxu0 %v2513
          %v2648 = vpop.f32.mrb[0].mxu0
          %v2649 = vadd.f32 0.0, %v2648
          %v2650 = vpop.f32.mrb[0].mxu0
          %v2651 = vpop.f32.mrb[0].mxu0
          %v2652 = vadd.f32 0.0, %v2651
          %v2653 = vpop.f32.mrb[0].mxu0
          %2654 = vmatprep.mubr.bf16.mxu0 0
          %2655 = vmatmul.mubr.bf16.gmra.mrb[0].mxu0 %v2514
          %v2656 = vpop.f32.mrb[0].mxu0
          %v2657 = vadd.f32 0.0, %v2656
          %v2658 = vpop.f32.mrb[0].mxu0
          %v2659 = vpop.f32.mrb[0].mxu0
          %v2660 = vadd.f32 0.0, %v2659
          %v2661 = vpop.f32.mrb[0].mxu0
          %2662 = vmatprep.mubr.bf16.mxu0 0
          %2663 = vmatmul.mubr.bf16.gmra.mrb[0].mxu0 %v2515
          %v2664 = vpop.f32.mrb[0].mxu0
          %v2665 = vadd.f32 0.0, %v2664
          %v2666 = vpop.f32.mrb[0].mxu0
          %v2667 = vpop.f32.mrb[0].mxu0
          %v2668 = vadd.f32 0.0, %v2667
          %v2669 = vpop.f32.mrb[0].mxu0
          %2670 = vmatprep.mubr.bf16.mxu0 0
          %2671 = vmatmul.mubr.bf16.gmra.mrb[0].mxu0 %v2516
          %v2672 = vpop.f32.mrb[0].mxu0
          %v2673 = vadd.f32 0.0, %v2672
          %v2674 = vpop.f32.mrb[0].mxu0
          %v2675 = vpop.f32.mrb[0].mxu0
          %v2676 = vadd.f32 0.0, %v2675
          %v2677 = vpop.f32.mrb[0].mxu0
          %2678 = vmatprep.mubr.bf16.mxu0 0
          %2679 = vmatmul.mubr.bf16.gmra.mrb[0].mxu0 %v2517
          %v2680 = vpop.f32.mrb[0].mxu0
          %v2681 = vadd.f32 0.0, %v2680
          %v2682 = vpop.f32.mrb[0].mxu0
          %v2683 = vpop.f32.mrb[0].mxu0
          %v2684 = vadd.f32 0.0, %v2683
          %v2685 = vpop.f32.mrb[0].mxu0
          %2686 = vmatprep.mubr.bf16.mxu0 0
          %2687 = vmatmul.mubr.bf16.gmra.mrb[0].mxu0 %v2518
          %v2688 = vpop.f32.mrb[0].mxu0
          %v2689 = vadd.f32 0.0, %v2688
          %v2690 = vpop.f32.mrb[0].mxu0
          %v2691 = vpop.f32.mrb[0].mxu0
          %v2692 = vadd.f32 0.0, %v2691
          %v2693 = vpop.f32.mrb[0].mxu0
          %2694 = vmatprep.mubr.bf16.mxu0 0
          %2695 = vmatmul.mubr.bf16.gmra.mrb[0].mxu0 %v2519
          %v2696 = vpop.f32.mrb[0].mxu0
          %v2697 = vadd.f32 0.0, %v2696
          %v2698 = vpop.f32.mrb[0].mxu0
          %v2699 = vpop.f32.mrb[0].mxu0
          %v2700 = vadd.f32 0.0, %v2699
          %v2701 = vpop.f32.mrb[0].mxu0
          %2702 = vmatprep.mubr.bf16.mxu0 0
          %2703 = vmatmul.mubr.bf16.gmra.mrb[0].mxu0 %v2520
          %v2704 = vpop.f32.mrb[0].mxu0
          %v2705 = vadd.f32 0.0, %v2704
          %v2706 = vpop.f32.mrb[0].mxu0
          %v2707 = vpop.f32.mrb[0].mxu0
          %v2708 = vadd.f32 0.0, %v2707
          %v2709 = vpop.f32.mrb[0].mxu0
          %2710 = vmatprep.mubr.bf16.mxu0 0
          %2711 = vmatmul.mubr.bf16.gmra.mrb[0].mxu0 %v2521
          %v2712 = vpop.f32.mrb[0].mxu0
          %v2713 = vadd.f32 0.0, %v2712
          %v2714 = vpop.f32.mrb[0].mxu0
          %v2715 = vpop.f32.mrb[0].mxu0
          %v2716 = vadd.f32 0.0, %v2715
          %v2717 = vpop.f32.mrb[0].mxu0
          %2718 = vmatprep.mubr.bf16.mxu0 0
          %2719 = vmatmul.mubr.bf16.gmra.mrb[0].mxu0 %v2522
          %v2720 = vpop.f32.mrb[0].mxu0
          %v2721 = vadd.f32 0.0, %v2720
          %v2722 = vpop.f32.mrb[0].mxu0
          %v2723 = vpop.f32.mrb[0].mxu0
          %v2724 = vadd.f32 0.0, %v2723
          %v2725 = vpop.f32.mrb[0].mxu0
          %2726 = vmatprep.mubr.bf16.mxu0 0
          %2727 = vmatmul.mubr.bf16.gmra.mrb[0].mxu0 %v2523
          %v2728 = vpop.f32.mrb[0].mxu0
          %v2729 = vadd.f32 0.0, %v2728
          %v2730 = vpop.f32.mrb[0].mxu0
          %v2731 = vpop.f32.mrb[0].mxu0
          %v2732 = vadd.f32 0.0, %v2731
          %v2733 = vpop.f32.mrb[0].mxu0
          %2734 = vmatprep.mubr.bf16.mxu0 0
          %2735 = vmatmul.mubr.bf16.gmra.mrb[0].mxu0 %v2524
          %v2736 = vpop.f32.mrb[0].mxu0
          %v2737 = vadd.f32 0.0, %v2736
          %v2738 = vpop.f32.mrb[0].mxu0
          %v2739 = vpop.f32.mrb[0].mxu0
          %v2740 = vadd.f32 0.0, %v2739
          %v2741 = vpop.f32.mrb[0].mxu0
          %2742 = vmatprep.mubr.bf16.mxu0 0
          %2743 = vmatmul.mubr.bf16.gmra.mrb[0].mxu0 %v2525
          %v2744 = vpop.f32.mrb[0].mxu0
          %v2745 = vadd.f32 0.0, %v2744
          %v2746 = vpop.f32.mrb[0].mxu0
          %v2747 = vpop.f32.mrb[0].mxu0
          %v2748 = vadd.f32 0.0, %v2747
          %v2749 = vpop.f32.mrb[0].mxu0
          %2750 = vdwg.mxu0
          %v2751 = vadd.f32 %v2474, %v2625
          %v2752 = vadd.f32 %v2475, %v2628
          %v2753 = vadd.f32 %v2476, %v2633
          %v2754 = vadd.f32 %v2477, %v2636
          %v2755 = vadd.f32 %v2478, %v2641
          %v2756 = vadd.f32 %v2479, %v2644
          %v2757 = vadd.f32 %v2480, %v2649
          %v2758 = vadd.f32 %v2481, %v2652
          %v2759 = vadd.f32 %v2482, %v2657
          %v2760 = vadd.f32 %v2483, %v2660
          %v2761 = vadd.f32 %v2484, %v2665
          %v2762 = vadd.f32 %v2485, %v2668
          %v2763 = vadd.f32 %v2486, %v2673
          %v2764 = vadd.f32 %v2487, %v2676
          %v2765 = vadd.f32 %v2488, %v2681
          %v2766 = vadd.f32 %v2489, %v2684
          %v2767 = vadd.f32 %v2490, %v2689
          %v2768 = vadd.f32 %v2491, %v2692
          %v2769 = vadd.f32 %v2492, %v2697
          %v2770 = vadd.f32 %v2493, %v2700
          %v2771 = vadd.f32 %v2494, %v2705
          %v2772 = vadd.f32 %v2495, %v2708
          %v2773 = vadd.f32 %v2496, %v2713
          %v2774 = vadd.f32 %v2497, %v2716
          %v2775 = vadd.f32 %v2498, %v2721
          %v2776 = vadd.f32 %v2499, %v2724
          %v2777 = vadd.f32 %v2500, %v2729
          %v2778 = vadd.f32 %v2501, %v2732
          %v2779 = vadd.f32 %v2502, %v2737
          %v2780 = vadd.f32 %v2503, %v2740
          %v2781 = vadd.f32 %v2504, %v2745
          %v2782 = vadd.f32 %v2505, %v2748
          %v2783 = vld [vmem:[%s8] sm:$0x1]
          %v2785 = vlaneseq
          %v2786 = vshrl.u32 %v2785, 7
          %v2787 = vsub.s32 0, %v2786
          %v2788 = vrot.slane %v2783, %v2787
          %v2790 = vadd.f32 %v2751, %v2788
          %v2791 = vadd.f32 %v2752, %v2788
          %v2792 = vadd.f32 %v2753, %v2788
          %v2793 = vadd.f32 %v2754, %v2788
          %v2794 = vadd.f32 %v2755, %v2788
          %v2795 = vadd.f32 %v2756, %v2788
          %v2796 = vadd.f32 %v2757, %v2788
          %v2797 = vadd.f32 %v2758, %v2788
          %v2798 = vadd.f32 %v2759, %v2788
          %v2799 = vadd.f32 %v2760, %v2788
          %v2800 = vadd.f32 %v2761, %v2788
          %v2801 = vadd.f32 %v2762, %v2788
          %v2802 = vadd.f32 %v2763, %v2788
          %v2803 = vadd.f32 %v2764, %v2788
          %v2804 = vadd.f32 %v2765, %v2788
          %v2805 = vadd.f32 %v2766, %v2788
          %v2806 = vadd.f32 %v2767, %v2788
          %v2807 = vadd.f32 %v2768, %v2788
          %v2808 = vadd.f32 %v2769, %v2788
          %v2809 = vadd.f32 %v2770, %v2788
          %v2810 = vadd.f32 %v2771, %v2788
          %v2811 = vadd.f32 %v2772, %v2788
          %v2812 = vadd.f32 %v2773, %v2788
          %v2813 = vadd.f32 %v2774, %v2788
          %v2814 = vadd.f32 %v2775, %v2788
          %v2815 = vadd.f32 %v2776, %v2788
          %v2816 = vadd.f32 %v2777, %v2788
          %v2817 = vadd.f32 %v2778, %v2788
          %v2818 = vadd.f32 %v2779, %v2788
          %v2819 = vadd.f32 %v2780, %v2788
          %v2820 = vadd.f32 %v2781, %v2788
          %v2821 = vadd.f32 %v2782, %v2788
          %v2822 = vmax.f32 %v2790, 0.0
          %v2823 = vmax.f32 %v2791, 0.0
          %v2824 = vmax.f32 %v2792, 0.0
          %v2825 = vmax.f32 %v2793, 0.0
          %v2826 = vmax.f32 %v2794, 0.0
          %v2827 = vmax.f32 %v2795, 0.0
          %v2828 = vmax.f32 %v2796, 0.0
          %v2829 = vmax.f32 %v2797, 0.0
          %v2830 = vmax.f32 %v2798, 0.0
          %v2831 = vmax.f32 %v2799, 0.0
          %v2832 = vmax.f32 %v2800, 0.0
          %v2833 = vmax.f32 %v2801, 0.0
          %v2834 = vmax.f32 %v2802, 0.0
          %v2835 = vmax.f32 %v2803, 0.0
          %v2836 = vmax.f32 %v2804, 0.0
          %v2837 = vmax.f32 %v2805, 0.0
          %v2838 = vmax.f32 %v2806, 0.0
          %v2839 = vmax.f32 %v2807, 0.0
          %v2840 = vmax.f32 %v2808, 0.0
          %v2841 = vmax.f32 %v2809, 0.0
          %v2842 = vmax.f32 %v2810, 0.0
          %v2843 = vmax.f32 %v2811, 0.0
          %v2844 = vmax.f32 %v2812, 0.0
          %v2845 = vmax.f32 %v2813, 0.0
          %v2846 = vmax.f32 %v2814, 0.0
          %v2847 = vmax.f32 %v2815, 0.0
          %v2848 = vmax.f32 %v2816, 0.0
          %v2849 = vmax.f32 %v2817, 0.0
          %v2850 = vmax.f32 %v2818, 0.0
          %v2851 = vmax.f32 %v2819, 0.0
          %v2852 = vmax.f32 %v2820, 0.0
          %v2853 = vmax.f32 %v2821, 0.0
          %2854 = vst [vmem:[%s465] sm:$0xff] %v2822
          %2855 = vst [vmem:[%s465 + $0x8] sm:$0xff] %v2823
          %2856 = vst [vmem:[%s465 + $0x10] sm:$0xff] %v2824
          %2857 = vst [vmem:[%s465 + $0x18] sm:$0xff] %v2825
          %2858 = vst [vmem:[%s465 + $0x20] sm:$0xff] %v2826
          %2859 = vst [vmem:[%s465 + $0x28] sm:$0xff] %v2827
          %2860 = vst [vmem:[%s465 + $0x30] sm:$0xff] %v2828
          %2861 = vst [vmem:[%s465 + $0x38] sm:$0xff] %v2829
          %2862 = vst [vmem:[%s465 + $0x40] sm:$0xff] %v2830
          %2863 = vst [vmem:[%s465 + $0x48] sm:$0xff] %v2831
          %2864 = vst [vmem:[%s465 + $0x50] sm:$0xff] %v2832
          %2865 = vst [vmem:[%s465 + $0x58] sm:$0xff] %v2833
          %2866 = vst [vmem:[%s465 + $0x60] sm:$0xff] %v2834
          %2867 = vst [vmem:[%s465 + $0x68] sm:$0xff] %v2835
          %2868 = vst [vmem:[%s465 + $0x70] sm:$0xff] %v2836
          %2869 = vst [vmem:[%s465 + $0x78] sm:$0xff] %v2837
          %2870 = vst [vmem:[%s465 + $0x80] sm:$0xff] %v2838
          %2871 = vst [vmem:[%s465 + $0x88] sm:$0xff] %v2839
          %2872 = vst [vmem:[%s465 + $0x90] sm:$0xff] %v2840
          %2873 = vst [vmem:[%s465 + $0x98] sm:$0xff] %v2841
          %2874 = vst [vmem:[%s465 + $0xa0] sm:$0xff] %v2842
          %2875 = vst [vmem:[%s465 + $0xa8] sm:$0xff] %v2843
          %2876 = vst [vmem:[%s465 + $0xb0] sm:$0xff] %v2844
          %2877 = vst [vmem:[%s465 + $0xb8] sm:$0xff] %v2845
          %2878 = vst [vmem:[%s465 + $0xc0] sm:$0xff] %v2846
          %2879 = vst [vmem:[%s465 + $0xc8] sm:$0xff] %v2847
          %2880 = vst [vmem:[%s465 + $0xd0] sm:$0xff] %v2848
          %2881 = vst [vmem:[%s465 + $0xd8] sm:$0xff] %v2849
          %2882 = vst [vmem:[%s465 + $0xe0] sm:$0xff] %v2850
          %2883 = vst [vmem:[%s465 + $0xe8] sm:$0xff] %v2851
          %2884 = vst [vmem:[%s465 + $0xf0] sm:$0xff] %v2852
          %2885 = vst [vmem:[%s465 + $0xf8] sm:$0xff] %v2853
        $region84: #{tpu_custom_call.1} parent=55 // pred_fallthru
          _
        %s2886 = sand.u32 %s266, 1
        %s2887 = scalar_lea.sflag [#allocation7], %s2886
        %s2888 = sand.u32 %s266, 1
        %s2889 = smul.addr %s2888, 256
        %s2890 = scalar_lea.vmem [#allocation13], %s2889
        // Predicated region
        $region85: #{tpu_custom_call.1} parent=55 // pred_check
          %p2891 = pneg %p276
        $region86: #{tpu_custom_call.1} parent=55 // pred_check_branch
          %2893 = sbr.rel (%p2891) target = $region88
        $region87: #{tpu_custom_call.1} parent=55 // pred_region
          %p2894 = scmp.eq.s32.totalorder %s30, 2
          %s2895 = scalar_select %p2894, %s31, 0
          %s2896 = smul.u32 32, %s2895
          %s2898 = ssub.s32 4096, 4096
          %2899 = vsyncadd %s2887, %s2898
          %s2900 = smul.addr %s2896, 128
          %s2901 = scalar_lea.hbm %s9, %s2900
          %s2902 = sshll.u32 %s2890, 4
          %s2903 = int_to_ptr.vmem [resolvable:$true] %s2902
          %2908 = dma.vmem_to_hbm [thread:$0]  %s2903, 4096, %s2901, %s2887, 128, 128, 8
        $region88: #{tpu_custom_call.1} parent=55 // pred_fallthru
          _
      $region56: #{tpu_custom_call.1} parent=5 // pred_fallthru
        _
      %p2909 = scmp.le.s32.totalorder 2, %s21
      // Predicated region
      $region89: #{tpu_custom_call.1} parent=5 // pred_check
        %p2910 = pneg %p2909
      $region90: #{tpu_custom_call.1} parent=5 // pred_check_branch
        %2912 = sbr.rel (%p2910) target = $region92
      $region91: #{tpu_custom_call.1} parent=5 // pred_region
        %s2913 = ssub.s32 %s21, 2
        // Predicated region
        $region93: #{tpu_custom_call.1} parent=91 // pred_check
          %p2914 = pneg %p282
        $region94: #{tpu_custom_call.1} parent=91 // pred_check_branch
          %2916 = sbr.rel (%p2914) target = $region96
        $region95: #{tpu_custom_call.1} parent=91 // pred_region
          %s2917 = sand.u32 %s267, 1
          %s2918 = scalar_lea.sflag [#allocation7], %s2917
          %s2919 = sand.u32 %s267, 1
          %s2920 = smul.addr %s2919, 256
          %s2921 = scalar_lea.vmem [#allocation13], %s2920
          %2922 = dma.done %s2918, 4096
        $region96: #{tpu_custom_call.1} parent=91 // pred_fallthru
          _
      $region92: #{tpu_custom_call.1} parent=5 // pred_fallthru
        _
    $region6: #{tpu_custom_call.1} parent=1 // loop_footer
      %s25 = sadd.s32 1, %s21
    $region7: #{tpu_custom_call.1} parent=1 // loop_footer_branch
      %20 = sbr.rel target = $region3
    $region8: #{tpu_custom_call.1} parent=1 // loop_exit
      _
    %2923 = vsyncpa [#allocation6], 1
    %s2924 = scalar_lea.sflag [#allocation6], 1
    %2925 = vsyncpa %s2924, 1
    %2926 = vsyncpa [#allocation9], 1
    %2927 = vsyncpa [#allocation12], 1
    %2928 = vsyncpa [#allocation7], 1
    %s2929 = scalar_lea.sflag [#allocation7], 1
    %2930 = vsyncpa %s2929, 1

</llo_original>
